<compile_context>
chip_gen: v7x
topology: tpu7x:2x2x1
jax: 0.10.0
libtpu: 0.0.40
codegen_flags: <defaults>
</compile_context>

<pallas_src>
import jax
import jax.numpy as jnp
import numpy as np
from jax import lax
from jax.experimental import pallas as pl
from jax.experimental.pallas import tpu as pltpu


def _round_up(x, m):
    return ((x + m - 1) // m) * m


# ---------------------------------------------------------------------------
# Kernel A: 2-layer LSTM recurrence over one tile of timesteps.
# ---------------------------------------------------------------------------
def _lstm_recurrence_kernel(x_ref,                        # (TT*B, E) embedded rows of this time tile
                            wih0_ref, whh0_ref, b0_ref,   # (E,4H), (H,4H), (1,4H)
                            w1cat_ref, b1_ref,            # (2H,4H) = concat(wih1, whh1), (1,4H)
                            h1_all_ref,                   # (B, TT, H) layer-1 hidden, batch-major (out)
                            hN_ref, cN_ref,               # (2, B, H)  final states (out)
                            state_ref,                    # (4, B, H)  f32 scratch: recurrent carry
                            ix0_ref,                      # (TT*B, 4H) f32 scratch: hoisted input proj
                            h1_tile_ref):                 # (TT, B, H) f32 scratch: per-step hidden
    tt = h1_tile_ref.shape[0]
    B = h1_tile_ref.shape[1]
    H = whh0_ref.shape[0]
    cdt = whh0_ref.dtype                 # matmul compute dtype (bf16 or f32)

    # Zero the recurrent state on the first time tile only.
    @pl.when(pl.program_id(0) == 0)
    def _init():
        state_ref[...] = jnp.zeros_like(state_ref)

    # Hoisted layer-0 input projection (+ fused bias) for the whole time tile:
    # one (TT*B, E) x (E, 4H) MXU GEMM instead of TT tiny matmuls in the loop.
    # NOTE(v7x): at very large t_tile this scratch could be kept in bf16 to fit
    # the 64 MiB VMEM; kept f32 here for accuracy.
    ix0_ref[...] = (
        jnp.dot(x_ref[...], wih0_ref[...], preferred_element_type=jnp.float32)
        + b0_ref[...].astype(jnp.float32))

    whh0 = whh0_ref[...]
    w1cat = w1cat_ref[...]
    # Hoist the bias broadcast out of the loop (JAX does not CSE broadcasts).
    b1 = jnp.broadcast_to(b1_ref[...].astype(jnp.float32), (B, 4 * H))

    def cell_update(pre, c):
        # PyTorch gate order along 4H: [i, f, g, o]; all gate math stays f32
        # (v5e VPU/EUP has no bf16 path).
        i = jax.nn.sigmoid(pre[:, 0:H])
        f = jax.nn.sigmoid(pre[:, H:2 * H])
        g = jnp.tanh(pre[:, 2 * H:3 * H])
        o = jax.nn.sigmoid(pre[:, 3 * H:4 * H])
        c_new = f * c + i * g
        h_new = o * jnp.tanh(c_new)
        return h_new, c_new

    def step(t, carry):
        h0, c0, h1, c1 = carry
        row = t * B
        if B % 8 == 0:
            row = pl.multiple_of(row, 8)      # aligned vector loads in the hot loop
        # Layer 0: only the recurrent matmul is left on the serial chain.
        pre0 = (ix0_ref[pl.ds(row, B), :]
                + jnp.dot(h0.astype(cdt), whh0, preferred_element_type=jnp.float32))
        h0, c0 = cell_update(pre0, c0)
        # TODO(synk): inter-layer dropout (p = 1 - drop_prob) omitted — inference-mode forward.
        # Layer 1: fused input+recurrent matmul -> single MXU op on the chain.
        h01 = jnp.concatenate([h0, h1], axis=1).astype(cdt)   # (B, 2H)
        pre1 = jnp.dot(h01, w1cat, preferred_element_type=jnp.float32) + b1
        h1, c1 = cell_update(pre1, c1)
        h1_tile_ref[t] = h1
        return (h0, c0, h1, c1)

    carry0 = (state_ref[0], state_ref[1], state_ref[2], state_ref[3])
    unroll = True if tt <= 32 else 8          # full unroll for small tiles, partial otherwise
    h0, c0, h1, c1 = lax.fori_loop(0, tt, step, carry0, unroll=unroll)

    # Persist the recurrent carry for the next time tile.
    state_ref[0] = h0
    state_ref[1] = c0
    state_ref[2] = h1
    state_ref[3] = c1

    # One in-VMEM transpose per tile (off the serial critical path) so the
    # output is already batch-major: no wrapper transpose / HBM round trip.
    h1_all_ref[...] = jnp.transpose(h1_tile_ref[...], (1, 0, 2)).astype(h1_all_ref.dtype)

    # Final-state outputs only need to be written on the last time tile.
    @pl.when(pl.program_id(0) == pl.num_programs(0) - 1)
    def _finalize():
        hN_ref[0] = h0
        hN_ref[1] = h1
        cN_ref[0] = c0
        cN_ref[1] = c1


# ---------------------------------------------------------------------------
# Kernel B: batched output projection (rows x vocab tiled GEMM + bias).
# ---------------------------------------------------------------------------
def _linear_kernel(h_ref, w_ref, b_ref, out_ref):
    out_ref[...] = (
        jnp.dot(h_ref[...], w_ref[...], preferred_element_type=jnp.float32)
        + b_ref[...].astype(jnp.float32)).astype(out_ref.dtype)


# ---------------------------------------------------------------------------
# Tiling helpers.
# ---------------------------------------------------------------------------
def _pick_time_tile(T, B, target=128):
    """Largest tile <= target that divides T and is sublane-aligned (mult of 8)."""
    if T <= target:
        return T
    for t in range(min(target, T), 0, -1):
        if T % t == 0 and t % 8 == 0:
            return t
    # No 8-aligned divisor of T: process the whole sequence in one tile
    # (always correct; may use more VMEM for the hoisted-projection scratch).
    return T


# ---------------------------------------------------------------------------
# Forward wrapper.
# ---------------------------------------------------------------------------
def text_generation_forward(x_tokens, params, *, t_tile=None,
                            compute_dtype=jnp.bfloat16,
                            tm_target=512, tv_target=1024,
                            vmem_limit_bytes=64 * 1024 * 1024):
    """x_tokens: (T, B) int32.  Returns (logits (B,T,V), (h_n, c_n) each (2,B,H))."""
    T, B = x_tokens.shape
    # TODO(synk): embedding gather could be folded into Kernel A (scalar-prefetched
    # token ids + manual DMA gather) to save one HBM round trip of (T,B,E) on v5e.
    emb = params["embedding"][x_tokens].astype(compute_dtype)   # (T, B, E) gather — JAX glue
    E = emb.shape[-1]
    H = params["whh0_T"].shape[0]
    V = params["wlin_T"].shape[1]

    wih0 = params["wih0_T"].astype(compute_dtype)
    whh0 = params["whh0_T"].astype(compute_dtype)
    # Fused layer-1 weight: pre1 = [h0 | h1] @ concat(wih1, whh1) + b1.
    w1cat = jnp.concatenate([params["wih1_T"], params["whh1_T"]],
                            axis=0).astype(compute_dtype)        # (2H, 4H)
    wlin = params["wlin_T"].astype(compute_dtype)
    b0 = params["b0"].astype(jnp.float32)
    b1 = params["b1"].astype(jnp.float32)
    blin = params["blin"].astype(jnp.float32)

    if t_tile is None:
        t_tile = _pick_time_tile(T, B)
    assert T % t_tile == 0 and (t_tile == T or t_tile % 8 == 0), \
        "time tile must divide T and be a multiple of 8 (or the full sequence)"

    x2d = emb.reshape(T * B, E)          # free reshape: (T, B, E) -> (T*B, E)
    rows_per_tile = t_tile * B

    # ---- Kernel A: recurrence, grid over time tiles, state carried in VMEM scratch.
    # TODO(synk): on v7x a leading "parallel" batch grid axis could split B across
    # the two TensorCores; omitted here to keep the x layout a dense 2D stream.
    h1_bth, h_n, c_n = pl.pallas_call(
        _lstm_recurrence_kernel,
        out_shape=(
            jax.ShapeDtypeStruct((B, T, H), compute_dtype),   # layer-1 hidden, batch-major
            jax.ShapeDtypeStruct((2, B, H), jnp.float32),     # h_n
            jax.ShapeDtypeStruct((2, B, H), jnp.float32),     # c_n
        ),
        grid_spec=pltpu.PrefetchScalarGridSpec(
            num_scalar_prefetch=0,
            grid=(T // t_tile,),
            in_specs=[
                pl.BlockSpec((rows_per_tile, E), lambda i: (i, 0)),   # x rows (streamed)
                pl.BlockSpec((E, 4 * H), lambda i: (0, 0)),           # wih0 (resident)
                pl.BlockSpec((H, 4 * H), lambda i: (0, 0)),           # whh0
                pl.BlockSpec((1, 4 * H), lambda i: (0, 0)),           # b0
                pl.BlockSpec((2 * H, 4 * H), lambda i: (0, 0)),       # w1cat
                pl.BlockSpec((1, 4 * H), lambda i: (0, 0)),           # b1
            ],
            out_specs=(
                pl.BlockSpec((B, t_tile, H), lambda i: (0, i, 0)),    # h1 per tile (streamed)
                pl.BlockSpec((2, B, H), lambda i: (0, 0, 0)),
                pl.BlockSpec((2, B, H), lambda i: (0, 0, 0)),
            ),
            scratch_shapes=[
                pltpu.VMEM((4, B, H), jnp.float32),                   # recurrent carry
                pltpu.VMEM((rows_per_tile, 4 * H), jnp.float32),      # hoisted input proj
                pltpu.VMEM((t_tile, B, H), jnp.float32),              # per-step hidden tile
            ],
        ),
        compiler_params=pltpu.CompilerParams(
            dimension_semantics=("arbitrary",),
            vmem_limit_bytes=vmem_limit_bytes),
    )(x2d, wih0, whh0, b0, w1cat, b1)

    # Rows are already in (batch, time) order -> free reshape, no transpose.
    M = B * T
    h_rows = h1_bth.reshape(M, H)

    # ---- Kernel B tiling: pad rather than silently fall back to giant blocks.
    tm = min(tm_target, _round_up(M, 8))
    M_pad = _round_up(M, tm)
    if V <= tv_target:
        tv, V_pad = V, V
    else:
        tv = None
        cand = (tv_target // 128) * 128
        while cand >= 128:
            if V % cand == 0:
                tv = cand
                break
            cand -= 128
        if tv is None:
            tv = tv_target
        V_pad = _round_up(V, tv)

    if M_pad != M:
        h_rows = jnp.pad(h_rows, ((0, M_pad - M), (0, 0)))
    if V_pad != V:
        wlin = jnp.pad(wlin, ((0, 0), (0, V_pad - V)))
        blin = jnp.pad(blin, ((0, 0), (0, V_pad - V)))

    # ---- Kernel B: output projection.  Vocab axis is the OUTER grid dim so the
    # (H, V) weight (dominant HBM traffic when V >> B*T) is streamed only once;
    # the much smaller row tensor is re-streamed instead.
    logits2d = pl.pallas_call(
        _linear_kernel,
        out_shape=jax.ShapeDtypeStruct((M_pad, V_pad), jnp.float32),
        grid_spec=pltpu.PrefetchScalarGridSpec(
            num_scalar_prefetch=0,
            grid=(V_pad // tv, M_pad // tm),
            in_specs=[
                pl.BlockSpec((tm, H), lambda j, i: (i, 0)),
                pl.BlockSpec((H, tv), lambda j, i: (0, j)),
                pl.BlockSpec((1, tv), lambda j, i: (0, j)),
            ],
            out_specs=pl.BlockSpec((tm, tv), lambda j, i: (i, j)),
        ),
        compiler_params=pltpu.CompilerParams(
            dimension_semantics=("parallel", "parallel"),
            vmem_limit_bytes=vmem_limit_bytes),
    )(h_rows, wlin, blin)

    logits = logits2d[:M, :V].reshape(B, T, V)   # free reshape — rows already (batch, time)
    return logits, (h_n, c_n)


# ---------------------------------------------------------------------------
# Parameter init (matches the PyTorch module's shapes; gates fused [i,f,g,o]).
# ---------------------------------------------------------------------------
def init_params(key, vocab_size, embedding_dim, hidden):
    ks = jax.random.split(key, 10)
    s = 1.0 / jnp.sqrt(hidden)
    u = lambda k, shape: jax.random.uniform(k, shape, jnp.float32, -s, s)
    return {
        "embedding": jax.random.normal(ks[0], (vocab_size, embedding_dim), jnp.float32),
        # layer 0 (input: embedding_dim)
        "wih0_T": u(ks[1], (embedding_dim, 4 * hidden)),
        "whh0_T": u(ks[2], (hidden, 4 * hidden)),
        "b0":     u(ks[3], (1, 4 * hidden)),          # b_ih + b_hh fused
        # layer 1 (input: hidden)
        "wih1_T": u(ks[4], (hidden, 4 * hidden)),
        "whh1_T": u(ks[5], (hidden, 4 * hidden)),
        "b1":     u(ks[6], (1, 4 * hidden)),
        # output projection
        "wlin_T": u(ks[7], (hidden, vocab_size)),
        "blin":   u(ks[8], (1, vocab_size)),
    }


# ---------------------------------------------------------------------------
# Pure-JAX reference of the same forward pass (for a numerical check).
# ---------------------------------------------------------------------------
def _reference_forward(x_tokens, params):
    hp = jax.lax.Precision.HIGHEST
    emb = params["embedding"][x_tokens]                 # (T, B, E)
    T, B, E = emb.shape
    H = params["whh0_T"].shape[0]

    def cell(x_t, h, c, wih, whh, b):
        g = jnp.dot(x_t, wih, precision=hp) + jnp.dot(h, whh, precision=hp) + b
        i = jax.nn.sigmoid(g[:, 0:H])
        f = jax.nn.sigmoid(g[:, H:2 * H])
        gg = jnp.tanh(g[:, 2 * H:3 * H])
        o = jax.nn.sigmoid(g[:, 3 * H:4 * H])
        c_new = f * c + i * gg
        h_new = o * jnp.tanh(c_new)
        return h_new, c_new

    def scan_step(carry, x_t):
        h0, c0, h1, c1 = carry
        h0, c0 = cell(x_t, h0, c0, params["wih0_T"], params["whh0_T"], params["b0"])
        h1, c1 = cell(h0, h1, c1, params["wih1_T"], params["whh1_T"], params["b1"])
        return (h0, c0, h1, c1), h1

    z = jnp.zeros((B, H), jnp.float32)
    (h0, c0, h1, c1), h1_all = lax.scan(scan_step, (z, z, z, z), emb)
    out = jnp.dot(jnp.transpose(h1_all, (1, 0, 2)), params["wlin_T"],
                  precision=hp) + params["blin"]
    return out, (jnp.stack([h0, h1]), jnp.stack([c0, c1]))


if __name__ == "__main__":
    # Small shapes consistent with the module.
    batch_size = 2
    seq_length = 16
    vocabulary_size = 64
    embedding_dim = 32
    lstm_num_hidden = 32

    key = jax.random.PRNGKey(0)
    pkey, xkey = jax.random.split(key)
    params = init_params(pkey, vocabulary_size, embedding_dim, lstm_num_hidden)

    # tokens: (seq, batch) int32, like PyTorch nn.LSTM default layout
    x = jax.random.randint(xkey, (seq_length, batch_size), 0, vocabulary_size, jnp.int32)

    ref_logits, (ref_h, ref_c) = _reference_forward(x, params)

    # f32 path (tight check); t_tile=8 -> 2 grid steps, exercising the carried state.
    logits, (h_n, c_n) = text_generation_forward(x, params, t_tile=8,
                                                 compute_dtype=jnp.float32)
    jax.block_until_ready((logits, h_n, c_n))
    assert logits.shape == (batch_size, seq_length, vocabulary_size)
    assert h_n.shape == (2, batch_size, lstm_num_hidden)
    assert c_n.shape == (2, batch_size, lstm_num_hidden)
    np.testing.assert_allclose(np.asarray(logits), np.asarray(ref_logits), atol=5e-3, rtol=5e-3)
    np.testing.assert_allclose(np.asarray(h_n), np.asarray(ref_h), atol=5e-3, rtol=5e-3)
    np.testing.assert_allclose(np.asarray(c_n), np.asarray(ref_c), atol=5e-3, rtol=5e-3)

    # Default bf16 matmul path (full-rate MXU on v5e/v6e/v7x); gate math / state stay f32.
    logits_bf, (h_bf, c_bf) = text_generation_forward(x, params, t_tile=8)
    jax.block_until_ready((logits_bf, h_bf, c_bf))
    np.testing.assert_allclose(np.asarray(logits_bf), np.asarray(ref_logits), atol=4e-2, rtol=4e-2)
    np.testing.assert_allclose(np.asarray(h_bf), np.asarray(ref_h), atol=4e-2, rtol=4e-2)
    np.testing.assert_allclose(np.asarray(c_bf), np.asarray(ref_c), atol=4e-2, rtol=4e-2)

    print("KERNEL_OK")
</pallas_src>

<mosaic_0001>
module attributes {stable_mosaic.version = 11 : i64} {
  func.func @_lstm_recurrence_kernel(%arg0: i32, %arg1: memref<16x32xf32, #tpu.memory_space<vmem>>, %arg2: memref<32x128xf32, #tpu.memory_space<vmem>>, %arg3: memref<32x128xf32, #tpu.memory_space<vmem>>, %arg4: memref<1x128xf32, #tpu.memory_space<vmem>>, %arg5: memref<64x128xf32, #tpu.memory_space<vmem>>, %arg6: memref<1x128xf32, #tpu.memory_space<vmem>>, %arg7: memref<2x8x32xf32, #tpu.memory_space<vmem>>, %arg8: memref<2x2x32xf32, #tpu.memory_space<vmem>>, %arg9: memref<2x2x32xf32, #tpu.memory_space<vmem>>, %arg10: memref<4x2x32xf32, #tpu.memory_space<vmem>>, %arg11: memref<16x128xf32, #tpu.memory_space<vmem>>, %arg12: memref<8x2x32xf32, #tpu.memory_space<vmem>>) attributes {dimension_semantics = [#tpu.dimension_semantics<arbitrary>], iteration_bounds = array<i64: 2>, scalar_prefetch = 0 : i64, scratch_operands = 3 : i64, tpu.core_type = #tpu.core_type<tc>, window_params = [{transform_indices = @transform_0, window_bounds = array<i64: 16, 32>}, {pipeline_mode = #tpu.pipeline_mode<synchronous>, transform_indices = @transform_1, window_bounds = array<i64: 32, 128>}, {pipeline_mode = #tpu.pipeline_mode<synchronous>, transform_indices = @transform_2, window_bounds = array<i64: 32, 128>}, {pipeline_mode = #tpu.pipeline_mode<synchronous>, transform_indices = @transform_3, window_bounds = array<i64: 1, 128>}, {pipeline_mode = #tpu.pipeline_mode<synchronous>, transform_indices = @transform_4, window_bounds = array<i64: 64, 128>}, {pipeline_mode = #tpu.pipeline_mode<synchronous>, transform_indices = @transform_5, window_bounds = array<i64: 1, 128>}, {transform_indices = @transform_6, window_bounds = array<i64: 2, 8, 32>}, {pipeline_mode = #tpu.pipeline_mode<synchronous>, transform_indices = @transform_7, window_bounds = array<i64: 2, 2, 32>}, {pipeline_mode = #tpu.pipeline_mode<synchronous>, transform_indices = @transform_8, window_bounds = array<i64: 2, 2, 32>}]} {
    %c0_i32 = arith.constant 0 : i32
    %0 = arith.cmpi eq, %arg0, %c0_i32 : i32
    %1 = arith.extui %0 : i1 to i32
    %c0_i32_0 = arith.constant 0 : i32
    %2 = arith.cmpi ne, %1, %c0_i32_0 : i32
    scf.if %2 {
      %cst_140 = arith.constant 0.000000e+00 : f32
      %537 = vector.broadcast %cst_140 : f32 to vector<4x2x32xf32>
      %c0_141 = arith.constant 0 : index
      %c0_142 = arith.constant 0 : index
      %c0_143 = arith.constant 0 : index
      %538 = vector.load %arg10[%c0_141, %c0_142, %c0_143] : memref<4x2x32xf32, #tpu.memory_space<vmem>>, vector<4x2x32xf32>
      tpu.vector_store %arg10[%c0_141, %c0_142, %c0_143], %537 {strides = array<i32>} : memref<4x2x32xf32, #tpu.memory_space<vmem>>, vector<4x2x32xf32>,
    } else {
    }
    %c0 = arith.constant 0 : index
    %c0_1 = arith.constant 0 : index
    %3 = vector.load %arg1[%c0, %c0_1] : memref<16x32xf32, #tpu.memory_space<vmem>>, vector<16x32xf32>
    %c0_2 = arith.constant 0 : index
    %c0_3 = arith.constant 0 : index
    %4 = vector.load %arg2[%c0_2, %c0_3] : memref<32x128xf32, #tpu.memory_space<vmem>>, vector<32x128xf32>
    %cst = arith.constant dense<0.000000e+00> : vector<16x128xf32>
    %5 = tpu.matmul %3, %4, %cst {dimension_numbers = #tpu.dot_dimension_numbers<[1], [0], [0], [1], [0, 0, 1, 1], [], []>} : vector<16x32xf32>, vector<32x128xf32>, vector<16x128xf32> -> vector<16x128xf32>
    %c0_4 = arith.constant 0 : index
    %c0_5 = arith.constant 0 : index
    %6 = vector.load %arg4[%c0_4, %c0_5] : memref<1x128xf32, #tpu.memory_space<vmem>>, vector<1x128xf32>
    %7 = vector.broadcast %6 : vector<1x128xf32> to vector<16x128xf32>
    %8 = arith.addf %5, %7 : vector<16x128xf32>
    %c0_6 = arith.constant 0 : index
    %c0_7 = arith.constant 0 : index
    %9 = vector.load %arg11[%c0_6, %c0_7] : memref<16x128xf32, #tpu.memory_space<vmem>>, vector<16x128xf32>
    tpu.vector_store %arg11[%c0_6, %c0_7], %8 {strides = array<i32>} : memref<16x128xf32, #tpu.memory_space<vmem>>, vector<16x128xf32>,
    %c0_8 = arith.constant 0 : index
    %c0_9 = arith.constant 0 : index
    %10 = vector.load %arg3[%c0_8, %c0_9] : memref<32x128xf32, #tpu.memory_space<vmem>>, vector<32x128xf32>
    %c0_10 = arith.constant 0 : index
    %c0_11 = arith.constant 0 : index
    %11 = vector.load %arg5[%c0_10, %c0_11] : memref<64x128xf32, #tpu.memory_space<vmem>>, vector<64x128xf32>
    %c0_12 = arith.constant 0 : index
    %c0_13 = arith.constant 0 : index
    %12 = vector.load %arg6[%c0_12, %c0_13] : memref<1x128xf32, #tpu.memory_space<vmem>>, vector<1x128xf32>
    %13 = vector.shape_cast %12 : vector<1x128xf32> to vector<1x128xf32>
    %14 = vector.broadcast %13 : vector<1x128xf32> to vector<2x128xf32>
    %c0_14 = arith.constant 0 : index
    %c0_15 = arith.constant 0 : index
    %c0_16 = arith.constant 0 : index
    %15 = vector.load %arg10[%c0_14, %c0_15, %c0_16] : memref<4x2x32xf32, #tpu.memory_space<vmem>>, vector<1x2x32xf32>
    %16 = vector.shape_cast %15 : vector<1x2x32xf32> to vector<2x32xf32>
    %c1 = arith.constant 1 : index
    %c0_17 = arith.constant 0 : index
    %c0_18 = arith.constant 0 : index
    %17 = vector.load %arg10[%c1, %c0_17, %c0_18] : memref<4x2x32xf32, #tpu.memory_space<vmem>>, vector<1x2x32xf32>
    %18 = vector.shape_cast %17 : vector<1x2x32xf32> to vector<2x32xf32>
    %c2 = arith.constant 2 : index
    %c0_19 = arith.constant 0 : index
    %c0_20 = arith.constant 0 : index
    %19 = vector.load %arg10[%c2, %c0_19, %c0_20] : memref<4x2x32xf32, #tpu.memory_space<vmem>>, vector<1x2x32xf32>
    %20 = vector.shape_cast %19 : vector<1x2x32xf32> to vector<2x32xf32>
    %c3 = arith.constant 3 : index
    %c0_21 = arith.constant 0 : index
    %c0_22 = arith.constant 0 : index
    %21 = vector.load %arg10[%c3, %c0_21, %c0_22] : memref<4x2x32xf32, #tpu.memory_space<vmem>>, vector<1x2x32xf32>
    %22 = vector.shape_cast %21 : vector<1x2x32xf32> to vector<2x32xf32>
    %c0_i32_23 = arith.constant 0 : i32
    %c2_i32 = arith.constant 2 : i32
    %23 = arith.muli %c0_i32_23, %c2_i32 : i32
    %24 = arith.index_cast %23 : i32 to index
    %c0_24 = arith.constant 0 : index
    %25 = vector.load %arg11[%24, %c0_24] : memref<16x128xf32, #tpu.memory_space<vmem>>, vector<2x128xf32>
    %cst_25 = arith.constant dense<0.000000e+00> : vector<2x128xf32>
    %26 = tpu.matmul %16, %10, %cst_25 {dimension_numbers = #tpu.dot_dimension_numbers<[1], [0], [0], [1], [0, 0, 1, 1], [], []>} : vector<2x32xf32>, vector<32x128xf32>, vector<2x128xf32> -> vector<2x128xf32>
    %27 = arith.addf %25, %26 : vector<2x128xf32>
    %28 = vector.extract_strided_slice %27 {offsets = [0, 0], sizes = [2, 32], strides = [1, 1]} : vector<2x128xf32> to vector<2x32xf32>
    %29 = arith.negf %28 : vector<2x32xf32>
    %30 = math.exp %29 : vector<2x32xf32>
    %cst_26 = arith.constant 1.000000e+00 : f32
    %31 = vector.broadcast %cst_26 : f32 to vector<2x32xf32>
    %32 = arith.addf %31, %30 : vector<2x32xf32>
    %33 = arith.divf %31, %32 : vector<2x32xf32>
    %34 = vector.extract_strided_slice %27 {offsets = [0, 32], sizes = [2, 32], strides = [1, 1]} : vector<2x128xf32> to vector<2x32xf32>
    %35 = arith.negf %34 : vector<2x32xf32>
    %36 = math.exp %35 : vector<2x32xf32>
    %cst_27 = arith.constant 1.000000e+00 : f32
    %37 = vector.broadcast %cst_27 : f32 to vector<2x32xf32>
    %38 = arith.addf %37, %36 : vector<2x32xf32>
    %39 = arith.divf %37, %38 : vector<2x32xf32>
    %40 = vector.extract_strided_slice %27 {offsets = [0, 64], sizes = [2, 32], strides = [1, 1]} : vector<2x128xf32> to vector<2x32xf32>
    %41 = math.tanh %40 : vector<2x32xf32>
    %42 = vector.extract_strided_slice %27 {offsets = [0, 96], sizes = [2, 32], strides = [1, 1]} : vector<2x128xf32> to vector<2x32xf32>
    %43 = arith.negf %42 : vector<2x32xf32>
    %44 = math.exp %43 : vector<2x32xf32>
    %cst_28 = arith.constant 1.000000e+00 : f32
    %45 = vector.broadcast %cst_28 : f32 to vector<2x32xf32>
    %46 = arith.addf %45, %44 : vector<2x32xf32>
    %47 = arith.divf %45, %46 : vector<2x32xf32>
    %48 = arith.mulf %39, %18 : vector<2x32xf32>
    %49 = arith.mulf %33, %41 : vector<2x32xf32>
    %50 = arith.addf %48, %49 : vector<2x32xf32>
    %51 = math.tanh %50 : vector<2x32xf32>
    %52 = arith.mulf %47, %51 : vector<2x32xf32>
    %53 = tpu.concatenate %52, %20 in 1 : vector<2x32xf32>, vector<2x32xf32> -> vector<2x64xf32>
    %cst_29 = arith.constant dense<0.000000e+00> : vector<2x128xf32>
    %54 = tpu.matmul %53, %11, %cst_29 {dimension_numbers = #tpu.dot_dimension_numbers<[1], [0], [0], [1], [0, 0, 1, 1], [], []>} : vector<2x64xf32>, vector<64x128xf32>, vector<2x128xf32> -> vector<2x128xf32>
    %55 = arith.addf %54, %14 : vector<2x128xf32>
    %56 = vector.extract_strided_slice %55 {offsets = [0, 0], sizes = [2, 32], strides = [1, 1]} : vector<2x128xf32> to vector<2x32xf32>
    %57 = arith.negf %56 : vector<2x32xf32>
    %58 = math.exp %57 : vector<2x32xf32>
    %cst_30 = arith.constant 1.000000e+00 : f32
    %59 = vector.broadcast %cst_30 : f32 to vector<2x32xf32>
    %60 = arith.addf %59, %58 : vector<2x32xf32>
    %61 = arith.divf %59, %60 : vector<2x32xf32>
    %62 = vector.extract_strided_slice %55 {offsets = [0, 32], sizes = [2, 32], strides = [1, 1]} : vector<2x128xf32> to vector<2x32xf32>
    %63 = arith.negf %62 : vector<2x32xf32>
    %64 = math.exp %63 : vector<2x32xf32>
    %cst_31 = arith.constant 1.000000e+00 : f32
    %65 = vector.broadcast %cst_31 : f32 to vector<2x32xf32>
    %66 = arith.addf %65, %64 : vector<2x32xf32>
    %67 = arith.divf %65, %66 : vector<2x32xf32>
    %68 = vector.extract_strided_slice %55 {offsets = [0, 64], sizes = [2, 32], strides = [1, 1]} : vector<2x128xf32> to vector<2x32xf32>
    %69 = math.tanh %68 : vector<2x32xf32>
    %70 = vector.extract_strided_slice %55 {offsets = [0, 96], sizes = [2, 32], strides = [1, 1]} : vector<2x128xf32> to vector<2x32xf32>
    %71 = arith.negf %70 : vector<2x32xf32>
    %72 = math.exp %71 : vector<2x32xf32>
    %cst_32 = arith.constant 1.000000e+00 : f32
    %73 = vector.broadcast %cst_32 : f32 to vector<2x32xf32>
    %74 = arith.addf %73, %72 : vector<2x32xf32>
    %75 = arith.divf %73, %74 : vector<2x32xf32>
    %76 = arith.mulf %67, %22 : vector<2x32xf32>
    %77 = arith.mulf %61, %69 : vector<2x32xf32>
    %78 = arith.addf %76, %77 : vector<2x32xf32>
    %79 = math.tanh %78 : vector<2x32xf32>
    %80 = arith.mulf %75, %79 : vector<2x32xf32>
    %81 = arith.index_cast %c0_i32_23 : i32 to index
    %c0_33 = arith.constant 0 : index
    %c0_34 = arith.constant 0 : index
    %82 = vector.load %arg12[%81, %c0_33, %c0_34] : memref<8x2x32xf32, #tpu.memory_space<vmem>>, vector<1x2x32xf32>
    %83 = vector.shape_cast %82 : vector<1x2x32xf32> to vector<2x32xf32>
    %84 = vector.shape_cast %80 : vector<2x32xf32> to vector<1x2x32xf32>
    tpu.vector_store %arg12[%81, %c0_33, %c0_34], %84 {strides = array<i32>} : memref<8x2x32xf32, #tpu.memory_space<vmem>>, vector<1x2x32xf32>,
    %c1_i32 = arith.constant 1 : i32
    %c2_i32_35 = arith.constant 2 : i32
    %85 = arith.muli %c1_i32, %c2_i32_35 : i32
    %86 = arith.index_cast %85 : i32 to index
    %c0_36 = arith.constant 0 : index
    %87 = vector.load %arg11[%86, %c0_36] : memref<16x128xf32, #tpu.memory_space<vmem>>, vector<2x128xf32>
    %cst_37 = arith.constant dense<0.000000e+00> : vector<2x128xf32>
    %88 = tpu.matmul %52, %10, %cst_37 {dimension_numbers = #tpu.dot_dimension_numbers<[1], [0], [0], [1], [0, 0, 1, 1], [], []>} : vector<2x32xf32>, vector<32x128xf32>, vector<2x128xf32> -> vector<2x128xf32>
    %89 = arith.addf %87, %88 : vector<2x128xf32>
    %90 = vector.extract_strided_slice %89 {offsets = [0, 0], sizes = [2, 32], strides = [1, 1]} : vector<2x128xf32> to vector<2x32xf32>
    %91 = arith.negf %90 : vector<2x32xf32>
    %92 = math.exp %91 : vector<2x32xf32>
    %cst_38 = arith.constant 1.000000e+00 : f32
    %93 = vector.broadcast %cst_38 : f32 to vector<2x32xf32>
    %94 = arith.addf %93, %92 : vector<2x32xf32>
    %95 = arith.divf %93, %94 : vector<2x32xf32>
    %96 = vector.extract_strided_slice %89 {offsets = [0, 32], sizes = [2, 32], strides = [1, 1]} : vector<2x128xf32> to vector<2x32xf32>
    %97 = arith.negf %96 : vector<2x32xf32>
    %98 = math.exp %97 : vector<2x32xf32>
    %cst_39 = arith.constant 1.000000e+00 : f32
    %99 = vector.broadcast %cst_39 : f32 to vector<2x32xf32>
    %100 = arith.addf %99, %98 : vector<2x32xf32>
    %101 = arith.divf %99, %100 : vector<2x32xf32>
    %102 = vector.extract_strided_slice %89 {offsets = [0, 64], sizes = [2, 32], strides = [1, 1]} : vector<2x128xf32> to vector<2x32xf32>
    %103 = math.tanh %102 : vector<2x32xf32>
    %104 = vector.extract_strided_slice %89 {offsets = [0, 96], sizes = [2, 32], strides = [1, 1]} : vector<2x128xf32> to vector<2x32xf32>
    %105 = arith.negf %104 : vector<2x32xf32>
    %106 = math.exp %105 : vector<2x32xf32>
    %cst_40 = arith.constant 1.000000e+00 : f32
    %107 = vector.broadcast %cst_40 : f32 to vector<2x32xf32>
    %108 = arith.addf %107, %106 : vector<2x32xf32>
    %109 = arith.divf %107, %108 : vector<2x32xf32>
    %110 = arith.mulf %101, %50 : vector<2x32xf32>
    %111 = arith.mulf %95, %103 : vector<2x32xf32>
    %112 = arith.addf %110, %111 : vector<2x32xf32>
    %113 = math.tanh %112 : vector<2x32xf32>
    %114 = arith.mulf %109, %113 : vector<2x32xf32>
    %115 = tpu.concatenate %114, %80 in 1 : vector<2x32xf32>, vector<2x32xf32> -> vector<2x64xf32>
    %cst_41 = arith.constant dense<0.000000e+00> : vector<2x128xf32>
    %116 = tpu.matmul %115, %11, %cst_41 {dimension_numbers = #tpu.dot_dimension_numbers<[1], [0], [0], [1], [0, 0, 1, 1], [], []>} : vector<2x64xf32>, vector<64x128xf32>, vector<2x128xf32> -> vector<2x128xf32>
    %117 = arith.addf %116, %14 : vector<2x128xf32>
    %118 = vector.extract_strided_slice %117 {offsets = [0, 0], sizes = [2, 32], strides = [1, 1]} : vector<2x128xf32> to vector<2x32xf32>
    %119 = arith.negf %118 : vector<2x32xf32>
    %120 = math.exp %119 : vector<2x32xf32>
    %cst_42 = arith.constant 1.000000e+00 : f32
    %121 = vector.broadcast %cst_42 : f32 to vector<2x32xf32>
    %122 = arith.addf %121, %120 : vector<2x32xf32>
    %123 = arith.divf %121, %122 : vector<2x32xf32>
    %124 = vector.extract_strided_slice %117 {offsets = [0, 32], sizes = [2, 32], strides = [1, 1]} : vector<2x128xf32> to vector<2x32xf32>
    %125 = arith.negf %124 : vector<2x32xf32>
    %126 = math.exp %125 : vector<2x32xf32>
    %cst_43 = arith.constant 1.000000e+00 : f32
    %127 = vector.broadcast %cst_43 : f32 to vector<2x32xf32>
    %128 = arith.addf %127, %126 : vector<2x32xf32>
    %129 = arith.divf %127, %128 : vector<2x32xf32>
    %130 = vector.extract_strided_slice %117 {offsets = [0, 64], sizes = [2, 32], strides = [1, 1]} : vector<2x128xf32> to vector<2x32xf32>
    %131 = math.tanh %130 : vector<2x32xf32>
    %132 = vector.extract_strided_slice %117 {offsets = [0, 96], sizes = [2, 32], strides = [1, 1]} : vector<2x128xf32> to vector<2x32xf32>
    %133 = arith.negf %132 : vector<2x32xf32>
    %134 = math.exp %133 : vector<2x32xf32>
    %cst_44 = arith.constant 1.000000e+00 : f32
    %135 = vector.broadcast %cst_44 : f32 to vector<2x32xf32>
    %136 = arith.addf %135, %134 : vector<2x32xf32>
    %137 = arith.divf %135, %136 : vector<2x32xf32>
    %138 = arith.mulf %129, %78 : vector<2x32xf32>
    %139 = arith.mulf %123, %131 : vector<2x32xf32>
    %140 = arith.addf %138, %139 : vector<2x32xf32>
    %141 = math.tanh %140 : vector<2x32xf32>
    %142 = arith.mulf %137, %141 : vector<2x32xf32>
    %143 = arith.index_cast %c1_i32 : i32 to index
    %c0_45 = arith.constant 0 : index
    %c0_46 = arith.constant 0 : index
    %144 = vector.load %arg12[%143, %c0_45, %c0_46] : memref<8x2x32xf32, #tpu.memory_space<vmem>>, vector<1x2x32xf32>
    %145 = vector.shape_cast %144 : vector<1x2x32xf32> to vector<2x32xf32>
    %146 = vector.shape_cast %142 : vector<2x32xf32> to vector<1x2x32xf32>
    tpu.vector_store %arg12[%143, %c0_45, %c0_46], %146 {strides = array<i32>} : memref<8x2x32xf32, #tpu.memory_space<vmem>>, vector<1x2x32xf32>,
    %c2_i32_47 = arith.constant 2 : i32
    %c2_i32_48 = arith.constant 2 : i32
    %147 = arith.muli %c2_i32_47, %c2_i32_48 : i32
    %148 = arith.index_cast %147 : i32 to index
    %c0_49 = arith.constant 0 : index
    %149 = vector.load %arg11[%148, %c0_49] : memref<16x128xf32, #tpu.memory_space<vmem>>, vector<2x128xf32>
    %cst_50 = arith.constant dense<0.000000e+00> : vector<2x128xf32>
    %150 = tpu.matmul %114, %10, %cst_50 {dimension_numbers = #tpu.dot_dimension_numbers<[1], [0], [0], [1], [0, 0, 1, 1], [], []>} : vector<2x32xf32>, vector<32x128xf32>, vector<2x128xf32> -> vector<2x128xf32>
    %151 = arith.addf %149, %150 : vector<2x128xf32>
    %152 = vector.extract_strided_slice %151 {offsets = [0, 0], sizes = [2, 32], strides = [1, 1]} : vector<2x128xf32> to vector<2x32xf32>
    %153 = arith.negf %152 : vector<2x32xf32>
    %154 = math.exp %153 : vector<2x32xf32>
    %cst_51 = arith.constant 1.000000e+00 : f32
    %155 = vector.broadcast %cst_51 : f32 to vector<2x32xf32>
    %156 = arith.addf %155, %154 : vector<2x32xf32>
    %157 = arith.divf %155, %156 : vector<2x32xf32>
    %158 = vector.extract_strided_slice %151 {offsets = [0, 32], sizes = [2, 32], strides = [1, 1]} : vector<2x128xf32> to vector<2x32xf32>
    %159 = arith.negf %158 : vector<2x32xf32>
    %160 = math.exp %159 : vector<2x32xf32>
    %cst_52 = arith.constant 1.000000e+00 : f32
    %161 = vector.broadcast %cst_52 : f32 to vector<2x32xf32>
    %162 = arith.addf %161, %160 : vector<2x32xf32>
    %163 = arith.divf %161, %162 : vector<2x32xf32>
    %164 = vector.extract_strided_slice %151 {offsets = [0, 64], sizes = [2, 32], strides = [1, 1]} : vector<2x128xf32> to vector<2x32xf32>
    %165 = math.tanh %164 : vector<2x32xf32>
    %166 = vector.extract_strided_slice %151 {offsets = [0, 96], sizes = [2, 32], strides = [1, 1]} : vector<2x128xf32> to vector<2x32xf32>
    %167 = arith.negf %166 : vector<2x32xf32>
    %168 = math.exp %167 : vector<2x32xf32>
    %cst_53 = arith.constant 1.000000e+00 : f32
    %169 = vector.broadcast %cst_53 : f32 to vector<2x32xf32>
    %170 = arith.addf %169, %168 : vector<2x32xf32>
    %171 = arith.divf %169, %170 : vector<2x32xf32>
    %172 = arith.mulf %163, %112 : vector<2x32xf32>
    %173 = arith.mulf %157, %165 : vector<2x32xf32>
    %174 = arith.addf %172, %173 : vector<2x32xf32>
    %175 = math.tanh %174 : vector<2x32xf32>
    %176 = arith.mulf %171, %175 : vector<2x32xf32>
    %177 = tpu.concatenate %176, %142 in 1 : vector<2x32xf32>, vector<2x32xf32> -> vector<2x64xf32>
    %cst_54 = arith.constant dense<0.000000e+00> : vector<2x128xf32>
    %178 = tpu.matmul %177, %11, %cst_54 {dimension_numbers = #tpu.dot_dimension_numbers<[1], [0], [0], [1], [0, 0, 1, 1], [], []>} : vector<2x64xf32>, vector<64x128xf32>, vector<2x128xf32> -> vector<2x128xf32>
    %179 = arith.addf %178, %14 : vector<2x128xf32>
    %180 = vector.extract_strided_slice %179 {offsets = [0, 0], sizes = [2, 32], strides = [1, 1]} : vector<2x128xf32> to vector<2x32xf32>
    %181 = arith.negf %180 : vector<2x32xf32>
    %182 = math.exp %181 : vector<2x32xf32>
    %cst_55 = arith.constant 1.000000e+00 : f32
    %183 = vector.broadcast %cst_55 : f32 to vector<2x32xf32>
    %184 = arith.addf %183, %182 : vector<2x32xf32>
    %185 = arith.divf %183, %184 : vector<2x32xf32>
    %186 = vector.extract_strided_slice %179 {offsets = [0, 32], sizes = [2, 32], strides = [1, 1]} : vector<2x128xf32> to vector<2x32xf32>
    %187 = arith.negf %186 : vector<2x32xf32>
    %188 = math.exp %187 : vector<2x32xf32>
    %cst_56 = arith.constant 1.000000e+00 : f32
    %189 = vector.broadcast %cst_56 : f32 to vector<2x32xf32>
    %190 = arith.addf %189, %188 : vector<2x32xf32>
    %191 = arith.divf %189, %190 : vector<2x32xf32>
    %192 = vector.extract_strided_slice %179 {offsets = [0, 64], sizes = [2, 32], strides = [1, 1]} : vector<2x128xf32> to vector<2x32xf32>
    %193 = math.tanh %192 : vector<2x32xf32>
    %194 = vector.extract_strided_slice %179 {offsets = [0, 96], sizes = [2, 32], strides = [1, 1]} : vector<2x128xf32> to vector<2x32xf32>
    %195 = arith.negf %194 : vector<2x32xf32>
    %196 = math.exp %195 : vector<2x32xf32>
    %cst_57 = arith.constant 1.000000e+00 : f32
    %197 = vector.broadcast %cst_57 : f32 to vector<2x32xf32>
    %198 = arith.addf %197, %196 : vector<2x32xf32>
    %199 = arith.divf %197, %198 : vector<2x32xf32>
    %200 = arith.mulf %191, %140 : vector<2x32xf32>
    %201 = arith.mulf %185, %193 : vector<2x32xf32>
    %202 = arith.addf %200, %201 : vector<2x32xf32>
    %203 = math.tanh %202 : vector<2x32xf32>
    %204 = arith.mulf %199, %203 : vector<2x32xf32>
    %205 = arith.index_cast %c2_i32_47 : i32 to index
    %c0_58 = arith.constant 0 : index
    %c0_59 = arith.constant 0 : index
    %206 = vector.load %arg12[%205, %c0_58, %c0_59] : memref<8x2x32xf32, #tpu.memory_space<vmem>>, vector<1x2x32xf32>
    %207 = vector.shape_cast %206 : vector<1x2x32xf32> to vector<2x32xf32>
    %208 = vector.shape_cast %204 : vector<2x32xf32> to vector<1x2x32xf32>
    tpu.vector_store %arg12[%205, %c0_58, %c0_59], %208 {strides = array<i32>} : memref<8x2x32xf32, #tpu.memory_space<vmem>>, vector<1x2x32xf32>,
    %c3_i32 = arith.constant 3 : i32
    %c2_i32_60 = arith.constant 2 : i32
    %209 = arith.muli %c3_i32, %c2_i32_60 : i32
    %210 = arith.index_cast %209 : i32 to index
    %c0_61 = arith.constant 0 : index
    %211 = vector.load %arg11[%210, %c0_61] : memref<16x128xf32, #tpu.memory_space<vmem>>, vector<2x128xf32>
    %cst_62 = arith.constant dense<0.000000e+00> : vector<2x128xf32>
    %212 = tpu.matmul %176, %10, %cst_62 {dimension_numbers = #tpu.dot_dimension_numbers<[1], [0], [0], [1], [0, 0, 1, 1], [], []>} : vector<2x32xf32>, vector<32x128xf32>, vector<2x128xf32> -> vector<2x128xf32>
    %213 = arith.addf %211, %212 : vector<2x128xf32>
    %214 = vector.extract_strided_slice %213 {offsets = [0, 0], sizes = [2, 32], strides = [1, 1]} : vector<2x128xf32> to vector<2x32xf32>
    %215 = arith.negf %214 : vector<2x32xf32>
    %216 = math.exp %215 : vector<2x32xf32>
    %cst_63 = arith.constant 1.000000e+00 : f32
    %217 = vector.broadcast %cst_63 : f32 to vector<2x32xf32>
    %218 = arith.addf %217, %216 : vector<2x32xf32>
    %219 = arith.divf %217, %218 : vector<2x32xf32>
    %220 = vector.extract_strided_slice %213 {offsets = [0, 32], sizes = [2, 32], strides = [1, 1]} : vector<2x128xf32> to vector<2x32xf32>
    %221 = arith.negf %220 : vector<2x32xf32>
    %222 = math.exp %221 : vector<2x32xf32>
    %cst_64 = arith.constant 1.000000e+00 : f32
    %223 = vector.broadcast %cst_64 : f32 to vector<2x32xf32>
    %224 = arith.addf %223, %222 : vector<2x32xf32>
    %225 = arith.divf %223, %224 : vector<2x32xf32>
    %226 = vector.extract_strided_slice %213 {offsets = [0, 64], sizes = [2, 32], strides = [1, 1]} : vector<2x128xf32> to vector<2x32xf32>
    %227 = math.tanh %226 : vector<2x32xf32>
    %228 = vector.extract_strided_slice %213 {offsets = [0, 96], sizes = [2, 32], strides = [1, 1]} : vector<2x128xf32> to vector<2x32xf32>
    %229 = arith.negf %228 : vector<2x32xf32>
    %230 = math.exp %229 : vector<2x32xf32>
    %cst_65 = arith.constant 1.000000e+00 : f32
    %231 = vector.broadcast %cst_65 : f32 to vector<2x32xf32>
    %232 = arith.addf %231, %230 : vector<2x32xf32>
    %233 = arith.divf %231, %232 : vector<2x32xf32>
    %234 = arith.mulf %225, %174 : vector<2x32xf32>
    %235 = arith.mulf %219, %227 : vector<2x32xf32>
    %236 = arith.addf %234, %235 : vector<2x32xf32>
    %237 = math.tanh %236 : vector<2x32xf32>
    %238 = arith.mulf %233, %237 : vector<2x32xf32>
    %239 = tpu.concatenate %238, %204 in 1 : vector<2x32xf32>, vector<2x32xf32> -> vector<2x64xf32>
    %cst_66 = arith.constant dense<0.000000e+00> : vector<2x128xf32>
    %240 = tpu.matmul %239, %11, %cst_66 {dimension_numbers = #tpu.dot_dimension_numbers<[1], [0], [0], [1], [0, 0, 1, 1], [], []>} : vector<2x64xf32>, vector<64x128xf32>, vector<2x128xf32> -> vector<2x128xf32>
    %241 = arith.addf %240, %14 : vector<2x128xf32>
    %242 = vector.extract_strided_slice %241 {offsets = [0, 0], sizes = [2, 32], strides = [1, 1]} : vector<2x128xf32> to vector<2x32xf32>
    %243 = arith.negf %242 : vector<2x32xf32>
    %244 = math.exp %243 : vector<2x32xf32>
    %cst_67 = arith.constant 1.000000e+00 : f32
    %245 = vector.broadcast %cst_67 : f32 to vector<2x32xf32>
    %246 = arith.addf %245, %244 : vector<2x32xf32>
    %247 = arith.divf %245, %246 : vector<2x32xf32>
    %248 = vector.extract_strided_slice %241 {offsets = [0, 32], sizes = [2, 32], strides = [1, 1]} : vector<2x128xf32> to vector<2x32xf32>
    %249 = arith.negf %248 : vector<2x32xf32>
    %250 = math.exp %249 : vector<2x32xf32>
    %cst_68 = arith.constant 1.000000e+00 : f32
    %251 = vector.broadcast %cst_68 : f32 to vector<2x32xf32>
    %252 = arith.addf %251, %250 : vector<2x32xf32>
    %253 = arith.divf %251, %252 : vector<2x32xf32>
    %254 = vector.extract_strided_slice %241 {offsets = [0, 64], sizes = [2, 32], strides = [1, 1]} : vector<2x128xf32> to vector<2x32xf32>
    %255 = math.tanh %254 : vector<2x32xf32>
    %256 = vector.extract_strided_slice %241 {offsets = [0, 96], sizes = [2, 32], strides = [1, 1]} : vector<2x128xf32> to vector<2x32xf32>
    %257 = arith.negf %256 : vector<2x32xf32>
    %258 = math.exp %257 : vector<2x32xf32>
    %cst_69 = arith.constant 1.000000e+00 : f32
    %259 = vector.broadcast %cst_69 : f32 to vector<2x32xf32>
    %260 = arith.addf %259, %258 : vector<2x32xf32>
    %261 = arith.divf %259, %260 : vector<2x32xf32>
    %262 = arith.mulf %253, %202 : vector<2x32xf32>
    %263 = arith.mulf %247, %255 : vector<2x32xf32>
    %264 = arith.addf %262, %263 : vector<2x32xf32>
    %265 = math.tanh %264 : vector<2x32xf32>
    %266 = arith.mulf %261, %265 : vector<2x32xf32>
    %267 = arith.index_cast %c3_i32 : i32 to index
    %c0_70 = arith.constant 0 : index
    %c0_71 = arith.constant 0 : index
    %268 = vector.load %arg12[%267, %c0_70, %c0_71] : memref<8x2x32xf32, #tpu.memory_space<vmem>>, vector<1x2x32xf32>
    %269 = vector.shape_cast %268 : vector<1x2x32xf32> to vector<2x32xf32>
    %270 = vector.shape_cast %266 : vector<2x32xf32> to vector<1x2x32xf32>
    tpu.vector_store %arg12[%267, %c0_70, %c0_71], %270 {strides = array<i32>} : memref<8x2x32xf32, #tpu.memory_space<vmem>>, vector<1x2x32xf32>,
    %c4_i32 = arith.constant 4 : i32
    %c2_i32_72 = arith.constant 2 : i32
    %271 = arith.muli %c4_i32, %c2_i32_72 : i32
    %272 = arith.index_cast %271 : i32 to index
    %c0_73 = arith.constant 0 : index
    %273 = vector.load %arg11[%272, %c0_73] : memref<16x128xf32, #tpu.memory_space<vmem>>, vector<2x128xf32>
    %cst_74 = arith.constant dense<0.000000e+00> : vector<2x128xf32>
    %274 = tpu.matmul %238, %10, %cst_74 {dimension_numbers = #tpu.dot_dimension_numbers<[1], [0], [0], [1], [0, 0, 1, 1], [], []>} : vector<2x32xf32>, vector<32x128xf32>, vector<2x128xf32> -> vector<2x128xf32>
    %275 = arith.addf %273, %274 : vector<2x128xf32>
    %276 = vector.extract_strided_slice %275 {offsets = [0, 0], sizes = [2, 32], strides = [1, 1]} : vector<2x128xf32> to vector<2x32xf32>
    %277 = arith.negf %276 : vector<2x32xf32>
    %278 = math.exp %277 : vector<2x32xf32>
    %cst_75 = arith.constant 1.000000e+00 : f32
    %279 = vector.broadcast %cst_75 : f32 to vector<2x32xf32>
    %280 = arith.addf %279, %278 : vector<2x32xf32>
    %281 = arith.divf %279, %280 : vector<2x32xf32>
    %282 = vector.extract_strided_slice %275 {offsets = [0, 32], sizes = [2, 32], strides = [1, 1]} : vector<2x128xf32> to vector<2x32xf32>
    %283 = arith.negf %282 : vector<2x32xf32>
    %284 = math.exp %283 : vector<2x32xf32>
    %cst_76 = arith.constant 1.000000e+00 : f32
    %285 = vector.broadcast %cst_76 : f32 to vector<2x32xf32>
    %286 = arith.addf %285, %284 : vector<2x32xf32>
    %287 = arith.divf %285, %286 : vector<2x32xf32>
    %288 = vector.extract_strided_slice %275 {offsets = [0, 64], sizes = [2, 32], strides = [1, 1]} : vector<2x128xf32> to vector<2x32xf32>
    %289 = math.tanh %288 : vector<2x32xf32>
    %290 = vector.extract_strided_slice %275 {offsets = [0, 96], sizes = [2, 32], strides = [1, 1]} : vector<2x128xf32> to vector<2x32xf32>
    %291 = arith.negf %290 : vector<2x32xf32>
    %292 = math.exp %291 : vector<2x32xf32>
    %cst_77 = arith.constant 1.000000e+00 : f32
    %293 = vector.broadcast %cst_77 : f32 to vector<2x32xf32>
    %294 = arith.addf %293, %292 : vector<2x32xf32>
    %295 = arith.divf %293, %294 : vector<2x32xf32>
    %296 = arith.mulf %287, %236 : vector<2x32xf32>
    %297 = arith.mulf %281, %289 : vector<2x32xf32>
    %298 = arith.addf %296, %297 : vector<2x32xf32>
    %299 = math.tanh %298 : vector<2x32xf32>
    %300 = arith.mulf %295, %299 : vector<2x32xf32>
    %301 = tpu.concatenate %300, %266 in 1 : vector<2x32xf32>, vector<2x32xf32> -> vector<2x64xf32>
    %cst_78 = arith.constant dense<0.000000e+00> : vector<2x128xf32>
    %302 = tpu.matmul %301, %11, %cst_78 {dimension_numbers = #tpu.dot_dimension_numbers<[1], [0], [0], [1], [0, 0, 1, 1], [], []>} : vector<2x64xf32>, vector<64x128xf32>, vector<2x128xf32> -> vector<2x128xf32>
    %303 = arith.addf %302, %14 : vector<2x128xf32>
    %304 = vector.extract_strided_slice %303 {offsets = [0, 0], sizes = [2, 32], strides = [1, 1]} : vector<2x128xf32> to vector<2x32xf32>
    %305 = arith.negf %304 : vector<2x32xf32>
    %306 = math.exp %305 : vector<2x32xf32>
    %cst_79 = arith.constant 1.000000e+00 : f32
    %307 = vector.broadcast %cst_79 : f32 to vector<2x32xf32>
    %308 = arith.addf %307, %306 : vector<2x32xf32>
    %309 = arith.divf %307, %308 : vector<2x32xf32>
    %310 = vector.extract_strided_slice %303 {offsets = [0, 32], sizes = [2, 32], strides = [1, 1]} : vector<2x128xf32> to vector<2x32xf32>
    %311 = arith.negf %310 : vector<2x32xf32>
    %312 = math.exp %311 : vector<2x32xf32>
    %cst_80 = arith.constant 1.000000e+00 : f32
    %313 = vector.broadcast %cst_80 : f32 to vector<2x32xf32>
    %314 = arith.addf %313, %312 : vector<2x32xf32>
    %315 = arith.divf %313, %314 : vector<2x32xf32>
    %316 = vector.extract_strided_slice %303 {offsets = [0, 64], sizes = [2, 32], strides = [1, 1]} : vector<2x128xf32> to vector<2x32xf32>
    %317 = math.tanh %316 : vector<2x32xf32>
    %318 = vector.extract_strided_slice %303 {offsets = [0, 96], sizes = [2, 32], strides = [1, 1]} : vector<2x128xf32> to vector<2x32xf32>
    %319 = arith.negf %318 : vector<2x32xf32>
    %320 = math.exp %319 : vector<2x32xf32>
    %cst_81 = arith.constant 1.000000e+00 : f32
    %321 = vector.broadcast %cst_81 : f32 to vector<2x32xf32>
    %322 = arith.addf %321, %320 : vector<2x32xf32>
    %323 = arith.divf %321, %322 : vector<2x32xf32>
    %324 = arith.mulf %315, %264 : vector<2x32xf32>
    %325 = arith.mulf %309, %317 : vector<2x32xf32>
    %326 = arith.addf %324, %325 : vector<2x32xf32>
    %327 = math.tanh %326 : vector<2x32xf32>
    %328 = arith.mulf %323, %327 : vector<2x32xf32>
    %329 = arith.index_cast %c4_i32 : i32 to index
    %c0_82 = arith.constant 0 : index
    %c0_83 = arith.constant 0 : index
    %330 = vector.load %arg12[%329, %c0_82, %c0_83] : memref<8x2x32xf32, #tpu.memory_space<vmem>>, vector<1x2x32xf32>
    %331 = vector.shape_cast %330 : vector<1x2x32xf32> to vector<2x32xf32>
    %332 = vector.shape_cast %328 : vector<2x32xf32> to vector<1x2x32xf32>
    tpu.vector_store %arg12[%329, %c0_82, %c0_83], %332 {strides = array<i32>} : memref<8x2x32xf32, #tpu.memory_space<vmem>>, vector<1x2x32xf32>,
    %c5_i32 = arith.constant 5 : i32
    %c2_i32_84 = arith.constant 2 : i32
    %333 = arith.muli %c5_i32, %c2_i32_84 : i32
    %334 = arith.index_cast %333 : i32 to index
    %c0_85 = arith.constant 0 : index
    %335 = vector.load %arg11[%334, %c0_85] : memref<16x128xf32, #tpu.memory_space<vmem>>, vector<2x128xf32>
    %cst_86 = arith.constant dense<0.000000e+00> : vector<2x128xf32>
    %336 = tpu.matmul %300, %10, %cst_86 {dimension_numbers = #tpu.dot_dimension_numbers<[1], [0], [0], [1], [0, 0, 1, 1], [], []>} : vector<2x32xf32>, vector<32x128xf32>, vector<2x128xf32> -> vector<2x128xf32>
    %337 = arith.addf %335, %336 : vector<2x128xf32>
    %338 = vector.extract_strided_slice %337 {offsets = [0, 0], sizes = [2, 32], strides = [1, 1]} : vector<2x128xf32> to vector<2x32xf32>
    %339 = arith.negf %338 : vector<2x32xf32>
    %340 = math.exp %339 : vector<2x32xf32>
    %cst_87 = arith.constant 1.000000e+00 : f32
    %341 = vector.broadcast %cst_87 : f32 to vector<2x32xf32>
    %342 = arith.addf %341, %340 : vector<2x32xf32>
    %343 = arith.divf %341, %342 : vector<2x32xf32>
    %344 = vector.extract_strided_slice %337 {offsets = [0, 32], sizes = [2, 32], strides = [1, 1]} : vector<2x128xf32> to vector<2x32xf32>
    %345 = arith.negf %344 : vector<2x32xf32>
    %346 = math.exp %345 : vector<2x32xf32>
    %cst_88 = arith.constant 1.000000e+00 : f32
    %347 = vector.broadcast %cst_88 : f32 to vector<2x32xf32>
    %348 = arith.addf %347, %346 : vector<2x32xf32>
    %349 = arith.divf %347, %348 : vector<2x32xf32>
    %350 = vector.extract_strided_slice %337 {offsets = [0, 64], sizes = [2, 32], strides = [1, 1]} : vector<2x128xf32> to vector<2x32xf32>
    %351 = math.tanh %350 : vector<2x32xf32>
    %352 = vector.extract_strided_slice %337 {offsets = [0, 96], sizes = [2, 32], strides = [1, 1]} : vector<2x128xf32> to vector<2x32xf32>
    %353 = arith.negf %352 : vector<2x32xf32>
    %354 = math.exp %353 : vector<2x32xf32>
    %cst_89 = arith.constant 1.000000e+00 : f32
    %355 = vector.broadcast %cst_89 : f32 to vector<2x32xf32>
    %356 = arith.addf %355, %354 : vector<2x32xf32>
    %357 = arith.divf %355, %356 : vector<2x32xf32>
    %358 = arith.mulf %349, %298 : vector<2x32xf32>
    %359 = arith.mulf %343, %351 : vector<2x32xf32>
    %360 = arith.addf %358, %359 : vector<2x32xf32>
    %361 = math.tanh %360 : vector<2x32xf32>
    %362 = arith.mulf %357, %361 : vector<2x32xf32>
    %363 = tpu.concatenate %362, %328 in 1 : vector<2x32xf32>, vector<2x32xf32> -> vector<2x64xf32>
    %cst_90 = arith.constant dense<0.000000e+00> : vector<2x128xf32>
    %364 = tpu.matmul %363, %11, %cst_90 {dimension_numbers = #tpu.dot_dimension_numbers<[1], [0], [0], [1], [0, 0, 1, 1], [], []>} : vector<2x64xf32>, vector<64x128xf32>, vector<2x128xf32> -> vector<2x128xf32>
    %365 = arith.addf %364, %14 : vector<2x128xf32>
    %366 = vector.extract_strided_slice %365 {offsets = [0, 0], sizes = [2, 32], strides = [1, 1]} : vector<2x128xf32> to vector<2x32xf32>
    %367 = arith.negf %366 : vector<2x32xf32>
    %368 = math.exp %367 : vector<2x32xf32>
    %cst_91 = arith.constant 1.000000e+00 : f32
    %369 = vector.broadcast %cst_91 : f32 to vector<2x32xf32>
    %370 = arith.addf %369, %368 : vector<2x32xf32>
    %371 = arith.divf %369, %370 : vector<2x32xf32>
    %372 = vector.extract_strided_slice %365 {offsets = [0, 32], sizes = [2, 32], strides = [1, 1]} : vector<2x128xf32> to vector<2x32xf32>
    %373 = arith.negf %372 : vector<2x32xf32>
    %374 = math.exp %373 : vector<2x32xf32>
    %cst_92 = arith.constant 1.000000e+00 : f32
    %375 = vector.broadcast %cst_92 : f32 to vector<2x32xf32>
    %376 = arith.addf %375, %374 : vector<2x32xf32>
    %377 = arith.divf %375, %376 : vector<2x32xf32>
    %378 = vector.extract_strided_slice %365 {offsets = [0, 64], sizes = [2, 32], strides = [1, 1]} : vector<2x128xf32> to vector<2x32xf32>
    %379 = math.tanh %378 : vector<2x32xf32>
    %380 = vector.extract_strided_slice %365 {offsets = [0, 96], sizes = [2, 32], strides = [1, 1]} : vector<2x128xf32> to vector<2x32xf32>
    %381 = arith.negf %380 : vector<2x32xf32>
    %382 = math.exp %381 : vector<2x32xf32>
    %cst_93 = arith.constant 1.000000e+00 : f32
    %383 = vector.broadcast %cst_93 : f32 to vector<2x32xf32>
    %384 = arith.addf %383, %382 : vector<2x32xf32>
    %385 = arith.divf %383, %384 : vector<2x32xf32>
    %386 = arith.mulf %377, %326 : vector<2x32xf32>
    %387 = arith.mulf %371, %379 : vector<2x32xf32>
    %388 = arith.addf %386, %387 : vector<2x32xf32>
    %389 = math.tanh %388 : vector<2x32xf32>
    %390 = arith.mulf %385, %389 : vector<2x32xf32>
    %391 = arith.index_cast %c5_i32 : i32 to index
    %c0_94 = arith.constant 0 : index
    %c0_95 = arith.constant 0 : index
    %392 = vector.load %arg12[%391, %c0_94, %c0_95] : memref<8x2x32xf32, #tpu.memory_space<vmem>>, vector<1x2x32xf32>
    %393 = vector.shape_cast %392 : vector<1x2x32xf32> to vector<2x32xf32>
    %394 = vector.shape_cast %390 : vector<2x32xf32> to vector<1x2x32xf32>
    tpu.vector_store %arg12[%391, %c0_94, %c0_95], %394 {strides = array<i32>} : memref<8x2x32xf32, #tpu.memory_space<vmem>>, vector<1x2x32xf32>,
    %c6_i32 = arith.constant 6 : i32
    %c2_i32_96 = arith.constant 2 : i32
    %395 = arith.muli %c6_i32, %c2_i32_96 : i32
    %396 = arith.index_cast %395 : i32 to index
    %c0_97 = arith.constant 0 : index
    %397 = vector.load %arg11[%396, %c0_97] : memref<16x128xf32, #tpu.memory_space<vmem>>, vector<2x128xf32>
    %cst_98 = arith.constant dense<0.000000e+00> : vector<2x128xf32>
    %398 = tpu.matmul %362, %10, %cst_98 {dimension_numbers = #tpu.dot_dimension_numbers<[1], [0], [0], [1], [0, 0, 1, 1], [], []>} : vector<2x32xf32>, vector<32x128xf32>, vector<2x128xf32> -> vector<2x128xf32>
    %399 = arith.addf %397, %398 : vector<2x128xf32>
    %400 = vector.extract_strided_slice %399 {offsets = [0, 0], sizes = [2, 32], strides = [1, 1]} : vector<2x128xf32> to vector<2x32xf32>
    %401 = arith.negf %400 : vector<2x32xf32>
    %402 = math.exp %401 : vector<2x32xf32>
    %cst_99 = arith.constant 1.000000e+00 : f32
    %403 = vector.broadcast %cst_99 : f32 to vector<2x32xf32>
    %404 = arith.addf %403, %402 : vector<2x32xf32>
    %405 = arith.divf %403, %404 : vector<2x32xf32>
    %406 = vector.extract_strided_slice %399 {offsets = [0, 32], sizes = [2, 32], strides = [1, 1]} : vector<2x128xf32> to vector<2x32xf32>
    %407 = arith.negf %406 : vector<2x32xf32>
    %408 = math.exp %407 : vector<2x32xf32>
    %cst_100 = arith.constant 1.000000e+00 : f32
    %409 = vector.broadcast %cst_100 : f32 to vector<2x32xf32>
    %410 = arith.addf %409, %408 : vector<2x32xf32>
    %411 = arith.divf %409, %410 : vector<2x32xf32>
    %412 = vector.extract_strided_slice %399 {offsets = [0, 64], sizes = [2, 32], strides = [1, 1]} : vector<2x128xf32> to vector<2x32xf32>
    %413 = math.tanh %412 : vector<2x32xf32>
    %414 = vector.extract_strided_slice %399 {offsets = [0, 96], sizes = [2, 32], strides = [1, 1]} : vector<2x128xf32> to vector<2x32xf32>
    %415 = arith.negf %414 : vector<2x32xf32>
    %416 = math.exp %415 : vector<2x32xf32>
    %cst_101 = arith.constant 1.000000e+00 : f32
    %417 = vector.broadcast %cst_101 : f32 to vector<2x32xf32>
    %418 = arith.addf %417, %416 : vector<2x32xf32>
    %419 = arith.divf %417, %418 : vector<2x32xf32>
    %420 = arith.mulf %411, %360 : vector<2x32xf32>
    %421 = arith.mulf %405, %413 : vector<2x32xf32>
    %422 = arith.addf %420, %421 : vector<2x32xf32>
    %423 = math.tanh %422 : vector<2x32xf32>
    %424 = arith.mulf %419, %423 : vector<2x32xf32>
    %425 = tpu.concatenate %424, %390 in 1 : vector<2x32xf32>, vector<2x32xf32> -> vector<2x64xf32>
    %cst_102 = arith.constant dense<0.000000e+00> : vector<2x128xf32>
    %426 = tpu.matmul %425, %11, %cst_102 {dimension_numbers = #tpu.dot_dimension_numbers<[1], [0], [0], [1], [0, 0, 1, 1], [], []>} : vector<2x64xf32>, vector<64x128xf32>, vector<2x128xf32> -> vector<2x128xf32>
    %427 = arith.addf %426, %14 : vector<2x128xf32>
    %428 = vector.extract_strided_slice %427 {offsets = [0, 0], sizes = [2, 32], strides = [1, 1]} : vector<2x128xf32> to vector<2x32xf32>
    %429 = arith.negf %428 : vector<2x32xf32>
    %430 = math.exp %429 : vector<2x32xf32>
    %cst_103 = arith.constant 1.000000e+00 : f32
    %431 = vector.broadcast %cst_103 : f32 to vector<2x32xf32>
    %432 = arith.addf %431, %430 : vector<2x32xf32>
    %433 = arith.divf %431, %432 : vector<2x32xf32>
    %434 = vector.extract_strided_slice %427 {offsets = [0, 32], sizes = [2, 32], strides = [1, 1]} : vector<2x128xf32> to vector<2x32xf32>
    %435 = arith.negf %434 : vector<2x32xf32>
    %436 = math.exp %435 : vector<2x32xf32>
    %cst_104 = arith.constant 1.000000e+00 : f32
    %437 = vector.broadcast %cst_104 : f32 to vector<2x32xf32>
    %438 = arith.addf %437, %436 : vector<2x32xf32>
    %439 = arith.divf %437, %438 : vector<2x32xf32>
    %440 = vector.extract_strided_slice %427 {offsets = [0, 64], sizes = [2, 32], strides = [1, 1]} : vector<2x128xf32> to vector<2x32xf32>
    %441 = math.tanh %440 : vector<2x32xf32>
    %442 = vector.extract_strided_slice %427 {offsets = [0, 96], sizes = [2, 32], strides = [1, 1]} : vector<2x128xf32> to vector<2x32xf32>
    %443 = arith.negf %442 : vector<2x32xf32>
    %444 = math.exp %443 : vector<2x32xf32>
    %cst_105 = arith.constant 1.000000e+00 : f32
    %445 = vector.broadcast %cst_105 : f32 to vector<2x32xf32>
    %446 = arith.addf %445, %444 : vector<2x32xf32>
    %447 = arith.divf %445, %446 : vector<2x32xf32>
    %448 = arith.mulf %439, %388 : vector<2x32xf32>
    %449 = arith.mulf %433, %441 : vector<2x32xf32>
    %450 = arith.addf %448, %449 : vector<2x32xf32>
    %451 = math.tanh %450 : vector<2x32xf32>
    %452 = arith.mulf %447, %451 : vector<2x32xf32>
    %453 = arith.index_cast %c6_i32 : i32 to index
    %c0_106 = arith.constant 0 : index
    %c0_107 = arith.constant 0 : index
    %454 = vector.load %arg12[%453, %c0_106, %c0_107] : memref<8x2x32xf32, #tpu.memory_space<vmem>>, vector<1x2x32xf32>
    %455 = vector.shape_cast %454 : vector<1x2x32xf32> to vector<2x32xf32>
    %456 = vector.shape_cast %452 : vector<2x32xf32> to vector<1x2x32xf32>
    tpu.vector_store %arg12[%453, %c0_106, %c0_107], %456 {strides = array<i32>} : memref<8x2x32xf32, #tpu.memory_space<vmem>>, vector<1x2x32xf32>,
    %c7_i32 = arith.constant 7 : i32
    %c2_i32_108 = arith.constant 2 : i32
    %457 = arith.muli %c7_i32, %c2_i32_108 : i32
    %458 = arith.index_cast %457 : i32 to index
    %c0_109 = arith.constant 0 : index
    %459 = vector.load %arg11[%458, %c0_109] : memref<16x128xf32, #tpu.memory_space<vmem>>, vector<2x128xf32>
    %cst_110 = arith.constant dense<0.000000e+00> : vector<2x128xf32>
    %460 = tpu.matmul %424, %10, %cst_110 {dimension_numbers = #tpu.dot_dimension_numbers<[1], [0], [0], [1], [0, 0, 1, 1], [], []>} : vector<2x32xf32>, vector<32x128xf32>, vector<2x128xf32> -> vector<2x128xf32>
    %461 = arith.addf %459, %460 : vector<2x128xf32>
    %462 = vector.extract_strided_slice %461 {offsets = [0, 0], sizes = [2, 32], strides = [1, 1]} : vector<2x128xf32> to vector<2x32xf32>
    %463 = arith.negf %462 : vector<2x32xf32>
    %464 = math.exp %463 : vector<2x32xf32>
    %cst_111 = arith.constant 1.000000e+00 : f32
    %465 = vector.broadcast %cst_111 : f32 to vector<2x32xf32>
    %466 = arith.addf %465, %464 : vector<2x32xf32>
    %467 = arith.divf %465, %466 : vector<2x32xf32>
    %468 = vector.extract_strided_slice %461 {offsets = [0, 32], sizes = [2, 32], strides = [1, 1]} : vector<2x128xf32> to vector<2x32xf32>
    %469 = arith.negf %468 : vector<2x32xf32>
    %470 = math.exp %469 : vector<2x32xf32>
    %cst_112 = arith.constant 1.000000e+00 : f32
    %471 = vector.broadcast %cst_112 : f32 to vector<2x32xf32>
    %472 = arith.addf %471, %470 : vector<2x32xf32>
    %473 = arith.divf %471, %472 : vector<2x32xf32>
    %474 = vector.extract_strided_slice %461 {offsets = [0, 64], sizes = [2, 32], strides = [1, 1]} : vector<2x128xf32> to vector<2x32xf32>
    %475 = math.tanh %474 : vector<2x32xf32>
    %476 = vector.extract_strided_slice %461 {offsets = [0, 96], sizes = [2, 32], strides = [1, 1]} : vector<2x128xf32> to vector<2x32xf32>
    %477 = arith.negf %476 : vector<2x32xf32>
    %478 = math.exp %477 : vector<2x32xf32>
    %cst_113 = arith.constant 1.000000e+00 : f32
    %479 = vector.broadcast %cst_113 : f32 to vector<2x32xf32>
    %480 = arith.addf %479, %478 : vector<2x32xf32>
    %481 = arith.divf %479, %480 : vector<2x32xf32>
    %482 = arith.mulf %473, %422 : vector<2x32xf32>
    %483 = arith.mulf %467, %475 : vector<2x32xf32>
    %484 = arith.addf %482, %483 : vector<2x32xf32>
    %485 = math.tanh %484 : vector<2x32xf32>
    %486 = arith.mulf %481, %485 : vector<2x32xf32>
    %487 = tpu.concatenate %486, %452 in 1 : vector<2x32xf32>, vector<2x32xf32> -> vector<2x64xf32>
    %cst_114 = arith.constant dense<0.000000e+00> : vector<2x128xf32>
    %488 = tpu.matmul %487, %11, %cst_114 {dimension_numbers = #tpu.dot_dimension_numbers<[1], [0], [0], [1], [0, 0, 1, 1], [], []>} : vector<2x64xf32>, vector<64x128xf32>, vector<2x128xf32> -> vector<2x128xf32>
    %489 = arith.addf %488, %14 : vector<2x128xf32>
    %490 = vector.extract_strided_slice %489 {offsets = [0, 0], sizes = [2, 32], strides = [1, 1]} : vector<2x128xf32> to vector<2x32xf32>
    %491 = arith.negf %490 : vector<2x32xf32>
    %492 = math.exp %491 : vector<2x32xf32>
    %cst_115 = arith.constant 1.000000e+00 : f32
    %493 = vector.broadcast %cst_115 : f32 to vector<2x32xf32>
    %494 = arith.addf %493, %492 : vector<2x32xf32>
    %495 = arith.divf %493, %494 : vector<2x32xf32>
    %496 = vector.extract_strided_slice %489 {offsets = [0, 32], sizes = [2, 32], strides = [1, 1]} : vector<2x128xf32> to vector<2x32xf32>
    %497 = arith.negf %496 : vector<2x32xf32>
    %498 = math.exp %497 : vector<2x32xf32>
    %cst_116 = arith.constant 1.000000e+00 : f32
    %499 = vector.broadcast %cst_116 : f32 to vector<2x32xf32>
    %500 = arith.addf %499, %498 : vector<2x32xf32>
    %501 = arith.divf %499, %500 : vector<2x32xf32>
    %502 = vector.extract_strided_slice %489 {offsets = [0, 64], sizes = [2, 32], strides = [1, 1]} : vector<2x128xf32> to vector<2x32xf32>
    %503 = math.tanh %502 : vector<2x32xf32>
    %504 = vector.extract_strided_slice %489 {offsets = [0, 96], sizes = [2, 32], strides = [1, 1]} : vector<2x128xf32> to vector<2x32xf32>
    %505 = arith.negf %504 : vector<2x32xf32>
    %506 = math.exp %505 : vector<2x32xf32>
    %cst_117 = arith.constant 1.000000e+00 : f32
    %507 = vector.broadcast %cst_117 : f32 to vector<2x32xf32>
    %508 = arith.addf %507, %506 : vector<2x32xf32>
    %509 = arith.divf %507, %508 : vector<2x32xf32>
    %510 = arith.mulf %501, %450 : vector<2x32xf32>
    %511 = arith.mulf %495, %503 : vector<2x32xf32>
    %512 = arith.addf %510, %511 : vector<2x32xf32>
    %513 = math.tanh %512 : vector<2x32xf32>
    %514 = arith.mulf %509, %513 : vector<2x32xf32>
    %515 = arith.index_cast %c7_i32 : i32 to index
    %c0_118 = arith.constant 0 : index
    %c0_119 = arith.constant 0 : index
    %516 = vector.load %arg12[%515, %c0_118, %c0_119] : memref<8x2x32xf32, #tpu.memory_space<vmem>>, vector<1x2x32xf32>
    %517 = vector.shape_cast %516 : vector<1x2x32xf32> to vector<2x32xf32>
    %518 = vector.shape_cast %514 : vector<2x32xf32> to vector<1x2x32xf32>
    tpu.vector_store %arg12[%515, %c0_118, %c0_119], %518 {strides = array<i32>} : memref<8x2x32xf32, #tpu.memory_space<vmem>>, vector<1x2x32xf32>,
    %c8_i32 = arith.constant 8 : i32
    %c0_120 = arith.constant 0 : index
    %c0_121 = arith.constant 0 : index
    %c0_122 = arith.constant 0 : index
    %519 = vector.load %arg10[%c0_120, %c0_121, %c0_122] : memref<4x2x32xf32, #tpu.memory_space<vmem>>, vector<1x2x32xf32>
    %520 = vector.shape_cast %519 : vector<1x2x32xf32> to vector<2x32xf32>
    %521 = vector.shape_cast %486 : vector<2x32xf32> to vector<1x2x32xf32>
    tpu.vector_store %arg10[%c0_120, %c0_121, %c0_122], %521 {strides = array<i32>} : memref<4x2x32xf32, #tpu.memory_space<vmem>>, vector<1x2x32xf32>,
    %c1_123 = arith.constant 1 : index
    %c0_124 = arith.constant 0 : index
    %c0_125 = arith.constant 0 : index
    %522 = vector.load %arg10[%c1_123, %c0_124, %c0_125] : memref<4x2x32xf32, #tpu.memory_space<vmem>>, vector<1x2x32xf32>
    %523 = vector.shape_cast %522 : vector<1x2x32xf32> to vector<2x32xf32>
    %524 = vector.shape_cast %484 : vector<2x32xf32> to vector<1x2x32xf32>
    tpu.vector_store %arg10[%c1_123, %c0_124, %c0_125], %524 {strides = array<i32>} : memref<4x2x32xf32, #tpu.memory_space<vmem>>, vector<1x2x32xf32>,
    %c2_126 = arith.constant 2 : index
    %c0_127 = arith.constant 0 : index
    %c0_128 = arith.constant 0 : index
    %525 = vector.load %arg10[%c2_126, %c0_127, %c0_128] : memref<4x2x32xf32, #tpu.memory_space<vmem>>, vector<1x2x32xf32>
    %526 = vector.shape_cast %525 : vector<1x2x32xf32> to vector<2x32xf32>
    %527 = vector.shape_cast %514 : vector<2x32xf32> to vector<1x2x32xf32>
    tpu.vector_store %arg10[%c2_126, %c0_127, %c0_128], %527 {strides = array<i32>} : memref<4x2x32xf32, #tpu.memory_space<vmem>>, vector<1x2x32xf32>,
    %c3_129 = arith.constant 3 : index
    %c0_130 = arith.constant 0 : index
    %c0_131 = arith.constant 0 : index
    %528 = vector.load %arg10[%c3_129, %c0_130, %c0_131] : memref<4x2x32xf32, #tpu.memory_space<vmem>>, vector<1x2x32xf32>
    %529 = vector.shape_cast %528 : vector<1x2x32xf32> to vector<2x32xf32>
    %530 = vector.shape_cast %512 : vector<2x32xf32> to vector<1x2x32xf32>
    tpu.vector_store %arg10[%c3_129, %c0_130, %c0_131], %530 {strides = array<i32>} : memref<4x2x32xf32, #tpu.memory_space<vmem>>, vector<1x2x32xf32>,
    %c0_132 = arith.constant 0 : index
    %c0_133 = arith.constant 0 : index
    %c0_134 = arith.constant 0 : index
    %531 = vector.load %arg12[%c0_132, %c0_133, %c0_134] : memref<8x2x32xf32, #tpu.memory_space<vmem>>, vector<8x2x32xf32>
    %532 = tpu.transpose %531, [1, 0, 2] : vector<8x2x32xf32> -> vector<2x8x32xf32>
    %c0_135 = arith.constant 0 : index
    %c0_136 = arith.constant 0 : index
    %c0_137 = arith.constant 0 : index
    %533 = vector.load %arg7[%c0_135, %c0_136, %c0_137] : memref<2x8x32xf32, #tpu.memory_space<vmem>>, vector<2x8x32xf32>
    tpu.vector_store %arg7[%c0_135, %c0_136, %c0_137], %532 {strides = array<i32>} : memref<2x8x32xf32, #tpu.memory_space<vmem>>, vector<2x8x32xf32>,
    %c1_i32_138 = arith.constant 1 : i32
    %534 = arith.cmpi eq, %arg0, %c1_i32_138 : i32
    %535 = arith.extui %534 : i1 to i32
    %c0_i32_139 = arith.constant 0 : i32
    %536 = arith.cmpi ne, %535, %c0_i32_139 : i32
    scf.if %536 {
      %c0_140 = arith.constant 0 : index
      %c0_141 = arith.constant 0 : index
      %c0_142 = arith.constant 0 : index
      %537 = vector.load %arg8[%c0_140, %c0_141, %c0_142] : memref<2x2x32xf32, #tpu.memory_space<vmem>>, vector<1x2x32xf32>
      %538 = vector.shape_cast %537 : vector<1x2x32xf32> to vector<2x32xf32>
      %539 = vector.shape_cast %486 : vector<2x32xf32> to vector<1x2x32xf32>
      tpu.vector_store %arg8[%c0_140, %c0_141, %c0_142], %539 {strides = array<i32>} : memref<2x2x32xf32, #tpu.memory_space<vmem>>, vector<1x2x32xf32>,
      %c1_143 = arith.constant 1 : index
      %c0_144 = arith.constant 0 : index
      %c0_145 = arith.constant 0 : index
      %540 = vector.load %arg8[%c1_143, %c0_144, %c0_145] : memref<2x2x32xf32, #tpu.memory_space<vmem>>, vector<1x2x32xf32>
      %541 = vector.shape_cast %540 : vector<1x2x32xf32> to vector<2x32xf32>
      %542 = vector.shape_cast %514 : vector<2x32xf32> to vector<1x2x32xf32>
      tpu.vector_store %arg8[%c1_143, %c0_144, %c0_145], %542 {strides = array<i32>} : memref<2x2x32xf32, #tpu.memory_space<vmem>>, vector<1x2x32xf32>,
      %c0_146 = arith.constant 0 : index
      %c0_147 = arith.constant 0 : index
      %c0_148 = arith.constant 0 : index
      %543 = vector.load %arg9[%c0_146, %c0_147, %c0_148] : memref<2x2x32xf32, #tpu.memory_space<vmem>>, vector<1x2x32xf32>
      %544 = vector.shape_cast %543 : vector<1x2x32xf32> to vector<2x32xf32>
      %545 = vector.shape_cast %484 : vector<2x32xf32> to vector<1x2x32xf32>
      tpu.vector_store %arg9[%c0_146, %c0_147, %c0_148], %545 {strides = array<i32>} : memref<2x2x32xf32, #tpu.memory_space<vmem>>, vector<1x2x32xf32>,
      %c1_149 = arith.constant 1 : index
      %c0_150 = arith.constant 0 : index
      %c0_151 = arith.constant 0 : index
      %546 = vector.load %arg9[%c1_149, %c0_150, %c0_151] : memref<2x2x32xf32, #tpu.memory_space<vmem>>, vector<1x2x32xf32>
      %547 = vector.shape_cast %546 : vector<1x2x32xf32> to vector<2x32xf32>
      %548 = vector.shape_cast %512 : vector<2x32xf32> to vector<1x2x32xf32>
      tpu.vector_store %arg9[%c1_149, %c0_150, %c0_151], %548 {strides = array<i32>} : memref<2x2x32xf32, #tpu.memory_space<vmem>>, vector<1x2x32xf32>,
    } else {
    }
    return
  }
  func.func @transform_0(%arg0: i32) -> (i32, i32) {
    %c0_i32 = arith.constant 0 : i32
    %c0_i32_0 = arith.constant 0 : i32
    return %arg0, %c0_i32 : i32, i32
  }
  func.func @transform_1(%arg0: i32) -> (i32, i32) {
    %c0_i32 = arith.constant 0 : i32
    %c0_i32_0 = arith.constant 0 : i32
    %c0_i32_1 = arith.constant 0 : i32
    return %c0_i32, %c0_i32_0 : i32, i32
  }
  func.func @transform_2(%arg0: i32) -> (i32, i32) {
    %c0_i32 = arith.constant 0 : i32
    %c0_i32_0 = arith.constant 0 : i32
    %c0_i32_1 = arith.constant 0 : i32
    return %c0_i32, %c0_i32_0 : i32, i32
  }
  func.func @transform_3(%arg0: i32) -> (i32, i32) {
    %c0_i32 = arith.constant 0 : i32
    %c0_i32_0 = arith.constant 0 : i32
    %c0_i32_1 = arith.constant 0 : i32
    return %c0_i32, %c0_i32_0 : i32, i32
  }
  func.func @transform_4(%arg0: i32) -> (i32, i32) {
    %c0_i32 = arith.constant 0 : i32
    %c0_i32_0 = arith.constant 0 : i32
    %c0_i32_1 = arith.constant 0 : i32
    return %c0_i32, %c0_i32_0 : i32, i32
  }
  func.func @transform_5(%arg0: i32) -> (i32, i32) {
    %c0_i32 = arith.constant 0 : i32
    %c0_i32_0 = arith.constant 0 : i32
    %c0_i32_1 = arith.constant 0 : i32
    return %c0_i32, %c0_i32_0 : i32, i32
  }
  func.func @transform_6(%arg0: i32) -> (i32, i32, i32) {
    %c0_i32 = arith.constant 0 : i32
    %c0_i32_0 = arith.constant 0 : i32
    %c0_i32_1 = arith.constant 0 : i32
    return %c0_i32, %arg0, %c0_i32_0 : i32, i32, i32
  }
  func.func @transform_7(%arg0: i32) -> (i32, i32, i32) {
    %c0_i32 = arith.constant 0 : i32
    %c0_i32_0 = arith.constant 0 : i32
    %c0_i32_1 = arith.constant 0 : i32
    %c0_i32_2 = arith.constant 0 : i32
    return %c0_i32, %c0_i32_0, %c0_i32_1 : i32, i32, i32
  }
  func.func @transform_8(%arg0: i32) -> (i32, i32, i32) {
    %c0_i32 = arith.constant 0 : i32
    %c0_i32_0 = arith.constant 0 : i32
    %c0_i32_1 = arith.constant 0 : i32
    %c0_i32_2 = arith.constant 0 : i32
    return %c0_i32, %c0_i32_0, %c0_i32_1 : i32, i32, i32
  }
}

</mosaic_0001>

<llo_original>
// kernel: tpu_custom_call.1
$region0: #{tpu_custom_call.1}
  #allocation0 [shape = 'u32[]', space=smem, size = 0x4, offset = 0x4, fixed_abs, tag = 'smem constant byte address 0x4 - core index']
  #allocation1 [shape = 'u32[144,128]{1,0:T(1,128)}', space=vmem, size = 0x12000, scoped, tag = 'internal scratch']
  #allocation2 [shape = 'f32[4,2,32]{2,1,0:T(2,128)}', space=vmem, size = 0x1000, scoped, tag = 'scratch operand']
  #allocation3 [shape = 'f32[16,128]{1,0:T(8,128)}', space=vmem, size = 0x2000, scoped, tag = 'scratch operand']
  #allocation4 [shape = 'f32[8,2,32]{2,1,0:T(2,128)}', space=vmem, size = 0x2000, scoped, tag = 'scratch operand']
  %s0 = inlined_call_operand.hbm [shape: f32[32,32], index: 0, kind: input, shape index: {}]
  %s1 = inlined_call_operand.hbm [shape: f32[32,128], index: 1, kind: input, shape index: {}]
  %s2 = inlined_call_operand.hbm [shape: f32[32,128], index: 2, kind: input, shape index: {}]
  %s3 = inlined_call_operand.hbm [shape: f32[1,128], index: 3, kind: input, shape index: {}]
  %s4 = inlined_call_operand.hbm [shape: f32[64,128], index: 4, kind: input, shape index: {}]
  %s5 = inlined_call_operand.hbm [shape: f32[1,128], index: 5, kind: input, shape index: {}]
  %s6 = inlined_call_operand.hbm [shape: f32[2,16,32], index: 6, kind: output, shape index: {0}]
  %s7 = inlined_call_operand.hbm [shape: f32[2,2,32], index: 7, kind: output, shape index: {1}]
  %s8 = inlined_call_operand.hbm [shape: f32[2,2,32], index: 8, kind: output, shape index: {2}]
  %9 = xla_tuple %s6, %s7, %s8
  %s10 = sld [smem:[#allocation0]]
  $region105: #{tpu_custom_call.1} parent=0
    _
  %s12 = ssub.s32 1, %s10
  %s13 = scalar_select 0, %s12, %s10
  $region1: #{tpu_custom_call.1} parent=0
    #allocation5 [shape = 'u8[16384]{0}', space=vmem, size = 0x4000, scoped, tag = 'input window, operand 0']
    #allocation6 [shape = 's32[2]{0}', space=sflag, size = 0x8, scoped, tag = 'scoped memory for tpu_custom_call.1']
    #allocation7 [shape = 's32[2]{0}', space=sflag, size = 0x8, scoped, tag = 'scoped memory for tpu_custom_call.1']
    #allocation8 [shape = 'u8[16384]{0}', space=vmem, size = 0x4000, scoped, tag = 'input window, operand 1, single buffered']
    #allocation9 [shape = 's32[1]{0}', space=sflag, size = 0x4, scoped, tag = 'scoped memory for tpu_custom_call.1']
    #allocation10 [shape = 'u8[16384]{0}', space=vmem, size = 0x4000, scoped, tag = 'input window, operand 2, single buffered']
    #allocation11 [shape = 'u8[512]{0}', space=vmem, size = 0x400, scoped, tag = 'input window, operand 3, single buffered']
    #allocation12 [shape = 's32[1]{0}', space=sflag, size = 0x4, scoped, tag = 'scoped memory for tpu_custom_call.1']
    #allocation13 [shape = 'u8[32768]{0}', space=vmem, size = 0x8000, scoped, tag = 'input window, operand 4, single buffered']
    #allocation14 [shape = 'u8[512]{0}', space=vmem, size = 0x400, scoped, tag = 'input window, operand 5, single buffered']
    #allocation15 [shape = 's32[1]{0}', space=sflag, size = 0x4, scoped, tag = 'scoped memory for tpu_custom_call.1']
    #allocation16 [shape = 'u8[16384]{0}', space=vmem, size = 0x4000, scoped, tag = 'output window, operand 0']
    #allocation17 [shape = 'u8[2048]{0}', space=vmem, size = 0x800, scoped, tag = 'output window, operand 1, single buffered']
    #allocation18 [shape = 's32[1]{0}', space=sflag, size = 0x4, scoped, tag = 'scoped memory for tpu_custom_call.1']
    #allocation19 [shape = 'u8[2048]{0}', space=vmem, size = 0x800, scoped, tag = 'output window, operand 2, single buffered']
    %14 = vsyncpa [#allocation6], 0
    %s15 = scalar_lea.sflag [#allocation6], 1
    %16 = vsyncpa %s15, 0
    %17 = vsyncpa [#allocation9], 0
    %18 = vsyncpa [#allocation12], 0
    %19 = vsyncpa [#allocation15], 0
    %20 = vsyncpa [#allocation7], 0
    %s21 = scalar_lea.sflag [#allocation7], 1
    %22 = vsyncpa %s21, 0
    %23 = vsyncpa [#allocation18], 0
    loop: start=0, step=1, limit=4
    $region2: #{tpu_custom_call.1} parent=1 // loop_pre_header
      _
    $region3: #{tpu_custom_call.1} parent=1 // loop_header
      %s25 = sphi 0, %s29
      %p26 = scmp.ge.s32.totalorder %s25, 4
      %s35 = sphi 0, %s37
      %s38 = sphi 0, %s35
      %s39 = sphi 0, %s38
      %s55 = sphi 0, %s39
      %s59 = sphi 0, %s59
      %s61 = sphi 0, %s59
      %s62 = sphi 0, %s61
      %s76 = sphi 0, %s62
      %s80 = sphi 0, %s80
      %s82 = sphi 0, %s80
      %s83 = sphi 0, %s82
      %s97 = sphi 0, %s83
      %s101 = sphi 0, %s101
      %s103 = sphi 0, %s101
      %s104 = sphi 0, %s103
      %s118 = sphi 0, %s104
      %s122 = sphi 0, %s122
      %s124 = sphi 0, %s122
      %s125 = sphi 0, %s124
      %s139 = sphi 0, %s125
      %s143 = sphi 0, %s143
      %s145 = sphi 0, %s143
      %s146 = sphi 0, %s145
      %s160 = sphi 0, %s146
      %s166 = sphi 0, %s168
      %s169 = sphi 0, %s166
      %s170 = sphi 0, %s169
      %s186 = sphi 0, %s170
      %s190 = sphi 0, %s190
      %s192 = sphi 0, %s190
      %s193 = sphi 0, %s192
      %s207 = sphi 0, %s193
      %s211 = sphi 0, %s211
      %s213 = sphi 0, %s211
      %s214 = sphi 0, %s213
      %s228 = sphi 0, %s214
    $region4: #{tpu_custom_call.1} parent=1 // loop_header_branch
      %28 = sbr.rel (%p26) target = $region8
    $region5: #{tpu_custom_call.1} parent=1 // loop_body
      %s30 = ssub.s32 %s25, 1
      %s31 = ssub.s32 %s25, 2
      %s32 = sadd.s32 %s25, 1
      %s33 = ssub.s32 %s25, %s32
      %p34 = scmp.eq.s32.totalorder %s33, 0
      %s36 = sadd.s32 %s35, 1
      %s37 = scalar_select %p34, %s35, %s36
      %p40 = pneg %p34
      %p41 = scmp.eq.s32.totalorder %s25, 1
      %p42 = por %p40, %p41
      %p43 = scmp.ne.s32.totalorder %s35, %s38
      %p44 = scmp.eq.s32.totalorder %s25, 0
      %p45 = por %p43, %p44
      %p46 = scmp.ne.s32.totalorder %s35, %s38
      %p47 = scmp.eq.s32.totalorder %s30, 1
      %p48 = por %p46, %p47
      %p49 = scmp.ne.s32.totalorder %s38, %s39
      %p50 = scmp.eq.s32.totalorder %s30, 0
      %p51 = por %p49, %p50
      %p52 = scmp.ne.s32.totalorder %s38, %s39
      %p53 = scmp.eq.s32.totalorder %s31, 1
      %p54 = por %p52, %p53
      %p56 = scmp.ne.s32.totalorder %s39, %s55
      %p57 = scmp.eq.s32.totalorder %s31, 0
      %p58 = por %p56, %p57
      %s60 = sadd.s32 %s59, 1
      %p63 = scmp.eq.s32.totalorder %s25, 1
      %p64 = scmp.ne.s32.totalorder %s59, %s61
      %p65 = scmp.eq.s32.totalorder %s25, 0
      %p66 = por %p64, %p65
      %p67 = scmp.ne.s32.totalorder %s59, %s61
      %p68 = scmp.eq.s32.totalorder %s30, 1
      %p69 = por %p67, %p68
      %p70 = scmp.ne.s32.totalorder %s61, %s62
      %p71 = scmp.eq.s32.totalorder %s30, 0
      %p72 = por %p70, %p71
      %p73 = scmp.ne.s32.totalorder %s61, %s62
      %p74 = scmp.eq.s32.totalorder %s31, 1
      %p75 = por %p73, %p74
      %p77 = scmp.ne.s32.totalorder %s62, %s76
      %p78 = scmp.eq.s32.totalorder %s31, 0
      %p79 = por %p77, %p78
      %s81 = sadd.s32 %s80, 1
      %p84 = scmp.eq.s32.totalorder %s25, 1
      %p85 = scmp.ne.s32.totalorder %s80, %s82
      %p86 = scmp.eq.s32.totalorder %s25, 0
      %p87 = por %p85, %p86
      %p88 = scmp.ne.s32.totalorder %s80, %s82
      %p89 = scmp.eq.s32.totalorder %s30, 1
      %p90 = por %p88, %p89
      %p91 = scmp.ne.s32.totalorder %s82, %s83
      %p92 = scmp.eq.s32.totalorder %s30, 0
      %p93 = por %p91, %p92
      %p94 = scmp.ne.s32.totalorder %s82, %s83
      %p95 = scmp.eq.s32.totalorder %s31, 1
      %p96 = por %p94, %p95
      %p98 = scmp.ne.s32.totalorder %s83, %s97
      %p99 = scmp.eq.s32.totalorder %s31, 0
      %p100 = por %p98, %p99
      %s102 = sadd.s32 %s101, 1
      %p105 = scmp.eq.s32.totalorder %s25, 1
      %p106 = scmp.ne.s32.totalorder %s101, %s103
      %p107 = scmp.eq.s32.totalorder %s25, 0
      %p108 = por %p106, %p107
      %p109 = scmp.ne.s32.totalorder %s101, %s103
      %p110 = scmp.eq.s32.totalorder %s30, 1
      %p111 = por %p109, %p110
      %p112 = scmp.ne.s32.totalorder %s103, %s104
      %p113 = scmp.eq.s32.totalorder %s30, 0
      %p114 = por %p112, %p113
      %p115 = scmp.ne.s32.totalorder %s103, %s104
      %p116 = scmp.eq.s32.totalorder %s31, 1
      %p117 = por %p115, %p116
      %p119 = scmp.ne.s32.totalorder %s104, %s118
      %p120 = scmp.eq.s32.totalorder %s31, 0
      %p121 = por %p119, %p120
      %s123 = sadd.s32 %s122, 1
      %p126 = scmp.eq.s32.totalorder %s25, 1
      %p127 = scmp.ne.s32.totalorder %s122, %s124
      %p128 = scmp.eq.s32.totalorder %s25, 0
      %p129 = por %p127, %p128
      %p130 = scmp.ne.s32.totalorder %s122, %s124
      %p131 = scmp.eq.s32.totalorder %s30, 1
      %p132 = por %p130, %p131
      %p133 = scmp.ne.s32.totalorder %s124, %s125
      %p134 = scmp.eq.s32.totalorder %s30, 0
      %p135 = por %p133, %p134
      %p136 = scmp.ne.s32.totalorder %s124, %s125
      %p137 = scmp.eq.s32.totalorder %s31, 1
      %p138 = por %p136, %p137
      %p140 = scmp.ne.s32.totalorder %s125, %s139
      %p141 = scmp.eq.s32.totalorder %s31, 0
      %p142 = por %p140, %p141
      %s144 = sadd.s32 %s143, 1
      %p147 = scmp.eq.s32.totalorder %s25, 1
      %p148 = scmp.ne.s32.totalorder %s143, %s145
      %p149 = scmp.eq.s32.totalorder %s25, 0
      %p150 = por %p148, %p149
      %p151 = scmp.ne.s32.totalorder %s143, %s145
      %p152 = scmp.eq.s32.totalorder %s30, 1
      %p153 = por %p151, %p152
      %p154 = scmp.ne.s32.totalorder %s145, %s146
      %p155 = scmp.eq.s32.totalorder %s30, 0
      %p156 = por %p154, %p155
      %p157 = scmp.ne.s32.totalorder %s145, %s146
      %p158 = scmp.eq.s32.totalorder %s31, 1
      %p159 = por %p157, %p158
      %p161 = scmp.ne.s32.totalorder %s146, %s160
      %p162 = scmp.eq.s32.totalorder %s31, 0
      %p163 = por %p161, %p162
      %s164 = ssub.s32 %s25, %s32
      %p165 = scmp.eq.s32.totalorder %s164, 0
      %s167 = sadd.s32 %s166, 1
      %s168 = scalar_select %p165, %s166, %s167
      %p171 = pneg %p165
      %p172 = scmp.eq.s32.totalorder %s25, 1
      %p173 = por %p171, %p172
      %p174 = scmp.ne.s32.totalorder %s166, %s169
      %p175 = scmp.eq.s32.totalorder %s25, 0
      %p176 = por %p174, %p175
      %p177 = scmp.ne.s32.totalorder %s166, %s169
      %p178 = scmp.eq.s32.totalorder %s30, 1
      %p179 = por %p177, %p178
      %p180 = scmp.ne.s32.totalorder %s169, %s170
      %p181 = scmp.eq.s32.totalorder %s30, 0
      %p182 = por %p180, %p181
      %p183 = scmp.ne.s32.totalorder %s169, %s170
      %p184 = scmp.eq.s32.totalorder %s31, 1
      %p185 = por %p183, %p184
      %p187 = scmp.ne.s32.totalorder %s170, %s186
      %p188 = scmp.eq.s32.totalorder %s31, 0
      %p189 = por %p187, %p188
      %s191 = sadd.s32 %s190, 1
      %p194 = scmp.eq.s32.totalorder %s25, 1
      %p195 = scmp.ne.s32.totalorder %s190, %s192
      %p196 = scmp.eq.s32.totalorder %s25, 0
      %p197 = por %p195, %p196
      %p198 = scmp.ne.s32.totalorder %s190, %s192
      %p199 = scmp.eq.s32.totalorder %s30, 1
      %p200 = por %p198, %p199
      %p201 = scmp.ne.s32.totalorder %s192, %s193
      %p202 = scmp.eq.s32.totalorder %s30, 0
      %p203 = por %p201, %p202
      %p204 = scmp.ne.s32.totalorder %s192, %s193
      %p205 = scmp.eq.s32.totalorder %s31, 1
      %p206 = por %p204, %p205
      %p208 = scmp.ne.s32.totalorder %s193, %s207
      %p209 = scmp.eq.s32.totalorder %s31, 0
      %p210 = por %p208, %p209
      %s212 = sadd.s32 %s211, 1
      %p215 = scmp.eq.s32.totalorder %s25, 1
      %p216 = scmp.ne.s32.totalorder %s211, %s213
      %p217 = scmp.eq.s32.totalorder %s25, 0
      %p218 = por %p216, %p217
      %p219 = scmp.ne.s32.totalorder %s211, %s213
      %p220 = scmp.eq.s32.totalorder %s30, 1
      %p221 = por %p219, %p220
      %p222 = scmp.ne.s32.totalorder %s213, %s214
      %p223 = scmp.eq.s32.totalorder %s30, 0
      %p224 = por %p222, %p223
      %p225 = scmp.ne.s32.totalorder %s213, %s214
      %p226 = scmp.eq.s32.totalorder %s31, 1
      %p227 = por %p225, %p226
      %p229 = scmp.ne.s32.totalorder %s214, %s228
      %p230 = scmp.eq.s32.totalorder %s31, 0
      %p231 = por %p229, %p230
      %p232 = scmp.le.s32.totalorder 1, %s25
      %p233 = scmp.lt.s32.totalorder %s25, 3
      %p234 = pnand %p232, %p233
      %p235 = pneg %p234
      // Predicated region
      $region9: #{tpu_custom_call.1} parent=5 // pred_check
        _
      $region10: #{tpu_custom_call.1} parent=5 // pred_check_branch
        %237 = sbr.rel (%p234) target = $region12
      $region11: #{tpu_custom_call.1} parent=5 // pred_region
        %s238 = ssub.s32 %s25, 1
        // Predicated region
        $region13: #{tpu_custom_call.1} parent=11 // pred_check
          %p239 = pneg %p72
        $region14: #{tpu_custom_call.1} parent=11 // pred_check_branch
          %241 = sbr.rel (%p239) target = $region16
        $region15: #{tpu_custom_call.1} parent=11 // pred_region
          %s243 = ssub.s32 512, 512
          %244 = vsyncadd [#allocation9], %s243
          %s245 = sshll.u32 [#allocation8], 4
          %s246 = int_to_ptr.vmem [resolvable:$true] %s245
          %251 = dma.hbm_to_vmem [thread:$0]  %s1, 512, %s246, [#allocation9], 128, 128, 8
        $region16: #{tpu_custom_call.1} parent=11 // pred_fallthru
          _
        // Predicated region
        $region17: #{tpu_custom_call.1} parent=11 // pred_check
          %p252 = pneg %p93
        $region18: #{tpu_custom_call.1} parent=11 // pred_check_branch
          %254 = sbr.rel (%p252) target = $region20
        $region19: #{tpu_custom_call.1} parent=11 // pred_region
          %s256 = ssub.s32 512, 512
          %257 = vsyncadd [#allocation9], %s256
          %s258 = sshll.u32 [#allocation10], 4
          %s259 = int_to_ptr.vmem [resolvable:$true] %s258
          %264 = dma.hbm_to_vmem [thread:$0]  %s2, 512, %s259, [#allocation9], 128, 128, 8
        $region20: #{tpu_custom_call.1} parent=11 // pred_fallthru
          _
        // Predicated region
        $region21: #{tpu_custom_call.1} parent=11 // pred_check
          %p265 = pneg %p114
        $region22: #{tpu_custom_call.1} parent=11 // pred_check_branch
          %267 = sbr.rel (%p265) target = $region24
        $region23: #{tpu_custom_call.1} parent=11 // pred_region
          %s269 = ssub.s32 16, 16
          %270 = vsyncadd [#allocation12], %s269
          %s272 = sshll.u32 [#allocation11], 4
          %s273 = int_to_ptr.vmem [resolvable:$true] %s272
          %275 = dma.hbm_to_vmem [thread:$0]  %s3, 16, %s273, [#allocation12]
        $region24: #{tpu_custom_call.1} parent=11 // pred_fallthru
          _
        // Predicated region
        $region25: #{tpu_custom_call.1} parent=11 // pred_check
          %p276 = pneg %p135
        $region26: #{tpu_custom_call.1} parent=11 // pred_check_branch
          %278 = sbr.rel (%p276) target = $region28
        $region27: #{tpu_custom_call.1} parent=11 // pred_region
          %s280 = ssub.s32 1024, 1024
          %281 = vsyncadd [#allocation12], %s280
          %s282 = sshll.u32 [#allocation13], 4
          %s283 = int_to_ptr.vmem [resolvable:$true] %s282
          %288 = dma.hbm_to_vmem [thread:$0]  %s4, 1024, %s283, [#allocation12], 128, 128, 8
        $region28: #{tpu_custom_call.1} parent=11 // pred_fallthru
          _
        // Predicated region
        $region29: #{tpu_custom_call.1} parent=11 // pred_check
          %p289 = pneg %p156
        $region30: #{tpu_custom_call.1} parent=11 // pred_check_branch
          %291 = sbr.rel (%p289) target = $region32
        $region31: #{tpu_custom_call.1} parent=11 // pred_region
          %s293 = ssub.s32 16, 16
          %294 = vsyncadd [#allocation15], %s293
          %s296 = sshll.u32 [#allocation14], 4
          %s297 = int_to_ptr.vmem [resolvable:$true] %s296
          %299 = dma.hbm_to_vmem [thread:$0]  %s5, 16, %s297, [#allocation15]
        $region32: #{tpu_custom_call.1} parent=11 // pred_fallthru
          _
      $region12: #{tpu_custom_call.1} parent=5 // pred_fallthru
        _
      %p300 = scmp.lt.s32.totalorder %s25, 2
      // Predicated region
      $region33: #{tpu_custom_call.1} parent=5 // pred_check
        %p301 = pneg %p300
      $region34: #{tpu_custom_call.1} parent=5 // pred_check_branch
        %303 = sbr.rel (%p301) target = $region36
      $region35: #{tpu_custom_call.1} parent=5 // pred_region
        // Predicated region
        $region37: #{tpu_custom_call.1} parent=35 // pred_check
          %p304 = pneg %p45
        $region38: #{tpu_custom_call.1} parent=35 // pred_check_branch
          %306 = sbr.rel (%p304) target = $region40
        $region39: #{tpu_custom_call.1} parent=35 // pred_region
          %s307 = sand.u32 %s35, 1
          %s308 = scalar_lea.sflag [#allocation6], %s307
          %s309 = sand.u32 %s35, 1
          %s310 = smul.addr %s309, 16
          %s311 = scalar_lea.vmem [#allocation5], %s310
          %s312 = smul.u32 2, %s25
          %s314 = ssub.s32 256, 256
          %315 = vsyncadd %s308, %s314
          %s316 = smul.addr %s312, 128
          %s317 = scalar_lea.hbm %s0, %s316
          %s318 = sshll.u32 %s311, 4
          %s319 = int_to_ptr.vmem [resolvable:$true] %s318
          %324 = dma.hbm_to_vmem [thread:$0]  %s317, 256, %s319, %s308, 128, 128, 8
        $region40: #{tpu_custom_call.1} parent=35 // pred_fallthru
          _
      $region36: #{tpu_custom_call.1} parent=5 // pred_fallthru
        _
      %p325 = scmp.le.s32.totalorder 1, %s25
      %p326 = scmp.lt.s32.totalorder %s25, 3
      %p327 = pnand %p325, %p326
      %p328 = pneg %p327
      // Predicated region
      $region41: #{tpu_custom_call.1} parent=5 // pred_check
        _
      $region42: #{tpu_custom_call.1} parent=5 // pred_check_branch
        %330 = sbr.rel (%p327) target = $region44
      $region43: #{tpu_custom_call.1} parent=5 // pred_region
        %s331 = ssub.s32 %s25, 1
        %s332 = sand.u32 %s38, 1
        %s333 = scalar_lea.sflag [#allocation6], %s332
        %s334 = sand.u32 %s38, 1
        %s335 = smul.addr %s334, 16
        %s336 = scalar_lea.vmem [#allocation5], %s335
        // Predicated region
        $region45: #{tpu_custom_call.1} parent=43 // pred_check
          %p337 = pneg %p51
        $region46: #{tpu_custom_call.1} parent=43 // pred_check_branch
          %339 = sbr.rel (%p337) target = $region48
        $region47: #{tpu_custom_call.1} parent=43 // pred_region
          %340 = dma.done %s333, 256
        $region48: #{tpu_custom_call.1} parent=43 // pred_fallthru
          _
        // Predicated region
        $region49: #{tpu_custom_call.1} parent=43 // pred_check
          %p341 = pneg %p72
        $region50: #{tpu_custom_call.1} parent=43 // pred_check_branch
          %343 = sbr.rel (%p341) target = $region52
        $region51: #{tpu_custom_call.1} parent=43 // pred_region
          %344 = dma.done [#allocation9], 512
        $region52: #{tpu_custom_call.1} parent=43 // pred_fallthru
          _
        // Predicated region
        $region53: #{tpu_custom_call.1} parent=43 // pred_check
          %p345 = pneg %p93
        $region54: #{tpu_custom_call.1} parent=43 // pred_check_branch
          %347 = sbr.rel (%p345) target = $region56
        $region55: #{tpu_custom_call.1} parent=43 // pred_region
          %348 = dma.done [#allocation9], 512
        $region56: #{tpu_custom_call.1} parent=43 // pred_fallthru
          _
        // Predicated region
        $region57: #{tpu_custom_call.1} parent=43 // pred_check
          %p349 = pneg %p114
        $region58: #{tpu_custom_call.1} parent=43 // pred_check_branch
          %351 = sbr.rel (%p349) target = $region60
        $region59: #{tpu_custom_call.1} parent=43 // pred_region
          %352 = dma.done [#allocation12], 16
        $region60: #{tpu_custom_call.1} parent=43 // pred_fallthru
          _
        // Predicated region
        $region61: #{tpu_custom_call.1} parent=43 // pred_check
          %p353 = pneg %p135
        $region62: #{tpu_custom_call.1} parent=43 // pred_check_branch
          %355 = sbr.rel (%p353) target = $region64
        $region63: #{tpu_custom_call.1} parent=43 // pred_region
          %356 = dma.done [#allocation12], 1024
        $region64: #{tpu_custom_call.1} parent=43 // pred_fallthru
          _
        // Predicated region
        $region65: #{tpu_custom_call.1} parent=43 // pred_check
          %p357 = pneg %p156
        $region66: #{tpu_custom_call.1} parent=43 // pred_check_branch
          %359 = sbr.rel (%p357) target = $region68
        $region67: #{tpu_custom_call.1} parent=43 // pred_region
          %360 = dma.done [#allocation15], 16
        $region68: #{tpu_custom_call.1} parent=43 // pred_fallthru
          _
        %s361 = sand.u32 %s38, 1
        %s362 = scalar_lea.sflag [#allocation6], %s361
        %s363 = sand.u32 %s38, 1
        %s364 = smul.addr %s363, 16
        %s365 = scalar_lea.vmem [#allocation5], %s364
        %p366 = pneg %p51
        %p367 = pneg %p48
        %p368 = pneg %p72
        %p369 = pneg %p69
        %p370 = pneg %p93
        %p371 = pneg %p90
        %p372 = pneg %p114
        %p373 = pneg %p111
        %p374 = pneg %p135
        %p375 = pneg %p132
        %p376 = pneg %p156
        %p377 = pneg %p153
        %p378 = pneg %p182
        %p379 = pneg %p179
        %s380 = sand.u32 %s169, 1
        %s381 = scalar_lea.sflag [#allocation7], %s380
        %s382 = sand.u32 %s169, 1
        %s383 = smul.addr %s382, 16
        %s384 = scalar_lea.vmem [#allocation16], %s383
        %p385 = pneg %p203
        %p386 = pneg %p200
        %p387 = pneg %p224
        %p388 = pneg %p221
        %s389 = smul.u32 2, %s30
        %p390 = scmp.eq.s32.totalorder %s30, 0
        // Predicated region
        $region69: #{tpu_custom_call.1} parent=43 // pred_check
          %p391 = pneg %p390
        $region70: #{tpu_custom_call.1} parent=43 // pred_check_branch
          %393 = sbr.rel (%p391) target = $region72
        $region71: #{tpu_custom_call.1} parent=43 // pred_region
          %vm394 = vcmask 254976
          %395 = vst.msk [vmem:[#allocation2] sm:$0x3] %vm394, 0.0
          %396 = vst.msk [vmem:[#allocation2 + $0x2] sm:$0x3] %vm394, 0.0
          %397 = vst.msk [vmem:[#allocation2 + $0x4] sm:$0x3] %vm394, 0.0
          %398 = vst.msk [vmem:[#allocation2 + $0x6] sm:$0x3] %vm394, 0.0
        $region72: #{tpu_custom_call.1} parent=43 // pred_fallthru
          _
        %v399 = vld [vmem:[%s336] sm:$0xff]
        %v400 = vld [vmem:[%s336 + $0x8] sm:$0xff]
        %v401 = vld [vmem:[#allocation8] sm:$0xff]
        %v402 = vld [vmem:[#allocation8 + $0x8] sm:$0xff]
        %v403 = vld [vmem:[#allocation8 + $0x10] sm:$0xff]
        %v404 = vld [vmem:[#allocation8 + $0x18] sm:$0xff]
        %v405 = vld [vmem:[#allocation11] sm:$0x1]
        %v407 = vlaneseq
        %v408 = vshrl.u32 %v407, 7
        %v409 = vsub.s32 0, %v408
        %v410 = vrot.slane %v405, %v409
        %vm412 = vcmask 261120
        %v414 = vsel %vm412, %v399, 0
        %v417 = vsel %vm412, %v400, 0
        %419 = vmatprep.subr.mxu0 0.0
        %420 = vmatpush1.msra.mxu0 %v401
        %421 = vmatprep.subr.mxu0 0.0
        %422 = vmatpush1.msra.mxu0 %v402
        %423 = vmatprep.subr.mxu0 0.0
        %424 = vmatpush1.msra.mxu0 %v403
        %425 = vmatprep.subr.mxu0 0.0
        %426 = vmatpush1.msra.mxu0 %v404
        %427 = vmatprep.subr.mxu0 0.0
        %428 = vmatpush1.msra.mxu0 0.0
        %429 = vmatprep.subr.mxu0 0.0
        %430 = vmatpush1.msra.mxu0 0.0
        %431 = vmatprep.subr.mxu0 0.0
        %432 = vmatpush1.msra.mxu0 0.0
        %433 = vmatprep.subr.mxu0 0.0
        %434 = vmatpush1.msra.mxu0 0.0
        %435 = vmatprep.subr.mxu0 0.0
        %436 = vmatpush1.msra.mxu0 0.0
        %437 = vmatprep.subr.mxu0 0.0
        %438 = vmatpush1.msra.mxu0 0.0
        %439 = vmatprep.subr.mxu0 0.0
        %440 = vmatpush1.msra.mxu0 0.0
        %441 = vmatprep.subr.mxu0 0.0
        %442 = vmatpush1.msra.mxu0 0.0
        %443 = vmatprep.subr.mxu0 0.0
        %444 = vmatpush1.msra.mxu0 0.0
        %445 = vmatprep.subr.mxu0 0.0
        %446 = vmatpush1.msra.mxu0 0.0
        %447 = vmatprep.subr.mxu0 0.0
        %448 = vmatpush1.msra.mxu0 0.0
        %449 = vmatprep.subr.mxu0 0.0
        %450 = vmatpush1.msra.mxu0 0.0
        %451 = vmatprep.subr.mxu0 0.0
        %452 = vmatpush1.msra.mxu0 0.0
        %453 = vmatprep.subr.mxu0 0.0
        %454 = vmatpush1.msra.mxu0 0.0
        %455 = vmatprep.subr.mxu0 0.0
        %456 = vmatpush1.msra.mxu0 0.0
        %457 = vmatprep.subr.mxu0 0.0
        %458 = vmatpush1.msra.mxu0 0.0
        %459 = vmatprep.subr.mxu0 0.0
        %460 = vmatpush1.msra.mxu0 0.0
        %461 = vmatprep.subr.mxu0 0.0
        %462 = vmatpush1.msra.mxu0 0.0
        %463 = vmatprep.subr.mxu0 0.0
        %464 = vmatpush1.msra.mxu0 0.0
        %465 = vmatprep.subr.mxu0 0.0
        %466 = vmatpush1.msra.mxu0 0.0
        %467 = vmatprep.subr.mxu0 0.0
        %468 = vmatpush1.msra.mxu0 0.0
        %469 = vmatprep.subr.mxu0 0.0
        %470 = vmatpush1.msra.mxu0 0.0
        %471 = vmatprep.subr.mxu0 0.0
        %472 = vmatpush1.msra.mxu0 0.0
        %473 = vmatprep.subr.mxu0 0.0
        %474 = vmatpush1.msra.mxu0 0.0
        %475 = vmatprep.subr.mxu0 0.0
        %476 = vmatpush1.msra.mxu0 0.0
        %477 = vmatprep.subr.mxu0 0.0
        %478 = vmatpush1.msra.mxu0 0.0
        %479 = vmatprep.subr.mxu0 0.0
        %480 = vmatpush1.msra.mxu0 0.0
        %481 = vmatprep.subr.mxu0 0.0
        %482 = vmatpush1.msra.mxu0 0.0
        %483 = vmatprep.mubr.f32.mxu0 0.0
        %484 = vmatmul.mubr.f32.gmra.mrb[0].mxu0 %v414
        %v485 = vpop.f32.mrb[0].mxu0
        %v486 = vadd.f32 %v410, %v485
        %v487 = vpop.f32.mrb[0].mxu0
        %488 = vmatprep.mubr.f32.mxu0 0.0
        %489 = vmatmul.mubr.f32.gmra.mrb[0].mxu0 %v417
        %v490 = vpop.f32.mrb[0].mxu0
        %v491 = vadd.f32 %v410, %v490
        %v492 = vpop.f32.mrb[0].mxu0
        %493 = vdwg.mxu0
        %494 = vst [vmem:[#allocation3] sm:$0xff] %v486
        %495 = vst [vmem:[#allocation3 + $0x8] sm:$0xff] %v491
        %v496 = vld [vmem:[#allocation10] sm:$0xff]
        %v497 = vld [vmem:[#allocation10 + $0x8] sm:$0xff]
        %v498 = vld [vmem:[#allocation10 + $0x10] sm:$0xff]
        %v499 = vld [vmem:[#allocation10 + $0x18] sm:$0xff]
        %v500 = vld [vmem:[#allocation13] sm:$0xff]
        %v501 = vld [vmem:[#allocation13 + $0x8] sm:$0xff]
        %v502 = vld [vmem:[#allocation13 + $0x10] sm:$0xff]
        %v503 = vld [vmem:[#allocation13 + $0x18] sm:$0xff]
        %v504 = vld [vmem:[#allocation13 + $0x20] sm:$0xff]
        %v505 = vld [vmem:[#allocation13 + $0x28] sm:$0xff]
        %v506 = vld [vmem:[#allocation13 + $0x30] sm:$0xff]
        %v507 = vld [vmem:[#allocation13 + $0x38] sm:$0xff]
        %v508 = vld [vmem:[#allocation14] sm:$0x1]
        %v510 = vlaneseq
        %v511 = vshrl.u32 %v510, 7
        %v512 = vsub.s32 0, %v511
        %v513 = vrot.slane %v508, %v512
        %v515 = vld [vmem:[#allocation2] sm:$0x3]
        %s516 = scalar_lea.vmem [#allocation2], 2
        %v517 = vld [vmem:[%s516] sm:$0x3]
        %s518 = scalar_lea.vmem [#allocation2], 4
        %v519 = vld [vmem:[%s518] sm:$0x3]
        %s520 = scalar_lea.vmem [#allocation2], 6
        %v521 = vld [vmem:[%s520] sm:$0x3]
        %v522 = vld [vmem:[#allocation3] sm:$0x3]
        %v524 = vsel %vm412, %v515, 0
        %526 = vmatprep.subr.mxu0 0.0
        %527 = vmatpush1.msra.mxu0 %v496
        %528 = vmatprep.subr.mxu0 0.0
        %529 = vmatpush1.msra.mxu0 %v497
        %530 = vmatprep.subr.mxu0 0.0
        %531 = vmatpush1.msra.mxu0 %v498
        %532 = vmatprep.subr.mxu0 0.0
        %533 = vmatpush1.msra.mxu0 %v499
        %534 = vmatprep.subr.mxu0 0.0
        %535 = vmatpush1.msra.mxu0 0.0
        %536 = vmatprep.subr.mxu0 0.0
        %537 = vmatpush1.msra.mxu0 0.0
        %538 = vmatprep.subr.mxu0 0.0
        %539 = vmatpush1.msra.mxu0 0.0
        %540 = vmatprep.subr.mxu0 0.0
        %541 = vmatpush1.msra.mxu0 0.0
        %542 = vmatprep.subr.mxu0 0.0
        %543 = vmatpush1.msra.mxu0 0.0
        %544 = vmatprep.subr.mxu0 0.0
        %545 = vmatpush1.msra.mxu0 0.0
        %546 = vmatprep.subr.mxu0 0.0
        %547 = vmatpush1.msra.mxu0 0.0
        %548 = vmatprep.subr.mxu0 0.0
        %549 = vmatpush1.msra.mxu0 0.0
        %550 = vmatprep.subr.mxu0 0.0
        %551 = vmatpush1.msra.mxu0 0.0
        %552 = vmatprep.subr.mxu0 0.0
        %553 = vmatpush1.msra.mxu0 0.0
        %554 = vmatprep.subr.mxu0 0.0
        %555 = vmatpush1.msra.mxu0 0.0
        %556 = vmatprep.subr.mxu0 0.0
        %557 = vmatpush1.msra.mxu0 0.0
        %558 = vmatprep.subr.mxu0 0.0
        %559 = vmatpush1.msra.mxu0 0.0
        %560 = vmatprep.subr.mxu0 0.0
        %561 = vmatpush1.msra.mxu0 0.0
        %562 = vmatprep.subr.mxu0 0.0
        %563 = vmatpush1.msra.mxu0 0.0
        %564 = vmatprep.subr.mxu0 0.0
        %565 = vmatpush1.msra.mxu0 0.0
        %566 = vmatprep.subr.mxu0 0.0
        %567 = vmatpush1.msra.mxu0 0.0
        %568 = vmatprep.subr.mxu0 0.0
        %569 = vmatpush1.msra.mxu0 0.0
        %570 = vmatprep.subr.mxu0 0.0
        %571 = vmatpush1.msra.mxu0 0.0
        %572 = vmatprep.subr.mxu0 0.0
        %573 = vmatpush1.msra.mxu0 0.0
        %574 = vmatprep.subr.mxu0 0.0
        %575 = vmatpush1.msra.mxu0 0.0
        %576 = vmatprep.subr.mxu0 0.0
        %577 = vmatpush1.msra.mxu0 0.0
        %578 = vmatprep.subr.mxu0 0.0
        %579 = vmatpush1.msra.mxu0 0.0
        %580 = vmatprep.subr.mxu0 0.0
        %581 = vmatpush1.msra.mxu0 0.0
        %582 = vmatprep.subr.mxu0 0.0
        %583 = vmatpush1.msra.mxu0 0.0
        %584 = vmatprep.subr.mxu0 0.0
        %585 = vmatpush1.msra.mxu0 0.0
        %586 = vmatprep.subr.mxu0 0.0
        %587 = vmatpush1.msra.mxu0 0.0
        %588 = vmatprep.subr.mxu0 0.0
        %589 = vmatpush1.msra.mxu0 0.0
        %590 = vmatprep.mubr.f32.mxu0 0.0
        %591 = vmatmul.mubr.f32.gmra.mrb[0].mxu0 %v524
        %v592 = vpop.f32.mrb[0].mxu0
        %v593 = vadd.f32 0.0, %v592
        %v594 = vpop.f32.mrb[0].mxu0
        %595 = vdwg.mxu0
        %v596 = vadd.f32 %v522, %v593
        %v597 = vxor.u32 %v596, 2147483648
        %v598 = vmul.f32 %v597, 1.442695
        %v599 = vpow.pop %v598
        %v600 = vadd.f32 %v599, 1.0
        %v601 = vrcp.pop %v600
        %v602 = vmul.f32 1.0, %v601
        %v603 = vtanh.pop %v596
        %605 = vrot.lane.b32.xlu0 %v517, 32
        %v606 = vpop.permute.xlu0 %605
        %v608 = vmul.f32 %v602, %v606
        %610 = vrot.lane.b32.xlu0 %v603, 64
        %v611 = vpop.permute.xlu0 %610
        %v613 = vmul.f32 %v602, %v611
        %615 = vrot.lane.b32.xlu0 %v613, 32
        %v616 = vpop.permute.xlu0 %615
        %v618 = vadd.f32 %v608, %v616
        %v619 = vtanh.pop %v618
        %621 = vrot.lane.b32.xlu0 %v619, 64
        %v622 = vpop.permute.xlu0 %621
        %v624 = vmul.f32 %v602, %v622
        %626 = vrot.lane.b32.xlu0 %v624, 32
        %v627 = vpop.permute.xlu0 %626
        %630 = vrot.lane.b32.xlu0 %v519, 32
        %v631 = vpop.permute.xlu0 %630
        %v633 = vsel %vm412, %v627, %v631
        %vm634 = vcmask 523264
        %v636 = vsel %vm634, %v633, 0
        %638 = vmatprep.subr.mxu0 0.0
        %639 = vmatpush1.msra.mxu0 %v500
        %640 = vmatprep.subr.mxu0 0.0
        %641 = vmatpush1.msra.mxu0 %v501
        %642 = vmatprep.subr.mxu0 0.0
        %643 = vmatpush1.msra.mxu0 %v502
        %644 = vmatprep.subr.mxu0 0.0
        %645 = vmatpush1.msra.mxu0 %v503
        %646 = vmatprep.subr.mxu0 0.0
        %647 = vmatpush1.msra.mxu0 %v504
        %648 = vmatprep.subr.mxu0 0.0
        %649 = vmatpush1.msra.mxu0 %v505
        %650 = vmatprep.subr.mxu0 0.0
        %651 = vmatpush1.msra.mxu0 %v506
        %652 = vmatprep.subr.mxu0 0.0
        %653 = vmatpush1.msra.mxu0 %v507
        %654 = vmatprep.subr.mxu0 0.0
        %655 = vmatpush1.msra.mxu0 0.0
        %656 = vmatprep.subr.mxu0 0.0
        %657 = vmatpush1.msra.mxu0 0.0
        %658 = vmatprep.subr.mxu0 0.0
        %659 = vmatpush1.msra.mxu0 0.0
        %660 = vmatprep.subr.mxu0 0.0
        %661 = vmatpush1.msra.mxu0 0.0
        %662 = vmatprep.subr.mxu0 0.0
        %663 = vmatpush1.msra.mxu0 0.0
        %664 = vmatprep.subr.mxu0 0.0
        %665 = vmatpush1.msra.mxu0 0.0
        %666 = vmatprep.subr.mxu0 0.0
        %667 = vmatpush1.msra.mxu0 0.0
        %668 = vmatprep.subr.mxu0 0.0
        %669 = vmatpush1.msra.mxu0 0.0
        %670 = vmatprep.subr.mxu0 0.0
        %671 = vmatpush1.msra.mxu0 0.0
        %672 = vmatprep.subr.mxu0 0.0
        %673 = vmatpush1.msra.mxu0 0.0
        %674 = vmatprep.subr.mxu0 0.0
        %675 = vmatpush1.msra.mxu0 0.0
        %676 = vmatprep.subr.mxu0 0.0
        %677 = vmatpush1.msra.mxu0 0.0
        %678 = vmatprep.subr.mxu0 0.0
        %679 = vmatpush1.msra.mxu0 0.0
        %680 = vmatprep.subr.mxu0 0.0
        %681 = vmatpush1.msra.mxu0 0.0
        %682 = vmatprep.subr.mxu0 0.0
        %683 = vmatpush1.msra.mxu0 0.0
        %684 = vmatprep.subr.mxu0 0.0
        %685 = vmatpush1.msra.mxu0 0.0
        %686 = vmatprep.subr.mxu0 0.0
        %687 = vmatpush1.msra.mxu0 0.0
        %688 = vmatprep.subr.mxu0 0.0
        %689 = vmatpush1.msra.mxu0 0.0
        %690 = vmatprep.subr.mxu0 0.0
        %691 = vmatpush1.msra.mxu0 0.0
        %692 = vmatprep.subr.mxu0 0.0
        %693 = vmatpush1.msra.mxu0 0.0
        %694 = vmatprep.subr.mxu0 0.0
        %695 = vmatpush1.msra.mxu0 0.0
        %696 = vmatprep.subr.mxu0 0.0
        %697 = vmatpush1.msra.mxu0 0.0
        %698 = vmatprep.subr.mxu0 0.0
        %699 = vmatpush1.msra.mxu0 0.0
        %700 = vmatprep.subr.mxu0 0.0
        %701 = vmatpush1.msra.mxu0 0.0
        %702 = vmatprep.mubr.f32.mxu0 0.0
        %703 = vmatmul.mubr.f32.gmra.mrb[0].mxu0 %v636
        %v704 = vpop.f32.mrb[0].mxu0
        %v705 = vadd.f32 %v513, %v704
        %v706 = vpop.f32.mrb[0].mxu0
        %707 = vdwg.mxu0
        %v708 = vxor.u32 %v705, 2147483648
        %v709 = vmul.f32 %v708, 1.442695
        %v710 = vpow.pop %v709
        %v711 = vadd.f32 %v710, 1.0
        %v712 = vrcp.pop %v711
        %v713 = vmul.f32 1.0, %v712
        %v714 = vtanh.pop %v705
        %716 = vrot.lane.b32.xlu0 %v521, 32
        %v717 = vpop.permute.xlu0 %716
        %v719 = vmul.f32 %v713, %v717
        %721 = vrot.lane.b32.xlu0 %v714, 64
        %v722 = vpop.permute.xlu0 %721
        %v724 = vmul.f32 %v713, %v722
        %726 = vrot.lane.b32.xlu0 %v724, 32
        %v727 = vpop.permute.xlu0 %726
        %v729 = vadd.f32 %v719, %v727
        %v730 = vtanh.pop %v729
        %732 = vrot.lane.b32.xlu0 %v730, 64
        %v733 = vpop.permute.xlu0 %732
        %v735 = vmul.f32 %v713, %v733
        %737 = vrot.lane.b32.xlu0 %v735, 32
        %v738 = vpop.permute.xlu0 %737
        %vm740 = vcmask 254976
        %741 = vst.msk [vmem:[#allocation4] sm:$0x3] %vm740, %v738
        %v742 = vld [vmem:[#allocation3 + $0x2] sm:$0x3]
        %v743 = vsel %vm412, %v627, 0
        %745 = vmatprep.subr.mxu0 0.0
        %746 = vmatpush1.msra.mxu0 %v496
        %747 = vmatprep.subr.mxu0 0.0
        %748 = vmatpush1.msra.mxu0 %v497
        %749 = vmatprep.subr.mxu0 0.0
        %750 = vmatpush1.msra.mxu0 %v498
        %751 = vmatprep.subr.mxu0 0.0
        %752 = vmatpush1.msra.mxu0 %v499
        %753 = vmatprep.subr.mxu0 0.0
        %754 = vmatpush1.msra.mxu0 0.0
        %755 = vmatprep.subr.mxu0 0.0
        %756 = vmatpush1.msra.mxu0 0.0
        %757 = vmatprep.subr.mxu0 0.0
        %758 = vmatpush1.msra.mxu0 0.0
        %759 = vmatprep.subr.mxu0 0.0
        %760 = vmatpush1.msra.mxu0 0.0
        %761 = vmatprep.subr.mxu0 0.0
        %762 = vmatpush1.msra.mxu0 0.0
        %763 = vmatprep.subr.mxu0 0.0
        %764 = vmatpush1.msra.mxu0 0.0
        %765 = vmatprep.subr.mxu0 0.0
        %766 = vmatpush1.msra.mxu0 0.0
        %767 = vmatprep.subr.mxu0 0.0
        %768 = vmatpush1.msra.mxu0 0.0
        %769 = vmatprep.subr.mxu0 0.0
        %770 = vmatpush1.msra.mxu0 0.0
        %771 = vmatprep.subr.mxu0 0.0
        %772 = vmatpush1.msra.mxu0 0.0
        %773 = vmatprep.subr.mxu0 0.0
        %774 = vmatpush1.msra.mxu0 0.0
        %775 = vmatprep.subr.mxu0 0.0
        %776 = vmatpush1.msra.mxu0 0.0
        %777 = vmatprep.subr.mxu0 0.0
        %778 = vmatpush1.msra.mxu0 0.0
        %779 = vmatprep.subr.mxu0 0.0
        %780 = vmatpush1.msra.mxu0 0.0
        %781 = vmatprep.subr.mxu0 0.0
        %782 = vmatpush1.msra.mxu0 0.0
        %783 = vmatprep.subr.mxu0 0.0
        %784 = vmatpush1.msra.mxu0 0.0
        %785 = vmatprep.subr.mxu0 0.0
        %786 = vmatpush1.msra.mxu0 0.0
        %787 = vmatprep.subr.mxu0 0.0
        %788 = vmatpush1.msra.mxu0 0.0
        %789 = vmatprep.subr.mxu0 0.0
        %790 = vmatpush1.msra.mxu0 0.0
        %791 = vmatprep.subr.mxu0 0.0
        %792 = vmatpush1.msra.mxu0 0.0
        %793 = vmatprep.subr.mxu0 0.0
        %794 = vmatpush1.msra.mxu0 0.0
        %795 = vmatprep.subr.mxu0 0.0
        %796 = vmatpush1.msra.mxu0 0.0
        %797 = vmatprep.subr.mxu0 0.0
        %798 = vmatpush1.msra.mxu0 0.0
        %799 = vmatprep.subr.mxu0 0.0
        %800 = vmatpush1.msra.mxu0 0.0
        %801 = vmatprep.subr.mxu0 0.0
        %802 = vmatpush1.msra.mxu0 0.0
        %803 = vmatprep.subr.mxu0 0.0
        %804 = vmatpush1.msra.mxu0 0.0
        %805 = vmatprep.subr.mxu0 0.0
        %806 = vmatpush1.msra.mxu0 0.0
        %807 = vmatprep.subr.mxu0 0.0
        %808 = vmatpush1.msra.mxu0 0.0
        %809 = vmatprep.mubr.f32.mxu0 0.0
        %810 = vmatmul.mubr.f32.gmra.mrb[0].mxu0 %v743
        %v811 = vpop.f32.mrb[0].mxu0
        %v812 = vadd.f32 0.0, %v811
        %v813 = vpop.f32.mrb[0].mxu0
        %814 = vdwg.mxu0
        %v815 = vadd.f32 %v742, %v812
        %v816 = vxor.u32 %v815, 2147483648
        %v817 = vmul.f32 %v816, 1.442695
        %v818 = vpow.pop %v817
        %v819 = vadd.f32 %v818, 1.0
        %v820 = vrcp.pop %v819
        %v821 = vmul.f32 1.0, %v820
        %v822 = vtanh.pop %v815
        %v823 = vmul.f32 %v821, %v618
        %825 = vrot.lane.b32.xlu0 %v822, 64
        %v826 = vpop.permute.xlu0 %825
        %v828 = vmul.f32 %v821, %v826
        %830 = vrot.lane.b32.xlu0 %v828, 32
        %v831 = vpop.permute.xlu0 %830
        %v833 = vadd.f32 %v823, %v831
        %v834 = vtanh.pop %v833
        %836 = vrot.lane.b32.xlu0 %v834, 64
        %v837 = vpop.permute.xlu0 %836
        %v839 = vmul.f32 %v821, %v837
        %841 = vrot.lane.b32.xlu0 %v839, 32
        %v842 = vpop.permute.xlu0 %841
        %844 = vrot.lane.b32.xlu0 %v735, 64
        %v845 = vpop.permute.xlu0 %844
        %v847 = vsel %vm412, %v842, %v845
        %v849 = vsel %vm634, %v847, 0
        %851 = vmatprep.subr.mxu0 0.0
        %852 = vmatpush1.msra.mxu0 %v500
        %853 = vmatprep.subr.mxu0 0.0
        %854 = vmatpush1.msra.mxu0 %v501
        %855 = vmatprep.subr.mxu0 0.0
        %856 = vmatpush1.msra.mxu0 %v502
        %857 = vmatprep.subr.mxu0 0.0
        %858 = vmatpush1.msra.mxu0 %v503
        %859 = vmatprep.subr.mxu0 0.0
        %860 = vmatpush1.msra.mxu0 %v504
        %861 = vmatprep.subr.mxu0 0.0
        %862 = vmatpush1.msra.mxu0 %v505
        %863 = vmatprep.subr.mxu0 0.0
        %864 = vmatpush1.msra.mxu0 %v506
        %865 = vmatprep.subr.mxu0 0.0
        %866 = vmatpush1.msra.mxu0 %v507
        %867 = vmatprep.subr.mxu0 0.0
        %868 = vmatpush1.msra.mxu0 0.0
        %869 = vmatprep.subr.mxu0 0.0
        %870 = vmatpush1.msra.mxu0 0.0
        %871 = vmatprep.subr.mxu0 0.0
        %872 = vmatpush1.msra.mxu0 0.0
        %873 = vmatprep.subr.mxu0 0.0
        %874 = vmatpush1.msra.mxu0 0.0
        %875 = vmatprep.subr.mxu0 0.0
        %876 = vmatpush1.msra.mxu0 0.0
        %877 = vmatprep.subr.mxu0 0.0
        %878 = vmatpush1.msra.mxu0 0.0
        %879 = vmatprep.subr.mxu0 0.0
        %880 = vmatpush1.msra.mxu0 0.0
        %881 = vmatprep.subr.mxu0 0.0
        %882 = vmatpush1.msra.mxu0 0.0
        %883 = vmatprep.subr.mxu0 0.0
        %884 = vmatpush1.msra.mxu0 0.0
        %885 = vmatprep.subr.mxu0 0.0
        %886 = vmatpush1.msra.mxu0 0.0
        %887 = vmatprep.subr.mxu0 0.0
        %888 = vmatpush1.msra.mxu0 0.0
        %889 = vmatprep.subr.mxu0 0.0
        %890 = vmatpush1.msra.mxu0 0.0
        %891 = vmatprep.subr.mxu0 0.0
        %892 = vmatpush1.msra.mxu0 0.0
        %893 = vmatprep.subr.mxu0 0.0
        %894 = vmatpush1.msra.mxu0 0.0
        %895 = vmatprep.subr.mxu0 0.0
        %896 = vmatpush1.msra.mxu0 0.0
        %897 = vmatprep.subr.mxu0 0.0
        %898 = vmatpush1.msra.mxu0 0.0
        %899 = vmatprep.subr.mxu0 0.0
        %900 = vmatpush1.msra.mxu0 0.0
        %901 = vmatprep.subr.mxu0 0.0
        %902 = vmatpush1.msra.mxu0 0.0
        %903 = vmatprep.subr.mxu0 0.0
        %904 = vmatpush1.msra.mxu0 0.0
        %905 = vmatprep.subr.mxu0 0.0
        %906 = vmatpush1.msra.mxu0 0.0
        %907 = vmatprep.subr.mxu0 0.0
        %908 = vmatpush1.msra.mxu0 0.0
        %909 = vmatprep.subr.mxu0 0.0
        %910 = vmatpush1.msra.mxu0 0.0
        %911 = vmatprep.subr.mxu0 0.0
        %912 = vmatpush1.msra.mxu0 0.0
        %913 = vmatprep.subr.mxu0 0.0
        %914 = vmatpush1.msra.mxu0 0.0
        %915 = vmatprep.mubr.f32.mxu0 0.0
        %916 = vmatmul.mubr.f32.gmra.mrb[0].mxu0 %v849
        %v917 = vpop.f32.mrb[0].mxu0
        %v918 = vadd.f32 %v513, %v917
        %v919 = vpop.f32.mrb[0].mxu0
        %920 = vdwg.mxu0
        %v921 = vxor.u32 %v918, 2147483648
        %v922 = vmul.f32 %v921, 1.442695
        %v923 = vpow.pop %v922
        %v924 = vadd.f32 %v923, 1.0
        %v925 = vrcp.pop %v924
        %v926 = vmul.f32 1.0, %v925
        %v927 = vtanh.pop %v918
        %v928 = vmul.f32 %v926, %v729
        %930 = vrot.lane.b32.xlu0 %v927, 64
        %v931 = vpop.permute.xlu0 %930
        %v933 = vmul.f32 %v926, %v931
        %935 = vrot.lane.b32.xlu0 %v933, 32
        %v936 = vpop.permute.xlu0 %935
        %v938 = vadd.f32 %v928, %v936
        %v939 = vtanh.pop %v938
        %941 = vrot.lane.b32.xlu0 %v939, 64
        %v942 = vpop.permute.xlu0 %941
        %v944 = vmul.f32 %v926, %v942
        %946 = vrot.lane.b32.xlu0 %v944, 32
        %v947 = vpop.permute.xlu0 %946
        %s949 = scalar_lea.vmem [#allocation4], 2
        %950 = vst.msk [vmem:[%s949] sm:$0x3] %vm740, %v947
        %v951 = vld [vmem:[#allocation3 + $0x4] sm:$0x3]
        %v952 = vsel %vm412, %v842, 0
        %954 = vmatprep.subr.mxu0 0.0
        %955 = vmatpush1.msra.mxu0 %v496
        %956 = vmatprep.subr.mxu0 0.0
        %957 = vmatpush1.msra.mxu0 %v497
        %958 = vmatprep.subr.mxu0 0.0
        %959 = vmatpush1.msra.mxu0 %v498
        %960 = vmatprep.subr.mxu0 0.0
        %961 = vmatpush1.msra.mxu0 %v499
        %962 = vmatprep.subr.mxu0 0.0
        %963 = vmatpush1.msra.mxu0 0.0
        %964 = vmatprep.subr.mxu0 0.0
        %965 = vmatpush1.msra.mxu0 0.0
        %966 = vmatprep.subr.mxu0 0.0
        %967 = vmatpush1.msra.mxu0 0.0
        %968 = vmatprep.subr.mxu0 0.0
        %969 = vmatpush1.msra.mxu0 0.0
        %970 = vmatprep.subr.mxu0 0.0
        %971 = vmatpush1.msra.mxu0 0.0
        %972 = vmatprep.subr.mxu0 0.0
        %973 = vmatpush1.msra.mxu0 0.0
        %974 = vmatprep.subr.mxu0 0.0
        %975 = vmatpush1.msra.mxu0 0.0
        %976 = vmatprep.subr.mxu0 0.0
        %977 = vmatpush1.msra.mxu0 0.0
        %978 = vmatprep.subr.mxu0 0.0
        %979 = vmatpush1.msra.mxu0 0.0
        %980 = vmatprep.subr.mxu0 0.0
        %981 = vmatpush1.msra.mxu0 0.0
        %982 = vmatprep.subr.mxu0 0.0
        %983 = vmatpush1.msra.mxu0 0.0
        %984 = vmatprep.subr.mxu0 0.0
        %985 = vmatpush1.msra.mxu0 0.0
        %986 = vmatprep.subr.mxu0 0.0
        %987 = vmatpush1.msra.mxu0 0.0
        %988 = vmatprep.subr.mxu0 0.0
        %989 = vmatpush1.msra.mxu0 0.0
        %990 = vmatprep.subr.mxu0 0.0
        %991 = vmatpush1.msra.mxu0 0.0
        %992 = vmatprep.subr.mxu0 0.0
        %993 = vmatpush1.msra.mxu0 0.0
        %994 = vmatprep.subr.mxu0 0.0
        %995 = vmatpush1.msra.mxu0 0.0
        %996 = vmatprep.subr.mxu0 0.0
        %997 = vmatpush1.msra.mxu0 0.0
        %998 = vmatprep.subr.mxu0 0.0
        %999 = vmatpush1.msra.mxu0 0.0
        %1000 = vmatprep.subr.mxu0 0.0
        %1001 = vmatpush1.msra.mxu0 0.0
        %1002 = vmatprep.subr.mxu0 0.0
        %1003 = vmatpush1.msra.mxu0 0.0
        %1004 = vmatprep.subr.mxu0 0.0
        %1005 = vmatpush1.msra.mxu0 0.0
        %1006 = vmatprep.subr.mxu0 0.0
        %1007 = vmatpush1.msra.mxu0 0.0
        %1008 = vmatprep.subr.mxu0 0.0
        %1009 = vmatpush1.msra.mxu0 0.0
        %1010 = vmatprep.subr.mxu0 0.0
        %1011 = vmatpush1.msra.mxu0 0.0
        %1012 = vmatprep.subr.mxu0 0.0
        %1013 = vmatpush1.msra.mxu0 0.0
        %1014 = vmatprep.subr.mxu0 0.0
        %1015 = vmatpush1.msra.mxu0 0.0
        %1016 = vmatprep.subr.mxu0 0.0
        %1017 = vmatpush1.msra.mxu0 0.0
        %1018 = vmatprep.mubr.f32.mxu0 0.0
        %1019 = vmatmul.mubr.f32.gmra.mrb[0].mxu0 %v952
        %v1020 = vpop.f32.mrb[0].mxu0
        %v1021 = vadd.f32 0.0, %v1020
        %v1022 = vpop.f32.mrb[0].mxu0
        %1023 = vdwg.mxu0
        %v1024 = vadd.f32 %v951, %v1021
        %v1025 = vxor.u32 %v1024, 2147483648
        %v1026 = vmul.f32 %v1025, 1.442695
        %v1027 = vpow.pop %v1026
        %v1028 = vadd.f32 %v1027, 1.0
        %v1029 = vrcp.pop %v1028
        %v1030 = vmul.f32 1.0, %v1029
        %v1031 = vtanh.pop %v1024
        %v1032 = vmul.f32 %v1030, %v833
        %1034 = vrot.lane.b32.xlu0 %v1031, 64
        %v1035 = vpop.permute.xlu0 %1034
        %v1037 = vmul.f32 %v1030, %v1035
        %1039 = vrot.lane.b32.xlu0 %v1037, 32
        %v1040 = vpop.permute.xlu0 %1039
        %v1042 = vadd.f32 %v1032, %v1040
        %v1043 = vtanh.pop %v1042
        %1045 = vrot.lane.b32.xlu0 %v1043, 64
        %v1046 = vpop.permute.xlu0 %1045
        %v1048 = vmul.f32 %v1030, %v1046
        %1050 = vrot.lane.b32.xlu0 %v1048, 32
        %v1051 = vpop.permute.xlu0 %1050
        %1053 = vrot.lane.b32.xlu0 %v944, 64
        %v1054 = vpop.permute.xlu0 %1053
        %v1056 = vsel %vm412, %v1051, %v1054
        %v1058 = vsel %vm634, %v1056, 0
        %1060 = vmatprep.subr.mxu0 0.0
        %1061 = vmatpush1.msra.mxu0 %v500
        %1062 = vmatprep.subr.mxu0 0.0
        %1063 = vmatpush1.msra.mxu0 %v501
        %1064 = vmatprep.subr.mxu0 0.0
        %1065 = vmatpush1.msra.mxu0 %v502
        %1066 = vmatprep.subr.mxu0 0.0
        %1067 = vmatpush1.msra.mxu0 %v503
        %1068 = vmatprep.subr.mxu0 0.0
        %1069 = vmatpush1.msra.mxu0 %v504
        %1070 = vmatprep.subr.mxu0 0.0
        %1071 = vmatpush1.msra.mxu0 %v505
        %1072 = vmatprep.subr.mxu0 0.0
        %1073 = vmatpush1.msra.mxu0 %v506
        %1074 = vmatprep.subr.mxu0 0.0
        %1075 = vmatpush1.msra.mxu0 %v507
        %1076 = vmatprep.subr.mxu0 0.0
        %1077 = vmatpush1.msra.mxu0 0.0
        %1078 = vmatprep.subr.mxu0 0.0
        %1079 = vmatpush1.msra.mxu0 0.0
        %1080 = vmatprep.subr.mxu0 0.0
        %1081 = vmatpush1.msra.mxu0 0.0
        %1082 = vmatprep.subr.mxu0 0.0
        %1083 = vmatpush1.msra.mxu0 0.0
        %1084 = vmatprep.subr.mxu0 0.0
        %1085 = vmatpush1.msra.mxu0 0.0
        %1086 = vmatprep.subr.mxu0 0.0
        %1087 = vmatpush1.msra.mxu0 0.0
        %1088 = vmatprep.subr.mxu0 0.0
        %1089 = vmatpush1.msra.mxu0 0.0
        %1090 = vmatprep.subr.mxu0 0.0
        %1091 = vmatpush1.msra.mxu0 0.0
        %1092 = vmatprep.subr.mxu0 0.0
        %1093 = vmatpush1.msra.mxu0 0.0
        %1094 = vmatprep.subr.mxu0 0.0
        %1095 = vmatpush1.msra.mxu0 0.0
        %1096 = vmatprep.subr.mxu0 0.0
        %1097 = vmatpush1.msra.mxu0 0.0
        %1098 = vmatprep.subr.mxu0 0.0
        %1099 = vmatpush1.msra.mxu0 0.0
        %1100 = vmatprep.subr.mxu0 0.0
        %1101 = vmatpush1.msra.mxu0 0.0
        %1102 = vmatprep.subr.mxu0 0.0
        %1103 = vmatpush1.msra.mxu0 0.0
        %1104 = vmatprep.subr.mxu0 0.0
        %1105 = vmatpush1.msra.mxu0 0.0
        %1106 = vmatprep.subr.mxu0 0.0
        %1107 = vmatpush1.msra.mxu0 0.0
        %1108 = vmatprep.subr.mxu0 0.0
        %1109 = vmatpush1.msra.mxu0 0.0
        %1110 = vmatprep.subr.mxu0 0.0
        %1111 = vmatpush1.msra.mxu0 0.0
        %1112 = vmatprep.subr.mxu0 0.0
        %1113 = vmatpush1.msra.mxu0 0.0
        %1114 = vmatprep.subr.mxu0 0.0
        %1115 = vmatpush1.msra.mxu0 0.0
        %1116 = vmatprep.subr.mxu0 0.0
        %1117 = vmatpush1.msra.mxu0 0.0
        %1118 = vmatprep.subr.mxu0 0.0
        %1119 = vmatpush1.msra.mxu0 0.0
        %1120 = vmatprep.subr.mxu0 0.0
        %1121 = vmatpush1.msra.mxu0 0.0
        %1122 = vmatprep.subr.mxu0 0.0
        %1123 = vmatpush1.msra.mxu0 0.0
        %1124 = vmatprep.mubr.f32.mxu0 0.0
        %1125 = vmatmul.mubr.f32.gmra.mrb[0].mxu0 %v1058
        %v1126 = vpop.f32.mrb[0].mxu0
        %v1127 = vadd.f32 %v513, %v1126
        %v1128 = vpop.f32.mrb[0].mxu0
        %1129 = vdwg.mxu0
        %v1130 = vxor.u32 %v1127, 2147483648
        %v1131 = vmul.f32 %v1130, 1.442695
        %v1132 = vpow.pop %v1131
        %v1133 = vadd.f32 %v1132, 1.0
        %v1134 = vrcp.pop %v1133
        %v1135 = vmul.f32 1.0, %v1134
        %v1136 = vtanh.pop %v1127
        %v1137 = vmul.f32 %v1135, %v938
        %1139 = vrot.lane.b32.xlu0 %v1136, 64
        %v1140 = vpop.permute.xlu0 %1139
        %v1142 = vmul.f32 %v1135, %v1140
        %1144 = vrot.lane.b32.xlu0 %v1142, 32
        %v1145 = vpop.permute.xlu0 %1144
        %v1147 = vadd.f32 %v1137, %v1145
        %v1148 = vtanh.pop %v1147
        %1150 = vrot.lane.b32.xlu0 %v1148, 64
        %v1151 = vpop.permute.xlu0 %1150
        %v1153 = vmul.f32 %v1135, %v1151
        %1155 = vrot.lane.b32.xlu0 %v1153, 32
        %v1156 = vpop.permute.xlu0 %1155
        %s1158 = scalar_lea.vmem [#allocation4], 4
        %1159 = vst.msk [vmem:[%s1158] sm:$0x3] %vm740, %v1156
        %v1160 = vld [vmem:[#allocation3 + $0x6] sm:$0x3]
        %v1161 = vsel %vm412, %v1051, 0
        %1163 = vmatprep.subr.mxu0 0.0
        %1164 = vmatpush1.msra.mxu0 %v496
        %1165 = vmatprep.subr.mxu0 0.0
        %1166 = vmatpush1.msra.mxu0 %v497
        %1167 = vmatprep.subr.mxu0 0.0
        %1168 = vmatpush1.msra.mxu0 %v498
        %1169 = vmatprep.subr.mxu0 0.0
        %1170 = vmatpush1.msra.mxu0 %v499
        %1171 = vmatprep.subr.mxu0 0.0
        %1172 = vmatpush1.msra.mxu0 0.0
        %1173 = vmatprep.subr.mxu0 0.0
        %1174 = vmatpush1.msra.mxu0 0.0
        %1175 = vmatprep.subr.mxu0 0.0
        %1176 = vmatpush1.msra.mxu0 0.0
        %1177 = vmatprep.subr.mxu0 0.0
        %1178 = vmatpush1.msra.mxu0 0.0
        %1179 = vmatprep.subr.mxu0 0.0
        %1180 = vmatpush1.msra.mxu0 0.0
        %1181 = vmatprep.subr.mxu0 0.0
        %1182 = vmatpush1.msra.mxu0 0.0
        %1183 = vmatprep.subr.mxu0 0.0
        %1184 = vmatpush1.msra.mxu0 0.0
        %1185 = vmatprep.subr.mxu0 0.0
        %1186 = vmatpush1.msra.mxu0 0.0
        %1187 = vmatprep.subr.mxu0 0.0
        %1188 = vmatpush1.msra.mxu0 0.0
        %1189 = vmatprep.subr.mxu0 0.0
        %1190 = vmatpush1.msra.mxu0 0.0
        %1191 = vmatprep.subr.mxu0 0.0
        %1192 = vmatpush1.msra.mxu0 0.0
        %1193 = vmatprep.subr.mxu0 0.0
        %1194 = vmatpush1.msra.mxu0 0.0
        %1195 = vmatprep.subr.mxu0 0.0
        %1196 = vmatpush1.msra.mxu0 0.0
        %1197 = vmatprep.subr.mxu0 0.0
        %1198 = vmatpush1.msra.mxu0 0.0
        %1199 = vmatprep.subr.mxu0 0.0
        %1200 = vmatpush1.msra.mxu0 0.0
        %1201 = vmatprep.subr.mxu0 0.0
        %1202 = vmatpush1.msra.mxu0 0.0
        %1203 = vmatprep.subr.mxu0 0.0
        %1204 = vmatpush1.msra.mxu0 0.0
        %1205 = vmatprep.subr.mxu0 0.0
        %1206 = vmatpush1.msra.mxu0 0.0
        %1207 = vmatprep.subr.mxu0 0.0
        %1208 = vmatpush1.msra.mxu0 0.0
        %1209 = vmatprep.subr.mxu0 0.0
        %1210 = vmatpush1.msra.mxu0 0.0
        %1211 = vmatprep.subr.mxu0 0.0
        %1212 = vmatpush1.msra.mxu0 0.0
        %1213 = vmatprep.subr.mxu0 0.0
        %1214 = vmatpush1.msra.mxu0 0.0
        %1215 = vmatprep.subr.mxu0 0.0
        %1216 = vmatpush1.msra.mxu0 0.0
        %1217 = vmatprep.subr.mxu0 0.0
        %1218 = vmatpush1.msra.mxu0 0.0
        %1219 = vmatprep.subr.mxu0 0.0
        %1220 = vmatpush1.msra.mxu0 0.0
        %1221 = vmatprep.subr.mxu0 0.0
        %1222 = vmatpush1.msra.mxu0 0.0
        %1223 = vmatprep.subr.mxu0 0.0
        %1224 = vmatpush1.msra.mxu0 0.0
        %1225 = vmatprep.subr.mxu0 0.0
        %1226 = vmatpush1.msra.mxu0 0.0
        %1227 = vmatprep.mubr.f32.mxu0 0.0
        %1228 = vmatmul.mubr.f32.gmra.mrb[0].mxu0 %v1161
        %v1229 = vpop.f32.mrb[0].mxu0
        %v1230 = vadd.f32 0.0, %v1229
        %v1231 = vpop.f32.mrb[0].mxu0
        %1232 = vdwg.mxu0
        %v1233 = vadd.f32 %v1160, %v1230
        %v1234 = vxor.u32 %v1233, 2147483648
        %v1235 = vmul.f32 %v1234, 1.442695
        %v1236 = vpow.pop %v1235
        %v1237 = vadd.f32 %v1236, 1.0
        %v1238 = vrcp.pop %v1237
        %v1239 = vmul.f32 1.0, %v1238
        %v1240 = vtanh.pop %v1233
        %v1241 = vmul.f32 %v1239, %v1042
        %1243 = vrot.lane.b32.xlu0 %v1240, 64
        %v1244 = vpop.permute.xlu0 %1243
        %v1246 = vmul.f32 %v1239, %v1244
        %1248 = vrot.lane.b32.xlu0 %v1246, 32
        %v1249 = vpop.permute.xlu0 %1248
        %v1251 = vadd.f32 %v1241, %v1249
        %v1252 = vtanh.pop %v1251
        %1254 = vrot.lane.b32.xlu0 %v1252, 64
        %v1255 = vpop.permute.xlu0 %1254
        %v1257 = vmul.f32 %v1239, %v1255
        %1259 = vrot.lane.b32.xlu0 %v1257, 32
        %v1260 = vpop.permute.xlu0 %1259
        %1262 = vrot.lane.b32.xlu0 %v1153, 64
        %v1263 = vpop.permute.xlu0 %1262
        %v1265 = vsel %vm412, %v1260, %v1263
        %v1267 = vsel %vm634, %v1265, 0
        %1269 = vmatprep.subr.mxu0 0.0
        %1270 = vmatpush1.msra.mxu0 %v500
        %1271 = vmatprep.subr.mxu0 0.0
        %1272 = vmatpush1.msra.mxu0 %v501
        %1273 = vmatprep.subr.mxu0 0.0
        %1274 = vmatpush1.msra.mxu0 %v502
        %1275 = vmatprep.subr.mxu0 0.0
        %1276 = vmatpush1.msra.mxu0 %v503
        %1277 = vmatprep.subr.mxu0 0.0
        %1278 = vmatpush1.msra.mxu0 %v504
        %1279 = vmatprep.subr.mxu0 0.0
        %1280 = vmatpush1.msra.mxu0 %v505
        %1281 = vmatprep.subr.mxu0 0.0
        %1282 = vmatpush1.msra.mxu0 %v506
        %1283 = vmatprep.subr.mxu0 0.0
        %1284 = vmatpush1.msra.mxu0 %v507
        %1285 = vmatprep.subr.mxu0 0.0
        %1286 = vmatpush1.msra.mxu0 0.0
        %1287 = vmatprep.subr.mxu0 0.0
        %1288 = vmatpush1.msra.mxu0 0.0
        %1289 = vmatprep.subr.mxu0 0.0
        %1290 = vmatpush1.msra.mxu0 0.0
        %1291 = vmatprep.subr.mxu0 0.0
        %1292 = vmatpush1.msra.mxu0 0.0
        %1293 = vmatprep.subr.mxu0 0.0
        %1294 = vmatpush1.msra.mxu0 0.0
        %1295 = vmatprep.subr.mxu0 0.0
        %1296 = vmatpush1.msra.mxu0 0.0
        %1297 = vmatprep.subr.mxu0 0.0
        %1298 = vmatpush1.msra.mxu0 0.0
        %1299 = vmatprep.subr.mxu0 0.0
        %1300 = vmatpush1.msra.mxu0 0.0
        %1301 = vmatprep.subr.mxu0 0.0
        %1302 = vmatpush1.msra.mxu0 0.0
        %1303 = vmatprep.subr.mxu0 0.0
        %1304 = vmatpush1.msra.mxu0 0.0
        %1305 = vmatprep.subr.mxu0 0.0
        %1306 = vmatpush1.msra.mxu0 0.0
        %1307 = vmatprep.subr.mxu0 0.0
        %1308 = vmatpush1.msra.mxu0 0.0
        %1309 = vmatprep.subr.mxu0 0.0
        %1310 = vmatpush1.msra.mxu0 0.0
        %1311 = vmatprep.subr.mxu0 0.0
        %1312 = vmatpush1.msra.mxu0 0.0
        %1313 = vmatprep.subr.mxu0 0.0
        %1314 = vmatpush1.msra.mxu0 0.0
        %1315 = vmatprep.subr.mxu0 0.0
        %1316 = vmatpush1.msra.mxu0 0.0
        %1317 = vmatprep.subr.mxu0 0.0
        %1318 = vmatpush1.msra.mxu0 0.0
        %1319 = vmatprep.subr.mxu0 0.0
        %1320 = vmatpush1.msra.mxu0 0.0
        %1321 = vmatprep.subr.mxu0 0.0
        %1322 = vmatpush1.msra.mxu0 0.0
        %1323 = vmatprep.subr.mxu0 0.0
        %1324 = vmatpush1.msra.mxu0 0.0
        %1325 = vmatprep.subr.mxu0 0.0
        %1326 = vmatpush1.msra.mxu0 0.0
        %1327 = vmatprep.subr.mxu0 0.0
        %1328 = vmatpush1.msra.mxu0 0.0
        %1329 = vmatprep.subr.mxu0 0.0
        %1330 = vmatpush1.msra.mxu0 0.0
        %1331 = vmatprep.subr.mxu0 0.0
        %1332 = vmatpush1.msra.mxu0 0.0
        %1333 = vmatprep.mubr.f32.mxu0 0.0
        %1334 = vmatmul.mubr.f32.gmra.mrb[0].mxu0 %v1267
        %v1335 = vpop.f32.mrb[0].mxu0
        %v1336 = vadd.f32 %v513, %v1335
        %v1337 = vpop.f32.mrb[0].mxu0
        %1338 = vdwg.mxu0
        %v1339 = vxor.u32 %v1336, 2147483648
        %v1340 = vmul.f32 %v1339, 1.442695
        %v1341 = vpow.pop %v1340
        %v1342 = vadd.f32 %v1341, 1.0
        %v1343 = vrcp.pop %v1342
        %v1344 = vmul.f32 1.0, %v1343
        %v1345 = vtanh.pop %v1336
        %v1346 = vmul.f32 %v1344, %v1147
        %1348 = vrot.lane.b32.xlu0 %v1345, 64
        %v1349 = vpop.permute.xlu0 %1348
        %v1351 = vmul.f32 %v1344, %v1349
        %1353 = vrot.lane.b32.xlu0 %v1351, 32
        %v1354 = vpop.permute.xlu0 %1353
        %v1356 = vadd.f32 %v1346, %v1354
        %v1357 = vtanh.pop %v1356
        %1359 = vrot.lane.b32.xlu0 %v1357, 64
        %v1360 = vpop.permute.xlu0 %1359
        %v1362 = vmul.f32 %v1344, %v1360
        %1364 = vrot.lane.b32.xlu0 %v1362, 32
        %v1365 = vpop.permute.xlu0 %1364
        %s1367 = scalar_lea.vmem [#allocation4], 6
        %1368 = vst.msk [vmem:[%s1367] sm:$0x3] %vm740, %v1365
        %v1369 = vld [vmem:[#allocation3 + $0x8] sm:$0x3]
        %v1370 = vsel %vm412, %v1260, 0
        %1372 = vmatprep.subr.mxu0 0.0
        %1373 = vmatpush1.msra.mxu0 %v496
        %1374 = vmatprep.subr.mxu0 0.0
        %1375 = vmatpush1.msra.mxu0 %v497
        %1376 = vmatprep.subr.mxu0 0.0
        %1377 = vmatpush1.msra.mxu0 %v498
        %1378 = vmatprep.subr.mxu0 0.0
        %1379 = vmatpush1.msra.mxu0 %v499
        %1380 = vmatprep.subr.mxu0 0.0
        %1381 = vmatpush1.msra.mxu0 0.0
        %1382 = vmatprep.subr.mxu0 0.0
        %1383 = vmatpush1.msra.mxu0 0.0
        %1384 = vmatprep.subr.mxu0 0.0
        %1385 = vmatpush1.msra.mxu0 0.0
        %1386 = vmatprep.subr.mxu0 0.0
        %1387 = vmatpush1.msra.mxu0 0.0
        %1388 = vmatprep.subr.mxu0 0.0
        %1389 = vmatpush1.msra.mxu0 0.0
        %1390 = vmatprep.subr.mxu0 0.0
        %1391 = vmatpush1.msra.mxu0 0.0
        %1392 = vmatprep.subr.mxu0 0.0
        %1393 = vmatpush1.msra.mxu0 0.0
        %1394 = vmatprep.subr.mxu0 0.0
        %1395 = vmatpush1.msra.mxu0 0.0
        %1396 = vmatprep.subr.mxu0 0.0
        %1397 = vmatpush1.msra.mxu0 0.0
        %1398 = vmatprep.subr.mxu0 0.0
        %1399 = vmatpush1.msra.mxu0 0.0
        %1400 = vmatprep.subr.mxu0 0.0
        %1401 = vmatpush1.msra.mxu0 0.0
        %1402 = vmatprep.subr.mxu0 0.0
        %1403 = vmatpush1.msra.mxu0 0.0
        %1404 = vmatprep.subr.mxu0 0.0
        %1405 = vmatpush1.msra.mxu0 0.0
        %1406 = vmatprep.subr.mxu0 0.0
        %1407 = vmatpush1.msra.mxu0 0.0
        %1408 = vmatprep.subr.mxu0 0.0
        %1409 = vmatpush1.msra.mxu0 0.0
        %1410 = vmatprep.subr.mxu0 0.0
        %1411 = vmatpush1.msra.mxu0 0.0
        %1412 = vmatprep.subr.mxu0 0.0
        %1413 = vmatpush1.msra.mxu0 0.0
        %1414 = vmatprep.subr.mxu0 0.0
        %1415 = vmatpush1.msra.mxu0 0.0
        %1416 = vmatprep.subr.mxu0 0.0
        %1417 = vmatpush1.msra.mxu0 0.0
        %1418 = vmatprep.subr.mxu0 0.0
        %1419 = vmatpush1.msra.mxu0 0.0
        %1420 = vmatprep.subr.mxu0 0.0
        %1421 = vmatpush1.msra.mxu0 0.0
        %1422 = vmatprep.subr.mxu0 0.0
        %1423 = vmatpush1.msra.mxu0 0.0
        %1424 = vmatprep.subr.mxu0 0.0
        %1425 = vmatpush1.msra.mxu0 0.0
        %1426 = vmatprep.subr.mxu0 0.0
        %1427 = vmatpush1.msra.mxu0 0.0
        %1428 = vmatprep.subr.mxu0 0.0
        %1429 = vmatpush1.msra.mxu0 0.0
        %1430 = vmatprep.subr.mxu0 0.0
        %1431 = vmatpush1.msra.mxu0 0.0
        %1432 = vmatprep.subr.mxu0 0.0
        %1433 = vmatpush1.msra.mxu0 0.0
        %1434 = vmatprep.subr.mxu0 0.0
        %1435 = vmatpush1.msra.mxu0 0.0
        %1436 = vmatprep.mubr.f32.mxu0 0.0
        %1437 = vmatmul.mubr.f32.gmra.mrb[0].mxu0 %v1370
        %v1438 = vpop.f32.mrb[0].mxu0
        %v1439 = vadd.f32 0.0, %v1438
        %v1440 = vpop.f32.mrb[0].mxu0
        %1441 = vdwg.mxu0
        %v1442 = vadd.f32 %v1369, %v1439
        %v1443 = vxor.u32 %v1442, 2147483648
        %v1444 = vmul.f32 %v1443, 1.442695
        %v1445 = vpow.pop %v1444
        %v1446 = vadd.f32 %v1445, 1.0
        %v1447 = vrcp.pop %v1446
        %v1448 = vmul.f32 1.0, %v1447
        %v1449 = vtanh.pop %v1442
        %v1450 = vmul.f32 %v1448, %v1251
        %1452 = vrot.lane.b32.xlu0 %v1449, 64
        %v1453 = vpop.permute.xlu0 %1452
        %v1455 = vmul.f32 %v1448, %v1453
        %1457 = vrot.lane.b32.xlu0 %v1455, 32
        %v1458 = vpop.permute.xlu0 %1457
        %v1460 = vadd.f32 %v1450, %v1458
        %v1461 = vtanh.pop %v1460
        %1463 = vrot.lane.b32.xlu0 %v1461, 64
        %v1464 = vpop.permute.xlu0 %1463
        %v1466 = vmul.f32 %v1448, %v1464
        %1468 = vrot.lane.b32.xlu0 %v1466, 32
        %v1469 = vpop.permute.xlu0 %1468
        %1471 = vrot.lane.b32.xlu0 %v1362, 64
        %v1472 = vpop.permute.xlu0 %1471
        %v1474 = vsel %vm412, %v1469, %v1472
        %v1476 = vsel %vm634, %v1474, 0
        %1478 = vmatprep.subr.mxu0 0.0
        %1479 = vmatpush1.msra.mxu0 %v500
        %1480 = vmatprep.subr.mxu0 0.0
        %1481 = vmatpush1.msra.mxu0 %v501
        %1482 = vmatprep.subr.mxu0 0.0
        %1483 = vmatpush1.msra.mxu0 %v502
        %1484 = vmatprep.subr.mxu0 0.0
        %1485 = vmatpush1.msra.mxu0 %v503
        %1486 = vmatprep.subr.mxu0 0.0
        %1487 = vmatpush1.msra.mxu0 %v504
        %1488 = vmatprep.subr.mxu0 0.0
        %1489 = vmatpush1.msra.mxu0 %v505
        %1490 = vmatprep.subr.mxu0 0.0
        %1491 = vmatpush1.msra.mxu0 %v506
        %1492 = vmatprep.subr.mxu0 0.0
        %1493 = vmatpush1.msra.mxu0 %v507
        %1494 = vmatprep.subr.mxu0 0.0
        %1495 = vmatpush1.msra.mxu0 0.0
        %1496 = vmatprep.subr.mxu0 0.0
        %1497 = vmatpush1.msra.mxu0 0.0
        %1498 = vmatprep.subr.mxu0 0.0
        %1499 = vmatpush1.msra.mxu0 0.0
        %1500 = vmatprep.subr.mxu0 0.0
        %1501 = vmatpush1.msra.mxu0 0.0
        %1502 = vmatprep.subr.mxu0 0.0
        %1503 = vmatpush1.msra.mxu0 0.0
        %1504 = vmatprep.subr.mxu0 0.0
        %1505 = vmatpush1.msra.mxu0 0.0
        %1506 = vmatprep.subr.mxu0 0.0
        %1507 = vmatpush1.msra.mxu0 0.0
        %1508 = vmatprep.subr.mxu0 0.0
        %1509 = vmatpush1.msra.mxu0 0.0
        %1510 = vmatprep.subr.mxu0 0.0
        %1511 = vmatpush1.msra.mxu0 0.0
        %1512 = vmatprep.subr.mxu0 0.0
        %1513 = vmatpush1.msra.mxu0 0.0
        %1514 = vmatprep.subr.mxu0 0.0
        %1515 = vmatpush1.msra.mxu0 0.0
        %1516 = vmatprep.subr.mxu0 0.0
        %1517 = vmatpush1.msra.mxu0 0.0
        %1518 = vmatprep.subr.mxu0 0.0
        %1519 = vmatpush1.msra.mxu0 0.0
        %1520 = vmatprep.subr.mxu0 0.0
        %1521 = vmatpush1.msra.mxu0 0.0
        %1522 = vmatprep.subr.mxu0 0.0
        %1523 = vmatpush1.msra.mxu0 0.0
        %1524 = vmatprep.subr.mxu0 0.0
        %1525 = vmatpush1.msra.mxu0 0.0
        %1526 = vmatprep.subr.mxu0 0.0
        %1527 = vmatpush1.msra.mxu0 0.0
        %1528 = vmatprep.subr.mxu0 0.0
        %1529 = vmatpush1.msra.mxu0 0.0
        %1530 = vmatprep.subr.mxu0 0.0
        %1531 = vmatpush1.msra.mxu0 0.0
        %1532 = vmatprep.subr.mxu0 0.0
        %1533 = vmatpush1.msra.mxu0 0.0
        %1534 = vmatprep.subr.mxu0 0.0
        %1535 = vmatpush1.msra.mxu0 0.0
        %1536 = vmatprep.subr.mxu0 0.0
        %1537 = vmatpush1.msra.mxu0 0.0
        %1538 = vmatprep.subr.mxu0 0.0
        %1539 = vmatpush1.msra.mxu0 0.0
        %1540 = vmatprep.subr.mxu0 0.0
        %1541 = vmatpush1.msra.mxu0 0.0
        %1542 = vmatprep.mubr.f32.mxu0 0.0
        %1543 = vmatmul.mubr.f32.gmra.mrb[0].mxu0 %v1476
        %v1544 = vpop.f32.mrb[0].mxu0
        %v1545 = vadd.f32 %v513, %v1544
        %v1546 = vpop.f32.mrb[0].mxu0
        %1547 = vdwg.mxu0
        %v1548 = vxor.u32 %v1545, 2147483648
        %v1549 = vmul.f32 %v1548, 1.442695
        %v1550 = vpow.pop %v1549
        %v1551 = vadd.f32 %v1550, 1.0
        %v1552 = vrcp.pop %v1551
        %v1553 = vmul.f32 1.0, %v1552
        %v1554 = vtanh.pop %v1545
        %v1555 = vmul.f32 %v1553, %v1356
        %1557 = vrot.lane.b32.xlu0 %v1554, 64
        %v1558 = vpop.permute.xlu0 %1557
        %v1560 = vmul.f32 %v1553, %v1558
        %1562 = vrot.lane.b32.xlu0 %v1560, 32
        %v1563 = vpop.permute.xlu0 %1562
        %v1565 = vadd.f32 %v1555, %v1563
        %v1566 = vtanh.pop %v1565
        %1568 = vrot.lane.b32.xlu0 %v1566, 64
        %v1569 = vpop.permute.xlu0 %1568
        %v1571 = vmul.f32 %v1553, %v1569
        %1573 = vrot.lane.b32.xlu0 %v1571, 32
        %v1574 = vpop.permute.xlu0 %1573
        %s1576 = scalar_lea.vmem [#allocation4], 8
        %1577 = vst.msk [vmem:[%s1576] sm:$0x3] %vm740, %v1574
        %v1578 = vld [vmem:[#allocation3 + $0xa] sm:$0x3]
        %v1579 = vsel %vm412, %v1469, 0
        %1581 = vmatprep.subr.mxu0 0.0
        %1582 = vmatpush1.msra.mxu0 %v496
        %1583 = vmatprep.subr.mxu0 0.0
        %1584 = vmatpush1.msra.mxu0 %v497
        %1585 = vmatprep.subr.mxu0 0.0
        %1586 = vmatpush1.msra.mxu0 %v498
        %1587 = vmatprep.subr.mxu0 0.0
        %1588 = vmatpush1.msra.mxu0 %v499
        %1589 = vmatprep.subr.mxu0 0.0
        %1590 = vmatpush1.msra.mxu0 0.0
        %1591 = vmatprep.subr.mxu0 0.0
        %1592 = vmatpush1.msra.mxu0 0.0
        %1593 = vmatprep.subr.mxu0 0.0
        %1594 = vmatpush1.msra.mxu0 0.0
        %1595 = vmatprep.subr.mxu0 0.0
        %1596 = vmatpush1.msra.mxu0 0.0
        %1597 = vmatprep.subr.mxu0 0.0
        %1598 = vmatpush1.msra.mxu0 0.0
        %1599 = vmatprep.subr.mxu0 0.0
        %1600 = vmatpush1.msra.mxu0 0.0
        %1601 = vmatprep.subr.mxu0 0.0
        %1602 = vmatpush1.msra.mxu0 0.0
        %1603 = vmatprep.subr.mxu0 0.0
        %1604 = vmatpush1.msra.mxu0 0.0
        %1605 = vmatprep.subr.mxu0 0.0
        %1606 = vmatpush1.msra.mxu0 0.0
        %1607 = vmatprep.subr.mxu0 0.0
        %1608 = vmatpush1.msra.mxu0 0.0
        %1609 = vmatprep.subr.mxu0 0.0
        %1610 = vmatpush1.msra.mxu0 0.0
        %1611 = vmatprep.subr.mxu0 0.0
        %1612 = vmatpush1.msra.mxu0 0.0
        %1613 = vmatprep.subr.mxu0 0.0
        %1614 = vmatpush1.msra.mxu0 0.0
        %1615 = vmatprep.subr.mxu0 0.0
        %1616 = vmatpush1.msra.mxu0 0.0
        %1617 = vmatprep.subr.mxu0 0.0
        %1618 = vmatpush1.msra.mxu0 0.0
        %1619 = vmatprep.subr.mxu0 0.0
        %1620 = vmatpush1.msra.mxu0 0.0
        %1621 = vmatprep.subr.mxu0 0.0
        %1622 = vmatpush1.msra.mxu0 0.0
        %1623 = vmatprep.subr.mxu0 0.0
        %1624 = vmatpush1.msra.mxu0 0.0
        %1625 = vmatprep.subr.mxu0 0.0
        %1626 = vmatpush1.msra.mxu0 0.0
        %1627 = vmatprep.subr.mxu0 0.0
        %1628 = vmatpush1.msra.mxu0 0.0
        %1629 = vmatprep.subr.mxu0 0.0
        %1630 = vmatpush1.msra.mxu0 0.0
        %1631 = vmatprep.subr.mxu0 0.0
        %1632 = vmatpush1.msra.mxu0 0.0
        %1633 = vmatprep.subr.mxu0 0.0
        %1634 = vmatpush1.msra.mxu0 0.0
        %1635 = vmatprep.subr.mxu0 0.0
        %1636 = vmatpush1.msra.mxu0 0.0
        %1637 = vmatprep.subr.mxu0 0.0
        %1638 = vmatpush1.msra.mxu0 0.0
        %1639 = vmatprep.subr.mxu0 0.0
        %1640 = vmatpush1.msra.mxu0 0.0
        %1641 = vmatprep.subr.mxu0 0.0
        %1642 = vmatpush1.msra.mxu0 0.0
        %1643 = vmatprep.subr.mxu0 0.0
        %1644 = vmatpush1.msra.mxu0 0.0
        %1645 = vmatprep.mubr.f32.mxu0 0.0
        %1646 = vmatmul.mubr.f32.gmra.mrb[0].mxu0 %v1579
        %v1647 = vpop.f32.mrb[0].mxu0
        %v1648 = vadd.f32 0.0, %v1647
        %v1649 = vpop.f32.mrb[0].mxu0
        %1650 = vdwg.mxu0
        %v1651 = vadd.f32 %v1578, %v1648
        %v1652 = vxor.u32 %v1651, 2147483648
        %v1653 = vmul.f32 %v1652, 1.442695
        %v1654 = vpow.pop %v1653
        %v1655 = vadd.f32 %v1654, 1.0
        %v1656 = vrcp.pop %v1655
        %v1657 = vmul.f32 1.0, %v1656
        %v1658 = vtanh.pop %v1651
        %v1659 = vmul.f32 %v1657, %v1460
        %1661 = vrot.lane.b32.xlu0 %v1658, 64
        %v1662 = vpop.permute.xlu0 %1661
        %v1664 = vmul.f32 %v1657, %v1662
        %1666 = vrot.lane.b32.xlu0 %v1664, 32
        %v1667 = vpop.permute.xlu0 %1666
        %v1669 = vadd.f32 %v1659, %v1667
        %v1670 = vtanh.pop %v1669
        %1672 = vrot.lane.b32.xlu0 %v1670, 64
        %v1673 = vpop.permute.xlu0 %1672
        %v1675 = vmul.f32 %v1657, %v1673
        %1677 = vrot.lane.b32.xlu0 %v1675, 32
        %v1678 = vpop.permute.xlu0 %1677
        %1680 = vrot.lane.b32.xlu0 %v1571, 64
        %v1681 = vpop.permute.xlu0 %1680
        %v1683 = vsel %vm412, %v1678, %v1681
        %v1685 = vsel %vm634, %v1683, 0
        %1687 = vmatprep.subr.mxu0 0.0
        %1688 = vmatpush1.msra.mxu0 %v500
        %1689 = vmatprep.subr.mxu0 0.0
        %1690 = vmatpush1.msra.mxu0 %v501
        %1691 = vmatprep.subr.mxu0 0.0
        %1692 = vmatpush1.msra.mxu0 %v502
        %1693 = vmatprep.subr.mxu0 0.0
        %1694 = vmatpush1.msra.mxu0 %v503
        %1695 = vmatprep.subr.mxu0 0.0
        %1696 = vmatpush1.msra.mxu0 %v504
        %1697 = vmatprep.subr.mxu0 0.0
        %1698 = vmatpush1.msra.mxu0 %v505
        %1699 = vmatprep.subr.mxu0 0.0
        %1700 = vmatpush1.msra.mxu0 %v506
        %1701 = vmatprep.subr.mxu0 0.0
        %1702 = vmatpush1.msra.mxu0 %v507
        %1703 = vmatprep.subr.mxu0 0.0
        %1704 = vmatpush1.msra.mxu0 0.0
        %1705 = vmatprep.subr.mxu0 0.0
        %1706 = vmatpush1.msra.mxu0 0.0
        %1707 = vmatprep.subr.mxu0 0.0
        %1708 = vmatpush1.msra.mxu0 0.0
        %1709 = vmatprep.subr.mxu0 0.0
        %1710 = vmatpush1.msra.mxu0 0.0
        %1711 = vmatprep.subr.mxu0 0.0
        %1712 = vmatpush1.msra.mxu0 0.0
        %1713 = vmatprep.subr.mxu0 0.0
        %1714 = vmatpush1.msra.mxu0 0.0
        %1715 = vmatprep.subr.mxu0 0.0
        %1716 = vmatpush1.msra.mxu0 0.0
        %1717 = vmatprep.subr.mxu0 0.0
        %1718 = vmatpush1.msra.mxu0 0.0
        %1719 = vmatprep.subr.mxu0 0.0
        %1720 = vmatpush1.msra.mxu0 0.0
        %1721 = vmatprep.subr.mxu0 0.0
        %1722 = vmatpush1.msra.mxu0 0.0
        %1723 = vmatprep.subr.mxu0 0.0
        %1724 = vmatpush1.msra.mxu0 0.0
        %1725 = vmatprep.subr.mxu0 0.0
        %1726 = vmatpush1.msra.mxu0 0.0
        %1727 = vmatprep.subr.mxu0 0.0
        %1728 = vmatpush1.msra.mxu0 0.0
        %1729 = vmatprep.subr.mxu0 0.0
        %1730 = vmatpush1.msra.mxu0 0.0
        %1731 = vmatprep.subr.mxu0 0.0
        %1732 = vmatpush1.msra.mxu0 0.0
        %1733 = vmatprep.subr.mxu0 0.0
        %1734 = vmatpush1.msra.mxu0 0.0
        %1735 = vmatprep.subr.mxu0 0.0
        %1736 = vmatpush1.msra.mxu0 0.0
        %1737 = vmatprep.subr.mxu0 0.0
        %1738 = vmatpush1.msra.mxu0 0.0
        %1739 = vmatprep.subr.mxu0 0.0
        %1740 = vmatpush1.msra.mxu0 0.0
        %1741 = vmatprep.subr.mxu0 0.0
        %1742 = vmatpush1.msra.mxu0 0.0
        %1743 = vmatprep.subr.mxu0 0.0
        %1744 = vmatpush1.msra.mxu0 0.0
        %1745 = vmatprep.subr.mxu0 0.0
        %1746 = vmatpush1.msra.mxu0 0.0
        %1747 = vmatprep.subr.mxu0 0.0
        %1748 = vmatpush1.msra.mxu0 0.0
        %1749 = vmatprep.subr.mxu0 0.0
        %1750 = vmatpush1.msra.mxu0 0.0
        %1751 = vmatprep.mubr.f32.mxu0 0.0
        %1752 = vmatmul.mubr.f32.gmra.mrb[0].mxu0 %v1685
        %v1753 = vpop.f32.mrb[0].mxu0
        %v1754 = vadd.f32 %v513, %v1753
        %v1755 = vpop.f32.mrb[0].mxu0
        %1756 = vdwg.mxu0
        %v1757 = vxor.u32 %v1754, 2147483648
        %v1758 = vmul.f32 %v1757, 1.442695
        %v1759 = vpow.pop %v1758
        %v1760 = vadd.f32 %v1759, 1.0
        %v1761 = vrcp.pop %v1760
        %v1762 = vmul.f32 1.0, %v1761
        %v1763 = vtanh.pop %v1754
        %v1764 = vmul.f32 %v1762, %v1565
        %1766 = vrot.lane.b32.xlu0 %v1763, 64
        %v1767 = vpop.permute.xlu0 %1766
        %v1769 = vmul.f32 %v1762, %v1767
        %1771 = vrot.lane.b32.xlu0 %v1769, 32
        %v1772 = vpop.permute.xlu0 %1771
        %v1774 = vadd.f32 %v1764, %v1772
        %v1775 = vtanh.pop %v1774
        %1777 = vrot.lane.b32.xlu0 %v1775, 64
        %v1778 = vpop.permute.xlu0 %1777
        %v1780 = vmul.f32 %v1762, %v1778
        %1782 = vrot.lane.b32.xlu0 %v1780, 32
        %v1783 = vpop.permute.xlu0 %1782
        %s1785 = scalar_lea.vmem [#allocation4], 10
        %1786 = vst.msk [vmem:[%s1785] sm:$0x3] %vm740, %v1783
        %v1787 = vld [vmem:[#allocation3 + $0xc] sm:$0x3]
        %v1788 = vsel %vm412, %v1678, 0
        %1790 = vmatprep.subr.mxu0 0.0
        %1791 = vmatpush1.msra.mxu0 %v496
        %1792 = vmatprep.subr.mxu0 0.0
        %1793 = vmatpush1.msra.mxu0 %v497
        %1794 = vmatprep.subr.mxu0 0.0
        %1795 = vmatpush1.msra.mxu0 %v498
        %1796 = vmatprep.subr.mxu0 0.0
        %1797 = vmatpush1.msra.mxu0 %v499
        %1798 = vmatprep.subr.mxu0 0.0
        %1799 = vmatpush1.msra.mxu0 0.0
        %1800 = vmatprep.subr.mxu0 0.0
        %1801 = vmatpush1.msra.mxu0 0.0
        %1802 = vmatprep.subr.mxu0 0.0
        %1803 = vmatpush1.msra.mxu0 0.0
        %1804 = vmatprep.subr.mxu0 0.0
        %1805 = vmatpush1.msra.mxu0 0.0
        %1806 = vmatprep.subr.mxu0 0.0
        %1807 = vmatpush1.msra.mxu0 0.0
        %1808 = vmatprep.subr.mxu0 0.0
        %1809 = vmatpush1.msra.mxu0 0.0
        %1810 = vmatprep.subr.mxu0 0.0
        %1811 = vmatpush1.msra.mxu0 0.0
        %1812 = vmatprep.subr.mxu0 0.0
        %1813 = vmatpush1.msra.mxu0 0.0
        %1814 = vmatprep.subr.mxu0 0.0
        %1815 = vmatpush1.msra.mxu0 0.0
        %1816 = vmatprep.subr.mxu0 0.0
        %1817 = vmatpush1.msra.mxu0 0.0
        %1818 = vmatprep.subr.mxu0 0.0
        %1819 = vmatpush1.msra.mxu0 0.0
        %1820 = vmatprep.subr.mxu0 0.0
        %1821 = vmatpush1.msra.mxu0 0.0
        %1822 = vmatprep.subr.mxu0 0.0
        %1823 = vmatpush1.msra.mxu0 0.0
        %1824 = vmatprep.subr.mxu0 0.0
        %1825 = vmatpush1.msra.mxu0 0.0
        %1826 = vmatprep.subr.mxu0 0.0
        %1827 = vmatpush1.msra.mxu0 0.0
        %1828 = vmatprep.subr.mxu0 0.0
        %1829 = vmatpush1.msra.mxu0 0.0
        %1830 = vmatprep.subr.mxu0 0.0
        %1831 = vmatpush1.msra.mxu0 0.0
        %1832 = vmatprep.subr.mxu0 0.0
        %1833 = vmatpush1.msra.mxu0 0.0
        %1834 = vmatprep.subr.mxu0 0.0
        %1835 = vmatpush1.msra.mxu0 0.0
        %1836 = vmatprep.subr.mxu0 0.0
        %1837 = vmatpush1.msra.mxu0 0.0
        %1838 = vmatprep.subr.mxu0 0.0
        %1839 = vmatpush1.msra.mxu0 0.0
        %1840 = vmatprep.subr.mxu0 0.0
        %1841 = vmatpush1.msra.mxu0 0.0
        %1842 = vmatprep.subr.mxu0 0.0
        %1843 = vmatpush1.msra.mxu0 0.0
        %1844 = vmatprep.subr.mxu0 0.0
        %1845 = vmatpush1.msra.mxu0 0.0
        %1846 = vmatprep.subr.mxu0 0.0
        %1847 = vmatpush1.msra.mxu0 0.0
        %1848 = vmatprep.subr.mxu0 0.0
        %1849 = vmatpush1.msra.mxu0 0.0
        %1850 = vmatprep.subr.mxu0 0.0
        %1851 = vmatpush1.msra.mxu0 0.0
        %1852 = vmatprep.subr.mxu0 0.0
        %1853 = vmatpush1.msra.mxu0 0.0
        %1854 = vmatprep.mubr.f32.mxu0 0.0
        %1855 = vmatmul.mubr.f32.gmra.mrb[0].mxu0 %v1788
        %v1856 = vpop.f32.mrb[0].mxu0
        %v1857 = vadd.f32 0.0, %v1856
        %v1858 = vpop.f32.mrb[0].mxu0
        %1859 = vdwg.mxu0
        %v1860 = vadd.f32 %v1787, %v1857
        %v1861 = vxor.u32 %v1860, 2147483648
        %v1862 = vmul.f32 %v1861, 1.442695
        %v1863 = vpow.pop %v1862
        %v1864 = vadd.f32 %v1863, 1.0
        %v1865 = vrcp.pop %v1864
        %v1866 = vmul.f32 1.0, %v1865
        %v1867 = vtanh.pop %v1860
        %v1868 = vmul.f32 %v1866, %v1669
        %1870 = vrot.lane.b32.xlu0 %v1867, 64
        %v1871 = vpop.permute.xlu0 %1870
        %v1873 = vmul.f32 %v1866, %v1871
        %1875 = vrot.lane.b32.xlu0 %v1873, 32
        %v1876 = vpop.permute.xlu0 %1875
        %v1878 = vadd.f32 %v1868, %v1876
        %v1879 = vtanh.pop %v1878
        %1881 = vrot.lane.b32.xlu0 %v1879, 64
        %v1882 = vpop.permute.xlu0 %1881
        %v1884 = vmul.f32 %v1866, %v1882
        %1886 = vrot.lane.b32.xlu0 %v1884, 32
        %v1887 = vpop.permute.xlu0 %1886
        %1889 = vrot.lane.b32.xlu0 %v1780, 64
        %v1890 = vpop.permute.xlu0 %1889
        %v1892 = vsel %vm412, %v1887, %v1890
        %v1894 = vsel %vm634, %v1892, 0
        %1896 = vmatprep.subr.mxu0 0.0
        %1897 = vmatpush1.msra.mxu0 %v500
        %1898 = vmatprep.subr.mxu0 0.0
        %1899 = vmatpush1.msra.mxu0 %v501
        %1900 = vmatprep.subr.mxu0 0.0
        %1901 = vmatpush1.msra.mxu0 %v502
        %1902 = vmatprep.subr.mxu0 0.0
        %1903 = vmatpush1.msra.mxu0 %v503
        %1904 = vmatprep.subr.mxu0 0.0
        %1905 = vmatpush1.msra.mxu0 %v504
        %1906 = vmatprep.subr.mxu0 0.0
        %1907 = vmatpush1.msra.mxu0 %v505
        %1908 = vmatprep.subr.mxu0 0.0
        %1909 = vmatpush1.msra.mxu0 %v506
        %1910 = vmatprep.subr.mxu0 0.0
        %1911 = vmatpush1.msra.mxu0 %v507
        %1912 = vmatprep.subr.mxu0 0.0
        %1913 = vmatpush1.msra.mxu0 0.0
        %1914 = vmatprep.subr.mxu0 0.0
        %1915 = vmatpush1.msra.mxu0 0.0
        %1916 = vmatprep.subr.mxu0 0.0
        %1917 = vmatpush1.msra.mxu0 0.0
        %1918 = vmatprep.subr.mxu0 0.0
        %1919 = vmatpush1.msra.mxu0 0.0
        %1920 = vmatprep.subr.mxu0 0.0
        %1921 = vmatpush1.msra.mxu0 0.0
        %1922 = vmatprep.subr.mxu0 0.0
        %1923 = vmatpush1.msra.mxu0 0.0
        %1924 = vmatprep.subr.mxu0 0.0
        %1925 = vmatpush1.msra.mxu0 0.0
        %1926 = vmatprep.subr.mxu0 0.0
        %1927 = vmatpush1.msra.mxu0 0.0
        %1928 = vmatprep.subr.mxu0 0.0
        %1929 = vmatpush1.msra.mxu0 0.0
        %1930 = vmatprep.subr.mxu0 0.0
        %1931 = vmatpush1.msra.mxu0 0.0
        %1932 = vmatprep.subr.mxu0 0.0
        %1933 = vmatpush1.msra.mxu0 0.0
        %1934 = vmatprep.subr.mxu0 0.0
        %1935 = vmatpush1.msra.mxu0 0.0
        %1936 = vmatprep.subr.mxu0 0.0
        %1937 = vmatpush1.msra.mxu0 0.0
        %1938 = vmatprep.subr.mxu0 0.0
        %1939 = vmatpush1.msra.mxu0 0.0
        %1940 = vmatprep.subr.mxu0 0.0
        %1941 = vmatpush1.msra.mxu0 0.0
        %1942 = vmatprep.subr.mxu0 0.0
        %1943 = vmatpush1.msra.mxu0 0.0
        %1944 = vmatprep.subr.mxu0 0.0
        %1945 = vmatpush1.msra.mxu0 0.0
        %1946 = vmatprep.subr.mxu0 0.0
        %1947 = vmatpush1.msra.mxu0 0.0
        %1948 = vmatprep.subr.mxu0 0.0
        %1949 = vmatpush1.msra.mxu0 0.0
        %1950 = vmatprep.subr.mxu0 0.0
        %1951 = vmatpush1.msra.mxu0 0.0
        %1952 = vmatprep.subr.mxu0 0.0
        %1953 = vmatpush1.msra.mxu0 0.0
        %1954 = vmatprep.subr.mxu0 0.0
        %1955 = vmatpush1.msra.mxu0 0.0
        %1956 = vmatprep.subr.mxu0 0.0
        %1957 = vmatpush1.msra.mxu0 0.0
        %1958 = vmatprep.subr.mxu0 0.0
        %1959 = vmatpush1.msra.mxu0 0.0
        %1960 = vmatprep.mubr.f32.mxu0 0.0
        %1961 = vmatmul.mubr.f32.gmra.mrb[0].mxu0 %v1894
        %v1962 = vpop.f32.mrb[0].mxu0
        %v1963 = vadd.f32 %v513, %v1962
        %v1964 = vpop.f32.mrb[0].mxu0
        %1965 = vdwg.mxu0
        %v1966 = vxor.u32 %v1963, 2147483648
        %v1967 = vmul.f32 %v1966, 1.442695
        %v1968 = vpow.pop %v1967
        %v1969 = vadd.f32 %v1968, 1.0
        %v1970 = vrcp.pop %v1969
        %v1971 = vmul.f32 1.0, %v1970
        %v1972 = vtanh.pop %v1963
        %v1973 = vmul.f32 %v1971, %v1774
        %1975 = vrot.lane.b32.xlu0 %v1972, 64
        %v1976 = vpop.permute.xlu0 %1975
        %v1978 = vmul.f32 %v1971, %v1976
        %1980 = vrot.lane.b32.xlu0 %v1978, 32
        %v1981 = vpop.permute.xlu0 %1980
        %v1983 = vadd.f32 %v1973, %v1981
        %v1984 = vtanh.pop %v1983
        %1986 = vrot.lane.b32.xlu0 %v1984, 64
        %v1987 = vpop.permute.xlu0 %1986
        %v1989 = vmul.f32 %v1971, %v1987
        %1991 = vrot.lane.b32.xlu0 %v1989, 32
        %v1992 = vpop.permute.xlu0 %1991
        %s1994 = scalar_lea.vmem [#allocation4], 12
        %1995 = vst.msk [vmem:[%s1994] sm:$0x3] %vm740, %v1992
        %v1996 = vld [vmem:[#allocation3 + $0xe] sm:$0x3]
        %v1997 = vsel %vm412, %v1887, 0
        %1999 = vmatprep.subr.mxu0 0.0
        %2000 = vmatpush1.msra.mxu0 %v496
        %2001 = vmatprep.subr.mxu0 0.0
        %2002 = vmatpush1.msra.mxu0 %v497
        %2003 = vmatprep.subr.mxu0 0.0
        %2004 = vmatpush1.msra.mxu0 %v498
        %2005 = vmatprep.subr.mxu0 0.0
        %2006 = vmatpush1.msra.mxu0 %v499
        %2007 = vmatprep.subr.mxu0 0.0
        %2008 = vmatpush1.msra.mxu0 0.0
        %2009 = vmatprep.subr.mxu0 0.0
        %2010 = vmatpush1.msra.mxu0 0.0
        %2011 = vmatprep.subr.mxu0 0.0
        %2012 = vmatpush1.msra.mxu0 0.0
        %2013 = vmatprep.subr.mxu0 0.0
        %2014 = vmatpush1.msra.mxu0 0.0
        %2015 = vmatprep.subr.mxu0 0.0
        %2016 = vmatpush1.msra.mxu0 0.0
        %2017 = vmatprep.subr.mxu0 0.0
        %2018 = vmatpush1.msra.mxu0 0.0
        %2019 = vmatprep.subr.mxu0 0.0
        %2020 = vmatpush1.msra.mxu0 0.0
        %2021 = vmatprep.subr.mxu0 0.0
        %2022 = vmatpush1.msra.mxu0 0.0
        %2023 = vmatprep.subr.mxu0 0.0
        %2024 = vmatpush1.msra.mxu0 0.0
        %2025 = vmatprep.subr.mxu0 0.0
        %2026 = vmatpush1.msra.mxu0 0.0
        %2027 = vmatprep.subr.mxu0 0.0
        %2028 = vmatpush1.msra.mxu0 0.0
        %2029 = vmatprep.subr.mxu0 0.0
        %2030 = vmatpush1.msra.mxu0 0.0
        %2031 = vmatprep.subr.mxu0 0.0
        %2032 = vmatpush1.msra.mxu0 0.0
        %2033 = vmatprep.subr.mxu0 0.0
        %2034 = vmatpush1.msra.mxu0 0.0
        %2035 = vmatprep.subr.mxu0 0.0
        %2036 = vmatpush1.msra.mxu0 0.0
        %2037 = vmatprep.subr.mxu0 0.0
        %2038 = vmatpush1.msra.mxu0 0.0
        %2039 = vmatprep.subr.mxu0 0.0
        %2040 = vmatpush1.msra.mxu0 0.0
        %2041 = vmatprep.subr.mxu0 0.0
        %2042 = vmatpush1.msra.mxu0 0.0
        %2043 = vmatprep.subr.mxu0 0.0
        %2044 = vmatpush1.msra.mxu0 0.0
        %2045 = vmatprep.subr.mxu0 0.0
        %2046 = vmatpush1.msra.mxu0 0.0
        %2047 = vmatprep.subr.mxu0 0.0
        %2048 = vmatpush1.msra.mxu0 0.0
        %2049 = vmatprep.subr.mxu0 0.0
        %2050 = vmatpush1.msra.mxu0 0.0
        %2051 = vmatprep.subr.mxu0 0.0
        %2052 = vmatpush1.msra.mxu0 0.0
        %2053 = vmatprep.subr.mxu0 0.0
        %2054 = vmatpush1.msra.mxu0 0.0
        %2055 = vmatprep.subr.mxu0 0.0
        %2056 = vmatpush1.msra.mxu0 0.0
        %2057 = vmatprep.subr.mxu0 0.0
        %2058 = vmatpush1.msra.mxu0 0.0
        %2059 = vmatprep.subr.mxu0 0.0
        %2060 = vmatpush1.msra.mxu0 0.0
        %2061 = vmatprep.subr.mxu0 0.0
        %2062 = vmatpush1.msra.mxu0 0.0
        %2063 = vmatprep.mubr.f32.mxu0 0.0
        %2064 = vmatmul.mubr.f32.gmra.mrb[0].mxu0 %v1997
        %v2065 = vpop.f32.mrb[0].mxu0
        %v2066 = vadd.f32 0.0, %v2065
        %v2067 = vpop.f32.mrb[0].mxu0
        %2068 = vdwg.mxu0
        %v2069 = vadd.f32 %v1996, %v2066
        %v2070 = vxor.u32 %v2069, 2147483648
        %v2071 = vmul.f32 %v2070, 1.442695
        %v2072 = vpow.pop %v2071
        %v2073 = vadd.f32 %v2072, 1.0
        %v2074 = vrcp.pop %v2073
        %v2075 = vmul.f32 1.0, %v2074
        %v2076 = vtanh.pop %v2069
        %v2077 = vmul.f32 %v2075, %v1878
        %2079 = vrot.lane.b32.xlu0 %v2076, 64
        %v2080 = vpop.permute.xlu0 %2079
        %v2082 = vmul.f32 %v2075, %v2080
        %2084 = vrot.lane.b32.xlu0 %v2082, 32
        %v2085 = vpop.permute.xlu0 %2084
        %v2087 = vadd.f32 %v2077, %v2085
        %v2088 = vtanh.pop %v2087
        %2090 = vrot.lane.b32.xlu0 %v2088, 64
        %v2091 = vpop.permute.xlu0 %2090
        %v2093 = vmul.f32 %v2075, %v2091
        %2095 = vrot.lane.b32.xlu0 %v2093, 32
        %v2096 = vpop.permute.xlu0 %2095
        %2098 = vrot.lane.b32.xlu0 %v1989, 64
        %v2099 = vpop.permute.xlu0 %2098
        %v2101 = vsel %vm412, %v2096, %v2099
        %v2103 = vsel %vm634, %v2101, 0
        %2105 = vmatprep.subr.mxu0 0.0
        %2106 = vmatpush1.msra.mxu0 %v500
        %2107 = vmatprep.subr.mxu0 0.0
        %2108 = vmatpush1.msra.mxu0 %v501
        %2109 = vmatprep.subr.mxu0 0.0
        %2110 = vmatpush1.msra.mxu0 %v502
        %2111 = vmatprep.subr.mxu0 0.0
        %2112 = vmatpush1.msra.mxu0 %v503
        %2113 = vmatprep.subr.mxu0 0.0
        %2114 = vmatpush1.msra.mxu0 %v504
        %2115 = vmatprep.subr.mxu0 0.0
        %2116 = vmatpush1.msra.mxu0 %v505
        %2117 = vmatprep.subr.mxu0 0.0
        %2118 = vmatpush1.msra.mxu0 %v506
        %2119 = vmatprep.subr.mxu0 0.0
        %2120 = vmatpush1.msra.mxu0 %v507
        %2121 = vmatprep.subr.mxu0 0.0
        %2122 = vmatpush1.msra.mxu0 0.0
        %2123 = vmatprep.subr.mxu0 0.0
        %2124 = vmatpush1.msra.mxu0 0.0
        %2125 = vmatprep.subr.mxu0 0.0
        %2126 = vmatpush1.msra.mxu0 0.0
        %2127 = vmatprep.subr.mxu0 0.0
        %2128 = vmatpush1.msra.mxu0 0.0
        %2129 = vmatprep.subr.mxu0 0.0
        %2130 = vmatpush1.msra.mxu0 0.0
        %2131 = vmatprep.subr.mxu0 0.0
        %2132 = vmatpush1.msra.mxu0 0.0
        %2133 = vmatprep.subr.mxu0 0.0
        %2134 = vmatpush1.msra.mxu0 0.0
        %2135 = vmatprep.subr.mxu0 0.0
        %2136 = vmatpush1.msra.mxu0 0.0
        %2137 = vmatprep.subr.mxu0 0.0
        %2138 = vmatpush1.msra.mxu0 0.0
        %2139 = vmatprep.subr.mxu0 0.0
        %2140 = vmatpush1.msra.mxu0 0.0
        %2141 = vmatprep.subr.mxu0 0.0
        %2142 = vmatpush1.msra.mxu0 0.0
        %2143 = vmatprep.subr.mxu0 0.0
        %2144 = vmatpush1.msra.mxu0 0.0
        %2145 = vmatprep.subr.mxu0 0.0
        %2146 = vmatpush1.msra.mxu0 0.0
        %2147 = vmatprep.subr.mxu0 0.0
        %2148 = vmatpush1.msra.mxu0 0.0
        %2149 = vmatprep.subr.mxu0 0.0
        %2150 = vmatpush1.msra.mxu0 0.0
        %2151 = vmatprep.subr.mxu0 0.0
        %2152 = vmatpush1.msra.mxu0 0.0
        %2153 = vmatprep.subr.mxu0 0.0
        %2154 = vmatpush1.msra.mxu0 0.0
        %2155 = vmatprep.subr.mxu0 0.0
        %2156 = vmatpush1.msra.mxu0 0.0
        %2157 = vmatprep.subr.mxu0 0.0
        %2158 = vmatpush1.msra.mxu0 0.0
        %2159 = vmatprep.subr.mxu0 0.0
        %2160 = vmatpush1.msra.mxu0 0.0
        %2161 = vmatprep.subr.mxu0 0.0
        %2162 = vmatpush1.msra.mxu0 0.0
        %2163 = vmatprep.subr.mxu0 0.0
        %2164 = vmatpush1.msra.mxu0 0.0
        %2165 = vmatprep.subr.mxu0 0.0
        %2166 = vmatpush1.msra.mxu0 0.0
        %2167 = vmatprep.subr.mxu0 0.0
        %2168 = vmatpush1.msra.mxu0 0.0
        %2169 = vmatprep.mubr.f32.mxu0 0.0
        %2170 = vmatmul.mubr.f32.gmra.mrb[0].mxu0 %v2103
        %v2171 = vpop.f32.mrb[0].mxu0
        %v2172 = vadd.f32 %v513, %v2171
        %v2173 = vpop.f32.mrb[0].mxu0
        %2174 = vdwg.mxu0
        %v2175 = vxor.u32 %v2172, 2147483648
        %v2176 = vmul.f32 %v2175, 1.442695
        %v2177 = vpow.pop %v2176
        %v2178 = vadd.f32 %v2177, 1.0
        %v2179 = vrcp.pop %v2178
        %v2180 = vmul.f32 1.0, %v2179
        %v2181 = vtanh.pop %v2172
        %v2182 = vmul.f32 %v2180, %v1983
        %2184 = vrot.lane.b32.xlu0 %v2181, 64
        %v2185 = vpop.permute.xlu0 %2184
        %v2187 = vmul.f32 %v2180, %v2185
        %2189 = vrot.lane.b32.xlu0 %v2187, 32
        %v2190 = vpop.permute.xlu0 %2189
        %v2192 = vadd.f32 %v2182, %v2190
        %v2193 = vtanh.pop %v2192
        %2195 = vrot.lane.b32.xlu0 %v2193, 64
        %v2196 = vpop.permute.xlu0 %2195
        %v2198 = vmul.f32 %v2180, %v2196
        %2200 = vrot.lane.b32.xlu0 %v2198, 32
        %v2201 = vpop.permute.xlu0 %2200
        %s2203 = scalar_lea.vmem [#allocation4], 14
        %2204 = vst.msk [vmem:[%s2203] sm:$0x3] %vm740, %v2201
        %2205 = vst.msk [vmem:[#allocation2] sm:$0x3] %vm740, %v2096
        %2207 = vrot.lane.b32.xlu0 %v2087, 96
        %v2208 = vpop.permute.xlu0 %2207
        %2210 = vst.msk [vmem:[%s516] sm:$0x3] %vm740, %v2208
        %2211 = vst.msk [vmem:[%s518] sm:$0x3] %vm740, %v2201
        %2213 = vrot.lane.b32.xlu0 %v2192, 96
        %v2214 = vpop.permute.xlu0 %2213
        %2216 = vst.msk [vmem:[%s520] sm:$0x3] %vm740, %v2214
        %v2217 = vld [vmem:[#allocation4] sm:$0x3]
        %v2218 = vld [vmem:[#allocation4 + $0x2] sm:$0x3]
        %v2219 = vld [vmem:[#allocation4 + $0x4] sm:$0x3]
        %v2220 = vld [vmem:[#allocation4 + $0x6] sm:$0x3]
        %v2221 = vld [vmem:[#allocation4 + $0x8] sm:$0x3]
        %v2222 = vld [vmem:[#allocation4 + $0xa] sm:$0x3]
        %v2223 = vld [vmem:[#allocation4 + $0xc] sm:$0x3]
        %v2224 = vld [vmem:[#allocation4 + $0xe] sm:$0x3]
        %v2225 = vcombine.low %v2217, %v2219
        %v2227 = vunpack.c.l.s4 1983009808
        %v2228 = vunpack.c.0.s8 %v2227
        %v2229 = vlaneseq
        %v2230 = vshrl.u32 %v2229, 7
        %v2231 = vsub.s32 %v2228, %v2230
        %v2232 = vrot.slane %v2225, %v2231
        %v2233 = vcombine.low %v2218, %v2220
        %v2235 = vunpack.c.l.s4 1983009808
        %v2236 = vunpack.c.0.s8 %v2235
        %v2237 = vlaneseq
        %v2238 = vshrl.u32 %v2237, 7
        %v2239 = vsub.s32 %v2236, %v2238
        %v2240 = vrot.slane %v2233, %v2239
        %v2241 = vcombine.low %v2221, %v2223
        %v2243 = vunpack.c.l.s4 1983009808
        %v2244 = vunpack.c.0.s8 %v2243
        %v2245 = vlaneseq
        %v2246 = vshrl.u32 %v2245, 7
        %v2247 = vsub.s32 %v2244, %v2246
        %v2248 = vrot.slane %v2241, %v2247
        %v2249 = vcombine.low %v2222, %v2224
        %v2251 = vunpack.c.l.s4 1983009808
        %v2252 = vunpack.c.0.s8 %v2251
        %v2253 = vlaneseq
        %v2254 = vshrl.u32 %v2253, 7
        %v2255 = vsub.s32 %v2252, %v2254
        %v2256 = vrot.slane %v2249, %v2255
        %v2257 = vcombine.low %v2232, %v2240
        %v2259 = vunpack.c.l.s4 1934713408
        %v2260 = vunpack.c.0.s8 %v2259
        %v2261 = vlaneseq
        %v2262 = vshrl.u32 %v2261, 7
        %v2263 = vsub.s32 %v2260, %v2262
        %v2264 = vrot.slane %v2257, %v2263
        %v2265 = vcombine.low %v2248, %v2256
        %v2267 = vunpack.c.l.s4 1934713408
        %v2268 = vunpack.c.0.s8 %v2267
        %v2269 = vlaneseq
        %v2270 = vshrl.u32 %v2269, 7
        %v2271 = vsub.s32 %v2268, %v2270
        %v2272 = vrot.slane %v2265, %v2271
        %v2273 = vcombine.low %v2264, %v2272
        %v2274 = vcombine.high %v2264, %v2272
        %2275 = vst.msk [vmem:[%s384] sm:$0xff] %vm412, %v2273
        %2276 = vst.msk [vmem:[%s384 + $0x8] sm:$0xff] %vm412, %v2274
        %p2277 = scmp.eq.s32.totalorder %s30, 1
        // Predicated region
        $region73: #{tpu_custom_call.1} parent=43 // pred_check
          %p2278 = pneg %p2277
        $region74: #{tpu_custom_call.1} parent=43 // pred_check_branch
          %2280 = sbr.rel (%p2278) target = $region76
        $region75: #{tpu_custom_call.1} parent=43 // pred_region
          %2281 = vst.msk [vmem:[#allocation17] sm:$0x3] %vm740, %v2096
          %s2282 = scalar_lea.vmem [#allocation17], 2
          %2283 = vst.msk [vmem:[%s2282] sm:$0x3] %vm740, %v2201
          %2284 = vst.msk [vmem:[#allocation19] sm:$0x3] %vm740, %v2208
          %s2285 = scalar_lea.vmem [#allocation19], 2
          %2286 = vst.msk [vmem:[%s2285] sm:$0x3] %vm740, %v2214
        $region76: #{tpu_custom_call.1} parent=43 // pred_fallthru
          _
        %s2287 = sand.u32 %s169, 1
        %s2288 = scalar_lea.sflag [#allocation7], %s2287
        %s2289 = sand.u32 %s169, 1
        %s2290 = smul.addr %s2289, 16
        %s2291 = scalar_lea.vmem [#allocation16], %s2290
        // Predicated region
        $region77: #{tpu_custom_call.1} parent=43 // pred_check
          %p2292 = pneg %p179
        $region78: #{tpu_custom_call.1} parent=43 // pred_check_branch
          %2294 = sbr.rel (%p2292) target = $region80
        $region79: #{tpu_custom_call.1} parent=43 // pred_region
          %s2296 = ssub.s32 256, 256
          %2297 = vsyncadd %s2288, %s2296
          %s2298 = smul.addr %s30, 128
          %s2299 = scalar_lea.hbm %s6, %s2298
          %s2300 = sshll.u32 %s2291, 4
          %s2301 = int_to_ptr.vmem [resolvable:$true] %s2300
          %2306 = dma.vmem_to_hbm [thread:$0]  %s2301, 256, %s2299, %s2288, 128, 256, 8
        $region80: #{tpu_custom_call.1} parent=43 // pred_fallthru
          _
        // Predicated region
        $region81: #{tpu_custom_call.1} parent=43 // pred_check
          %p2307 = pneg %p200
        $region82: #{tpu_custom_call.1} parent=43 // pred_check_branch
          %2309 = sbr.rel (%p2307) target = $region84
        $region83: #{tpu_custom_call.1} parent=43 // pred_region
          %s2311 = ssub.s32 64, 64
          %2312 = vsyncadd [#allocation18], %s2311
          %s2313 = sshll.u32 [#allocation17], 4
          %s2314 = int_to_ptr.vmem [resolvable:$true] %s2313
          %2319 = dma.vmem_to_hbm [thread:$0]  %s2314, 64, %s7, [#allocation18], 32, 32, 2
        $region84: #{tpu_custom_call.1} parent=43 // pred_fallthru
          _
        // Predicated region
        $region85: #{tpu_custom_call.1} parent=43 // pred_check
          %p2320 = pneg %p221
        $region86: #{tpu_custom_call.1} parent=43 // pred_check_branch
          %2322 = sbr.rel (%p2320) target = $region88
        $region87: #{tpu_custom_call.1} parent=43 // pred_region
          %s2324 = ssub.s32 64, 64
          %2325 = vsyncadd [#allocation18], %s2324
          %s2326 = sshll.u32 [#allocation19], 4
          %s2327 = int_to_ptr.vmem [resolvable:$true] %s2326
          %2332 = dma.vmem_to_hbm [thread:$0]  %s2327, 64, %s8, [#allocation18], 32, 32, 2
        $region88: #{tpu_custom_call.1} parent=43 // pred_fallthru
          _
        // Predicated region
        $region89: #{tpu_custom_call.1} parent=43 // pred_check
          %p2333 = pneg %p200
        $region90: #{tpu_custom_call.1} parent=43 // pred_check_branch
          %2335 = sbr.rel (%p2333) target = $region92
        $region91: #{tpu_custom_call.1} parent=43 // pred_region
          %2336 = dma.done [#allocation18], 64
        $region92: #{tpu_custom_call.1} parent=43 // pred_fallthru
          _
        // Predicated region
        $region93: #{tpu_custom_call.1} parent=43 // pred_check
          %p2337 = pneg %p221
        $region94: #{tpu_custom_call.1} parent=43 // pred_check_branch
          %2339 = sbr.rel (%p2337) target = $region96
        $region95: #{tpu_custom_call.1} parent=43 // pred_region
          %2340 = dma.done [#allocation18], 64
        $region96: #{tpu_custom_call.1} parent=43 // pred_fallthru
          _
      $region44: #{tpu_custom_call.1} parent=5 // pred_fallthru
        _
      %p2341 = scmp.le.s32.totalorder 2, %s25
      // Predicated region
      $region97: #{tpu_custom_call.1} parent=5 // pred_check
        %p2342 = pneg %p2341
      $region98: #{tpu_custom_call.1} parent=5 // pred_check_branch
        %2344 = sbr.rel (%p2342) target = $region100
      $region99: #{tpu_custom_call.1} parent=5 // pred_region
        %s2345 = ssub.s32 %s25, 2
        // Predicated region
        $region101: #{tpu_custom_call.1} parent=99 // pred_check
          %p2346 = pneg %p185
        $region102: #{tpu_custom_call.1} parent=99 // pred_check_branch
          %2348 = sbr.rel (%p2346) target = $region104
        $region103: #{tpu_custom_call.1} parent=99 // pred_region
          %s2349 = sand.u32 %s170, 1
          %s2350 = scalar_lea.sflag [#allocation7], %s2349
          %s2351 = sand.u32 %s170, 1
          %s2352 = smul.addr %s2351, 16
          %s2353 = scalar_lea.vmem [#allocation16], %s2352
          %2354 = dma.done %s2350, 256
        $region104: #{tpu_custom_call.1} parent=99 // pred_fallthru
          _
      $region100: #{tpu_custom_call.1} parent=5 // pred_fallthru
        _
    $region6: #{tpu_custom_call.1} parent=1 // loop_footer
      %s29 = sadd.s32 1, %s25
    $region7: #{tpu_custom_call.1} parent=1 // loop_footer_branch
      %24 = sbr.rel target = $region3
    $region8: #{tpu_custom_call.1} parent=1 // loop_exit
      _
    %2355 = vsyncpa [#allocation6], 1
    %s2356 = scalar_lea.sflag [#allocation6], 1
    %2357 = vsyncpa %s2356, 1
    %2358 = vsyncpa [#allocation9], 1
    %2359 = vsyncpa [#allocation12], 1
    %2360 = vsyncpa [#allocation15], 1
    %2361 = vsyncpa [#allocation7], 1
    %s2362 = scalar_lea.sflag [#allocation7], 1
    %2363 = vsyncpa %s2362, 1
    %2364 = vsyncpa [#allocation18], 1

</llo_original>
